<compile_context>
chip_gen: v7x
topology: tpu7x:2x2x1
jax: 0.10.0
libtpu: 0.0.40
codegen_flags: <defaults>
</compile_context>

<pallas_src>
import jax
import jax.numpy as jnp
import numpy as np
from jax.experimental import pallas as pl
from jax.experimental.pallas import tpu as pltpu


# ---------------------------------------------------------------------------
# Fused kernel: one grid step per conv layer; init at step 0, head at last.
# ---------------------------------------------------------------------------
def fused_forward_kernel(x_ref, src_ref, wc_ref, bc_ref, wfc1_ref, bfc1_ref,
                         wsrc_ref, bsrc_ref, gamma_ref, beta_ref, mean_ref,
                         var_ref, wout_ref, bout_ref, o_ref, act_ref):
    l = pl.program_id(0)
    n_layers = pl.num_programs(0)
    B = x_ref.shape[0] // 8          # batch
    C = x_ref.shape[1] // 8          # padded channel count (hidden)
    K_IN = 10 * C                    # lanes: 8 interior cols + 2 halo cols
    N_OUT = 8 * C                    # interior lanes
    f32 = jnp.float32
    bf16 = jnp.bfloat16

    # --- grid step 0: zero only the halo, write the channel-padded input ----
    @pl.when(l == 0)
    def _():
        act_ref[0:B, :] = jnp.zeros((B, K_IN), bf16)            # top pad row
        act_ref[9 * B:10 * B, :] = jnp.zeros((B, K_IN), bf16)   # bottom pad
        act_ref[B:9 * B, N_OUT:K_IN] = jnp.zeros((8 * B, 2 * C), bf16)
        act_ref[B:9 * B, 0:N_OUT] = x_ref[...]                  # interior

    # --- conv layer l: 3x3 conv (pad=1) + bias + ReLU as 3 MXU matmuls ------
    # dx shifts and the 12->C channel padding of layer 1 are baked into the
    # streamed weight wc_ref at init time; LHS rows are contiguous views.
    acc = jnp.zeros((8 * B, N_OUT), f32)
    for dy in range(3):
        rows = act_ref[dy * B:(dy + 8) * B, :]                  # (8B, 10C) bf16
        acc = acc + jnp.dot(rows, wc_ref[dy], preferred_element_type=f32)
    acc = jnp.maximum(acc + bc_ref[...], 0.0)
    act_ref[B:9 * B, 0:N_OUT] = acc.astype(bf16)                # lane-aligned

    # --- last step: qfc1 + source FC + BN(eval) + ReLU + out FC + sigmoid ---
    @pl.when(l == n_layers - 1)
    def _():
        # qfc1 with the NCHW-flatten permutation folded into per-row slabs.
        chess = jnp.zeros((B, 64), f32)
        for h in range(8):
            row = act_ref[(h + 1) * B:(h + 2) * B, :]           # (B, 10C) bf16
            chess = chess + jnp.dot(row, wfc1_ref[h],
                                    preferred_element_type=f32)
        chess = chess + bfc1_ref[...]

        src = jnp.dot(src_ref[...], wsrc_ref[...],
                      preferred_element_type=f32) + bsrc_ref[...]

        merge = chess + src
        inv = jax.lax.rsqrt(var_ref[...] + 1e-5)
        merge = (merge - mean_ref[...]) * inv * gamma_ref[...] + beta_ref[...]
        merge = jnp.maximum(merge, 0.0)
        logits = jnp.dot(merge.astype(bf16), wout_ref[...],
                         preferred_element_type=f32) + bout_ref[...]
        o_ref[...] = jax.nn.sigmoid(logits)


# ---------------------------------------------------------------------------
# Wrapper
# ---------------------------------------------------------------------------
def _resident_spec(shape):
    nd = len(shape)
    return pl.BlockSpec(shape, lambda l, _nd=nd: (0,) * _nd)


@jax.jit
def forward(params, chessboard_nchw, source):
    wc = params["wconv"]                      # (n_layers, 3, 10C, 8C) bf16
    bc = params["bconv"]                      # (n_layers, 1, 8C) f32
    n_layers = wc.shape[0]
    C = wc.shape[-1] // 8
    B = chessboard_nchw.shape[0]
    cin = chessboard_nchw.shape[1]

    # Boundary layout plumbing on the tiny input only: NCHW -> (H, B, W, Cin),
    # channel-pad Cin->C, flatten to (8B, 8C) with row = h*B+b, lane = w*C+c.
    x = jnp.transpose(chessboard_nchw, (2, 0, 3, 1))
    x = jnp.pad(x, ((0, 0), (0, 0), (0, 0), (0, C - cin)))
    x = x.reshape(8 * B, 8 * C).astype(jnp.bfloat16)
    src = source.astype(jnp.bfloat16)

    fixed_args = (x, src)
    streamed_args = (wc, bc)
    head_args = (params["wfc1"], params["bfc1"], params["wsrc"],
                 params["bsrc"], params["bn_gamma"], params["bn_beta"],
                 params["bn_mean"], params["bn_var"], params["wout"],
                 params["bout"])
    all_args = fixed_args + streamed_args + head_args

    in_specs = (
        [_resident_spec(a.shape) for a in fixed_args]
        # conv weights/biases stream one layer per grid step (double-buffered)
        + [pl.BlockSpec((None,) + wc.shape[1:], lambda l: (l, 0, 0, 0)),
           pl.BlockSpec((None,) + bc.shape[1:], lambda l: (l, 0, 0))]
        + [_resident_spec(a.shape) for a in head_args])

    flops = int(2 * n_layers * 3 * (8 * B) * (10 * C) * (8 * C)
                + 2 * 8 * B * (10 * C) * 64 + 2 * 2 * B * 64 * 64)
    bytes_accessed = int(sum(int(np.prod(a.shape)) * a.dtype.itemsize
                             for a in all_args) + B * 64 * 4)

    return pl.pallas_call(
        fused_forward_kernel,
        out_shape=jax.ShapeDtypeStruct((B, 64), jnp.float32),
        grid=(n_layers,),
        in_specs=in_specs,
        out_specs=pl.BlockSpec((B, 64), lambda l: (0, 0)),
        scratch_shapes=[pltpu.VMEM((10 * B, 10 * C), jnp.bfloat16)],
        compiler_params=pltpu.CompilerParams(
            dimension_semantics=("arbitrary",)),
        cost_estimate=pl.CostEstimate(flops=flops,
                                      transcendentals=B * 64 + 64,
                                      bytes_accessed=bytes_accessed),
    )(*all_args)


# ---------------------------------------------------------------------------
# Parameter init (deterministic, synthetic) + layout folding
# ---------------------------------------------------------------------------
def _prune_l1(w_oihw, n_active=84):
    """Emulate torch prune.l1_unstructured on a conv weight (Cout,Cin,3,3)."""
    cout = w_oihw.shape[0]
    fan_in = int(np.prod(w_oihw.shape[1:]))
    if fan_in <= n_active:
        return w_oihw
    amount = (fan_in - n_active) * cout
    flat = jnp.sort(jnp.abs(w_oihw).reshape(-1))
    thresh = flat[amount - 1]
    return jnp.where(jnp.abs(w_oihw) <= thresh, 0.0, w_oihw)


def _row_conv_weight(w_oihw, c_pad):
    """(Cout,Cin,3,3) conv weight -> (3, 10*c_pad, 8*Cout) row-matmul weights.

    Interior lane layout: lane = iw*c_pad + ci for input width iw in [0,8);
    halo columns live at lanes [8C,10C) and are always zero, so their weight
    rows stay zero.  m[dy, iw*C + ci, out_w*Cout + co] = w[co, ci, dy, kx]
    with iw = out_w + kx - 1.
    """
    w = np.asarray(w_oihw, np.float32)
    cout, cin = w.shape[0], w.shape[1]
    m = np.zeros((3, 10 * c_pad, 8 * cout), np.float32)
    for dy in range(3):
        for out_w in range(8):
            for kx in range(3):
                iw = out_w + kx - 1
                if 0 <= iw < 8:
                    m[dy, iw * c_pad:iw * c_pad + cin,
                      out_w * cout:(out_w + 1) * cout] = w[:, :, dy, kx].T
    return m


def _fc1_row_weight(w_fc1, hidden):
    """torch qfc1 weight (64, hidden*64) -> (8, 10*hidden, 64) per-row slabs.

    Folds the NCHW flatten permutation and the interior-at-lane-0 layout:
    rows[h, w*hidden + c, o] = w_fc1[o, c*64 + h*8 + w]; halo lanes stay zero.
    """
    w = np.asarray(w_fc1, np.float32).reshape(64, hidden, 8, 8)  # [o, c, h, w]
    rows = np.zeros((8, 10 * hidden, 64), np.float32)
    for h in range(8):
        for wp in range(8):
            rows[h, wp * hidden:(wp + 1) * hidden, :] = w[:, :, h, wp].T
    return rows


def init_params(key, hidden=32):
    assert hidden >= 12
    ks = jax.random.split(key, 16)
    params, ref = {}, {}

    cins = [12, hidden, hidden, hidden, hidden]
    wconv, bconv = [], []
    for i in range(5):
        w = jax.random.normal(ks[i], (hidden, cins[i], 3, 3), jnp.float32) * 0.1
        w = _prune_l1(w)                          # mirrors pruning_conv(True)
        b = jax.random.normal(ks[5 + i], (hidden,), jnp.float32) * 0.01
        ref[f"conv{i}_w"], ref[f"conv{i}_b"] = w, b
        wconv.append(_row_conv_weight(np.asarray(w), hidden))
        bconv.append(np.tile(np.asarray(b, np.float32), 8)[None, :])
    params["wconv"] = jnp.asarray(np.stack(wconv), jnp.bfloat16)   # (5,3,10C,8C)
    params["bconv"] = jnp.asarray(np.stack(bconv), jnp.float32)    # (5,1,8C)

    def lin(kw, kb, din, dout):
        w = jax.random.normal(kw, (dout, din), jnp.float32) / np.sqrt(din)
        b = jax.random.normal(kb, (dout,), jnp.float32) * 0.01
        return w, b

    wfc1, bfc1 = lin(ks[10], ks[11], hidden * 64, 64)
    wsrc, bsrc = lin(ks[12], ks[13], 64, 64)
    wout, bout = lin(ks[14], ks[15], 64, 64)
    ref.update(wfc1=wfc1, bfc1=bfc1, wsrc=wsrc, bsrc=bsrc, wout=wout, bout=bout)

    params["wfc1"] = jnp.asarray(_fc1_row_weight(wfc1, hidden), jnp.bfloat16)
    params["bfc1"] = jnp.asarray(np.asarray(bfc1)[None, :], jnp.float32)
    params["wsrc"] = jnp.asarray(np.asarray(wsrc).T, jnp.bfloat16)
    params["bsrc"] = jnp.asarray(np.asarray(bsrc)[None, :], jnp.float32)
    params["wout"] = jnp.asarray(np.asarray(wout).T, jnp.bfloat16)
    params["bout"] = jnp.asarray(np.asarray(bout)[None, :], jnp.float32)

    # BatchNorm1d(64) — PyTorch init: gamma=1, beta=0, running stats 0/1.
    params["bn_gamma"] = jnp.ones((1, 64), jnp.float32)
    params["bn_beta"] = jnp.zeros((1, 64), jnp.float32)
    params["bn_mean"] = jnp.zeros((1, 64), jnp.float32)
    params["bn_var"] = jnp.ones((1, 64), jnp.float32)
    ref["bn_gamma"] = jnp.ones((64,), jnp.float32)
    ref["bn_beta"] = jnp.zeros((64,), jnp.float32)
    ref["bn_mean"] = jnp.zeros((64,), jnp.float32)
    ref["bn_var"] = jnp.ones((64,), jnp.float32)
    return params, ref


# ---------------------------------------------------------------------------
# Pure-XLA reference (original torch layout) for correctness checking.
# ---------------------------------------------------------------------------
def reference_forward(ref, chessboard_nchw, source):
    x = chessboard_nchw
    for i in range(5):
        x = jax.lax.conv_general_dilated(
            x, ref[f"conv{i}_w"], window_strides=(1, 1),
            padding=((1, 1), (1, 1)),
            dimension_numbers=("NCHW", "OIHW", "NCHW"))
        x = jnp.maximum(x + ref[f"conv{i}_b"][None, :, None, None], 0.0)
    flat = x.reshape(x.shape[0], -1)                 # nn.Flatten on NCHW
    chess = flat @ ref["wfc1"].T + ref["bfc1"]
    src = source @ ref["wsrc"].T + ref["bsrc"]
    merge = chess + src
    merge = ((merge - ref["bn_mean"]) * jax.lax.rsqrt(ref["bn_var"] + 1e-5)
             * ref["bn_gamma"] + ref["bn_beta"])
    merge = jnp.maximum(merge, 0.0)
    return jax.nn.sigmoid(merge @ ref["wout"].T + ref["bout"])


# ---------------------------------------------------------------------------
if __name__ == "__main__":
    hidden = 32            # small stand-in for hidden_size=128
    B = 2
    key = jax.random.PRNGKey(0)
    kp, kx, ks = jax.random.split(key, 3)

    params, ref = init_params(kp, hidden=hidden)
    chessboard = jax.random.normal(kx, (B, 12, 8, 8), jnp.float32)  # NCHW
    source = jax.random.normal(ks, (B, 64), jnp.float32)

    out = jax.block_until_ready(forward(params, chessboard, source))

    assert out.shape == (B, 64), out.shape
    assert bool(jnp.all(jnp.isfinite(out)))
    assert bool(jnp.all((out >= 0.0) & (out <= 1.0)))      # sigmoid range

    expected = jax.block_until_ready(reference_forward(ref, chessboard, source))
    max_err = float(jnp.max(jnp.abs(out - expected)))
    assert max_err < 5e-2, f"mismatch vs reference: {max_err}"

    print("KERNEL_OK")
</pallas_src>

<mosaic_0001>
module attributes {stable_mosaic.version = 11 : i64} {
  func.func @fused_forward_kernel(%arg0: i32, %arg1: memref<16x256xbf16, #tpu.memory_space<vmem>>, %arg2: memref<2x64xbf16, #tpu.memory_space<vmem>>, %arg3: memref<1x3x320x256xbf16, #tpu.memory_space<vmem>>, %arg4: memref<1x1x256xf32, #tpu.memory_space<vmem>>, %arg5: memref<8x320x64xbf16, #tpu.memory_space<vmem>>, %arg6: memref<1x64xf32, #tpu.memory_space<vmem>>, %arg7: memref<64x64xbf16, #tpu.memory_space<vmem>>, %arg8: memref<1x64xf32, #tpu.memory_space<vmem>>, %arg9: memref<1x64xf32, #tpu.memory_space<vmem>>, %arg10: memref<1x64xf32, #tpu.memory_space<vmem>>, %arg11: memref<1x64xf32, #tpu.memory_space<vmem>>, %arg12: memref<1x64xf32, #tpu.memory_space<vmem>>, %arg13: memref<64x64xbf16, #tpu.memory_space<vmem>>, %arg14: memref<1x64xf32, #tpu.memory_space<vmem>>, %arg15: memref<2x64xf32, #tpu.memory_space<vmem>>, %arg16: memref<20x320xbf16, #tpu.memory_space<vmem>>) attributes {dimension_semantics = [#tpu.dimension_semantics<arbitrary>], iteration_bounds = array<i64: 5>, scalar_prefetch = 0 : i64, scratch_operands = 1 : i64, tpu.core_type = #tpu.core_type<tc>, window_params = [{pipeline_mode = #tpu.pipeline_mode<synchronous>, transform_indices = @transform_0, window_bounds = array<i64: 16, 256>}, {pipeline_mode = #tpu.pipeline_mode<synchronous>, transform_indices = @transform_1, window_bounds = array<i64: 2, 64>}, {transform_indices = @transform_2, window_bounds = array<i64: 1, 3, 320, 256>}, {transform_indices = @transform_3, window_bounds = array<i64: 1, 1, 256>}, {pipeline_mode = #tpu.pipeline_mode<synchronous>, transform_indices = @transform_4, window_bounds = array<i64: 8, 320, 64>}, {pipeline_mode = #tpu.pipeline_mode<synchronous>, transform_indices = @transform_5, window_bounds = array<i64: 1, 64>}, {pipeline_mode = #tpu.pipeline_mode<synchronous>, transform_indices = @transform_6, window_bounds = array<i64: 64, 64>}, {pipeline_mode = #tpu.pipeline_mode<synchronous>, transform_indices = @transform_7, window_bounds = array<i64: 1, 64>}, {pipeline_mode = #tpu.pipeline_mode<synchronous>, transform_indices = @transform_8, window_bounds = array<i64: 1, 64>}, {pipeline_mode = #tpu.pipeline_mode<synchronous>, transform_indices = @transform_9, window_bounds = array<i64: 1, 64>}, {pipeline_mode = #tpu.pipeline_mode<synchronous>, transform_indices = @transform_10, window_bounds = array<i64: 1, 64>}, {pipeline_mode = #tpu.pipeline_mode<synchronous>, transform_indices = @transform_11, window_bounds = array<i64: 1, 64>}, {pipeline_mode = #tpu.pipeline_mode<synchronous>, transform_indices = @transform_12, window_bounds = array<i64: 64, 64>}, {pipeline_mode = #tpu.pipeline_mode<synchronous>, transform_indices = @transform_13, window_bounds = array<i64: 1, 64>}, {pipeline_mode = #tpu.pipeline_mode<synchronous>, transform_indices = @transform_14, window_bounds = array<i64: 2, 64>}]} {
    %c0_i32 = arith.constant 0 : i32
    %0 = arith.cmpi eq, %arg0, %c0_i32 : i32
    %1 = arith.extui %0 : i1 to i32
    %c0_i32_0 = arith.constant 0 : i32
    %2 = arith.cmpi ne, %1, %c0_i32_0 : i32
    scf.if %2 {
      %cst_25 = arith.constant 0.000000e+00 : bf16
      %30 = vector.broadcast %cst_25 : bf16 to vector<2x320xbf16>
      %c0_26 = arith.constant 0 : index
      %c0_27 = arith.constant 0 : index
      %31 = vector.load %arg16[%c0_26, %c0_27] : memref<20x320xbf16, #tpu.memory_space<vmem>>, vector<2x320xbf16>
      tpu.vector_store %arg16[%c0_26, %c0_27], %30 {strides = array<i32>} : memref<20x320xbf16, #tpu.memory_space<vmem>>, vector<2x320xbf16>,
      %cst_28 = arith.constant 0.000000e+00 : bf16
      %32 = vector.broadcast %cst_28 : bf16 to vector<2x320xbf16>
      %c18 = arith.constant 18 : index
      %c0_29 = arith.constant 0 : index
      %33 = vector.load %arg16[%c18, %c0_29] : memref<20x320xbf16, #tpu.memory_space<vmem>>, vector<2x320xbf16>
      tpu.vector_store %arg16[%c18, %c0_29], %32 {strides = array<i32>} : memref<20x320xbf16, #tpu.memory_space<vmem>>, vector<2x320xbf16>,
      %cst_30 = arith.constant 0.000000e+00 : bf16
      %34 = vector.broadcast %cst_30 : bf16 to vector<16x64xbf16>
      %c2_31 = arith.constant 2 : index
      %c256 = arith.constant 256 : index
      %35 = vector.load %arg16[%c2_31, %c256] : memref<20x320xbf16, #tpu.memory_space<vmem>>, vector<16x64xbf16>
      tpu.vector_store %arg16[%c2_31, %c256], %34 {strides = array<i32>} : memref<20x320xbf16, #tpu.memory_space<vmem>>, vector<16x64xbf16>,
      %c0_32 = arith.constant 0 : index
      %c0_33 = arith.constant 0 : index
      %36 = vector.load %arg1[%c0_32, %c0_33] : memref<16x256xbf16, #tpu.memory_space<vmem>>, vector<16x256xbf16>
      %c2_34 = arith.constant 2 : index
      %c0_35 = arith.constant 0 : index
      %37 = vector.load %arg16[%c2_34, %c0_35] : memref<20x320xbf16, #tpu.memory_space<vmem>>, vector<16x256xbf16>
      tpu.vector_store %arg16[%c2_34, %c0_35], %36 {strides = array<i32>} : memref<20x320xbf16, #tpu.memory_space<vmem>>, vector<16x256xbf16>,
    } else {
    }
    %cst = arith.constant 0.000000e+00 : f32
    %3 = vector.broadcast %cst : f32 to vector<16x256xf32>
    %c0 = arith.constant 0 : index
    %c0_1 = arith.constant 0 : index
    %4 = vector.load %arg16[%c0, %c0_1] : memref<20x320xbf16, #tpu.memory_space<vmem>>, vector<16x320xbf16>
    %c0_2 = arith.constant 0 : index
    %c0_3 = arith.constant 0 : index
    %c0_4 = arith.constant 0 : index
    %c0_5 = arith.constant 0 : index
    %5 = vector.load %arg3[%c0_2, %c0_3, %c0_4, %c0_5] : memref<1x3x320x256xbf16, #tpu.memory_space<vmem>>, vector<1x1x320x256xbf16>
    %6 = vector.shape_cast %5 : vector<1x1x320x256xbf16> to vector<320x256xbf16>
    %cst_6 = arith.constant dense<0.000000e+00> : vector<16x256xf32>
    %7 = tpu.matmul %4, %6, %cst_6 {dimension_numbers = #tpu.dot_dimension_numbers<[1], [0], [0], [1], [0, 0, 1, 1], [], []>} : vector<16x320xbf16>, vector<320x256xbf16>, vector<16x256xf32> -> vector<16x256xf32>
    %8 = arith.addf %3, %7 : vector<16x256xf32>
    %c2 = arith.constant 2 : index
    %c0_7 = arith.constant 0 : index
    %9 = vector.load %arg16[%c2, %c0_7] : memref<20x320xbf16, #tpu.memory_space<vmem>>, vector<16x320xbf16>
    %c0_8 = arith.constant 0 : index
    %c1 = arith.constant 1 : index
    %c0_9 = arith.constant 0 : index
    %c0_10 = arith.constant 0 : index
    %10 = vector.load %arg3[%c0_8, %c1, %c0_9, %c0_10] : memref<1x3x320x256xbf16, #tpu.memory_space<vmem>>, vector<1x1x320x256xbf16>
    %11 = vector.shape_cast %10 : vector<1x1x320x256xbf16> to vector<320x256xbf16>
    %cst_11 = arith.constant dense<0.000000e+00> : vector<16x256xf32>
    %12 = tpu.matmul %9, %11, %cst_11 {dimension_numbers = #tpu.dot_dimension_numbers<[1], [0], [0], [1], [0, 0, 1, 1], [], []>} : vector<16x320xbf16>, vector<320x256xbf16>, vector<16x256xf32> -> vector<16x256xf32>
    %13 = arith.addf %8, %12 : vector<16x256xf32>
    %c4 = arith.constant 4 : index
    %c0_12 = arith.constant 0 : index
    %14 = vector.load %arg16[%c4, %c0_12] : memref<20x320xbf16, #tpu.memory_space<vmem>>, vector<16x320xbf16>
    %c0_13 = arith.constant 0 : index
    %c2_14 = arith.constant 2 : index
    %c0_15 = arith.constant 0 : index
    %c0_16 = arith.constant 0 : index
    %15 = vector.load %arg3[%c0_13, %c2_14, %c0_15, %c0_16] : memref<1x3x320x256xbf16, #tpu.memory_space<vmem>>, vector<1x1x320x256xbf16>
    %16 = vector.shape_cast %15 : vector<1x1x320x256xbf16> to vector<320x256xbf16>
    %cst_17 = arith.constant dense<0.000000e+00> : vector<16x256xf32>
    %17 = tpu.matmul %14, %16, %cst_17 {dimension_numbers = #tpu.dot_dimension_numbers<[1], [0], [0], [1], [0, 0, 1, 1], [], []>} : vector<16x320xbf16>, vector<320x256xbf16>, vector<16x256xf32> -> vector<16x256xf32>
    %18 = arith.addf %13, %17 : vector<16x256xf32>
    %c0_18 = arith.constant 0 : index
    %c0_19 = arith.constant 0 : index
    %c0_20 = arith.constant 0 : index
    %19 = vector.load %arg4[%c0_18, %c0_19, %c0_20] : memref<1x1x256xf32, #tpu.memory_space<vmem>>, vector<1x1x256xf32>
    %20 = vector.shape_cast %19 : vector<1x1x256xf32> to vector<1x256xf32>
    %21 = vector.broadcast %20 : vector<1x256xf32> to vector<16x256xf32>
    %22 = arith.addf %18, %21 : vector<16x256xf32>
    %cst_21 = arith.constant 0.000000e+00 : f32
    %23 = vector.broadcast %cst_21 : f32 to vector<16x256xf32>
    %24 = arith.maximumf %22, %23 : vector<16x256xf32>
    %25 = arith.truncf %24 : vector<16x256xf32> to vector<16x256xbf16>
    %c2_22 = arith.constant 2 : index
    %c0_23 = arith.constant 0 : index
    %26 = vector.load %arg16[%c2_22, %c0_23] : memref<20x320xbf16, #tpu.memory_space<vmem>>, vector<16x256xbf16>
    tpu.vector_store %arg16[%c2_22, %c0_23], %25 {strides = array<i32>} : memref<20x320xbf16, #tpu.memory_space<vmem>>, vector<16x256xbf16>,
    %c4_i32 = arith.constant 4 : i32
    %27 = arith.cmpi eq, %arg0, %c4_i32 : i32
    %28 = arith.extui %27 : i1 to i32
    %c0_i32_24 = arith.constant 0 : i32
    %29 = arith.cmpi ne, %28, %c0_i32_24 : i32
    scf.if %29 {
      %cst_25 = arith.constant 0.000000e+00 : f32
      %30 = vector.broadcast %cst_25 : f32 to vector<2x64xf32>
      %c2_26 = arith.constant 2 : index
      %c0_27 = arith.constant 0 : index
      %31 = vector.load %arg16[%c2_26, %c0_27] : memref<20x320xbf16, #tpu.memory_space<vmem>>, vector<2x320xbf16>
      %c0_28 = arith.constant 0 : index
      %c0_29 = arith.constant 0 : index
      %c0_30 = arith.constant 0 : index
      %32 = vector.load %arg5[%c0_28, %c0_29, %c0_30] : memref<8x320x64xbf16, #tpu.memory_space<vmem>>, vector<1x320x64xbf16>
      %33 = vector.shape_cast %32 : vector<1x320x64xbf16> to vector<320x64xbf16>
      %cst_31 = arith.constant dense<0.000000e+00> : vector<2x64xf32>
      %34 = tpu.matmul %31, %33, %cst_31 {dimension_numbers = #tpu.dot_dimension_numbers<[1], [0], [0], [1], [0, 0, 1, 1], [], []>} : vector<2x320xbf16>, vector<320x64xbf16>, vector<2x64xf32> -> vector<2x64xf32>
      %35 = arith.addf %30, %34 : vector<2x64xf32>
      %c4_32 = arith.constant 4 : index
      %c0_33 = arith.constant 0 : index
      %36 = vector.load %arg16[%c4_32, %c0_33] : memref<20x320xbf16, #tpu.memory_space<vmem>>, vector<2x320xbf16>
      %c1_34 = arith.constant 1 : index
      %c0_35 = arith.constant 0 : index
      %c0_36 = arith.constant 0 : index
      %37 = vector.load %arg5[%c1_34, %c0_35, %c0_36] : memref<8x320x64xbf16, #tpu.memory_space<vmem>>, vector<1x320x64xbf16>
      %38 = vector.shape_cast %37 : vector<1x320x64xbf16> to vector<320x64xbf16>
      %cst_37 = arith.constant dense<0.000000e+00> : vector<2x64xf32>
      %39 = tpu.matmul %36, %38, %cst_37 {dimension_numbers = #tpu.dot_dimension_numbers<[1], [0], [0], [1], [0, 0, 1, 1], [], []>} : vector<2x320xbf16>, vector<320x64xbf16>, vector<2x64xf32> -> vector<2x64xf32>
      %40 = arith.addf %35, %39 : vector<2x64xf32>
      %c6 = arith.constant 6 : index
      %c0_38 = arith.constant 0 : index
      %41 = vector.load %arg16[%c6, %c0_38] : memref<20x320xbf16, #tpu.memory_space<vmem>>, vector<2x320xbf16>
      %c2_39 = arith.constant 2 : index
      %c0_40 = arith.constant 0 : index
      %c0_41 = arith.constant 0 : index
      %42 = vector.load %arg5[%c2_39, %c0_40, %c0_41] : memref<8x320x64xbf16, #tpu.memory_space<vmem>>, vector<1x320x64xbf16>
      %43 = vector.shape_cast %42 : vector<1x320x64xbf16> to vector<320x64xbf16>
      %cst_42 = arith.constant dense<0.000000e+00> : vector<2x64xf32>
      %44 = tpu.matmul %41, %43, %cst_42 {dimension_numbers = #tpu.dot_dimension_numbers<[1], [0], [0], [1], [0, 0, 1, 1], [], []>} : vector<2x320xbf16>, vector<320x64xbf16>, vector<2x64xf32> -> vector<2x64xf32>
      %45 = arith.addf %40, %44 : vector<2x64xf32>
      %c8 = arith.constant 8 : index
      %c0_43 = arith.constant 0 : index
      %46 = vector.load %arg16[%c8, %c0_43] : memref<20x320xbf16, #tpu.memory_space<vmem>>, vector<2x320xbf16>
      %c3 = arith.constant 3 : index
      %c0_44 = arith.constant 0 : index
      %c0_45 = arith.constant 0 : index
      %47 = vector.load %arg5[%c3, %c0_44, %c0_45] : memref<8x320x64xbf16, #tpu.memory_space<vmem>>, vector<1x320x64xbf16>
      %48 = vector.shape_cast %47 : vector<1x320x64xbf16> to vector<320x64xbf16>
      %cst_46 = arith.constant dense<0.000000e+00> : vector<2x64xf32>
      %49 = tpu.matmul %46, %48, %cst_46 {dimension_numbers = #tpu.dot_dimension_numbers<[1], [0], [0], [1], [0, 0, 1, 1], [], []>} : vector<2x320xbf16>, vector<320x64xbf16>, vector<2x64xf32> -> vector<2x64xf32>
      %50 = arith.addf %45, %49 : vector<2x64xf32>
      %c10 = arith.constant 10 : index
      %c0_47 = arith.constant 0 : index
      %51 = vector.load %arg16[%c10, %c0_47] : memref<20x320xbf16, #tpu.memory_space<vmem>>, vector<2x320xbf16>
      %c4_48 = arith.constant 4 : index
      %c0_49 = arith.constant 0 : index
      %c0_50 = arith.constant 0 : index
      %52 = vector.load %arg5[%c4_48, %c0_49, %c0_50] : memref<8x320x64xbf16, #tpu.memory_space<vmem>>, vector<1x320x64xbf16>
      %53 = vector.shape_cast %52 : vector<1x320x64xbf16> to vector<320x64xbf16>
      %cst_51 = arith.constant dense<0.000000e+00> : vector<2x64xf32>
      %54 = tpu.matmul %51, %53, %cst_51 {dimension_numbers = #tpu.dot_dimension_numbers<[1], [0], [0], [1], [0, 0, 1, 1], [], []>} : vector<2x320xbf16>, vector<320x64xbf16>, vector<2x64xf32> -> vector<2x64xf32>
      %55 = arith.addf %50, %54 : vector<2x64xf32>
      %c12 = arith.constant 12 : index
      %c0_52 = arith.constant 0 : index
      %56 = vector.load %arg16[%c12, %c0_52] : memref<20x320xbf16, #tpu.memory_space<vmem>>, vector<2x320xbf16>
      %c5 = arith.constant 5 : index
      %c0_53 = arith.constant 0 : index
      %c0_54 = arith.constant 0 : index
      %57 = vector.load %arg5[%c5, %c0_53, %c0_54] : memref<8x320x64xbf16, #tpu.memory_space<vmem>>, vector<1x320x64xbf16>
      %58 = vector.shape_cast %57 : vector<1x320x64xbf16> to vector<320x64xbf16>
      %cst_55 = arith.constant dense<0.000000e+00> : vector<2x64xf32>
      %59 = tpu.matmul %56, %58, %cst_55 {dimension_numbers = #tpu.dot_dimension_numbers<[1], [0], [0], [1], [0, 0, 1, 1], [], []>} : vector<2x320xbf16>, vector<320x64xbf16>, vector<2x64xf32> -> vector<2x64xf32>
      %60 = arith.addf %55, %59 : vector<2x64xf32>
      %c14 = arith.constant 14 : index
      %c0_56 = arith.constant 0 : index
      %61 = vector.load %arg16[%c14, %c0_56] : memref<20x320xbf16, #tpu.memory_space<vmem>>, vector<2x320xbf16>
      %c6_57 = arith.constant 6 : index
      %c0_58 = arith.constant 0 : index
      %c0_59 = arith.constant 0 : index
      %62 = vector.load %arg5[%c6_57, %c0_58, %c0_59] : memref<8x320x64xbf16, #tpu.memory_space<vmem>>, vector<1x320x64xbf16>
      %63 = vector.shape_cast %62 : vector<1x320x64xbf16> to vector<320x64xbf16>
      %cst_60 = arith.constant dense<0.000000e+00> : vector<2x64xf32>
      %64 = tpu.matmul %61, %63, %cst_60 {dimension_numbers = #tpu.dot_dimension_numbers<[1], [0], [0], [1], [0, 0, 1, 1], [], []>} : vector<2x320xbf16>, vector<320x64xbf16>, vector<2x64xf32> -> vector<2x64xf32>
      %65 = arith.addf %60, %64 : vector<2x64xf32>
      %c16 = arith.constant 16 : index
      %c0_61 = arith.constant 0 : index
      %66 = vector.load %arg16[%c16, %c0_61] : memref<20x320xbf16, #tpu.memory_space<vmem>>, vector<2x320xbf16>
      %c7 = arith.constant 7 : index
      %c0_62 = arith.constant 0 : index
      %c0_63 = arith.constant 0 : index
      %67 = vector.load %arg5[%c7, %c0_62, %c0_63] : memref<8x320x64xbf16, #tpu.memory_space<vmem>>, vector<1x320x64xbf16>
      %68 = vector.shape_cast %67 : vector<1x320x64xbf16> to vector<320x64xbf16>
      %cst_64 = arith.constant dense<0.000000e+00> : vector<2x64xf32>
      %69 = tpu.matmul %66, %68, %cst_64 {dimension_numbers = #tpu.dot_dimension_numbers<[1], [0], [0], [1], [0, 0, 1, 1], [], []>} : vector<2x320xbf16>, vector<320x64xbf16>, vector<2x64xf32> -> vector<2x64xf32>
      %70 = arith.addf %65, %69 : vector<2x64xf32>
      %c0_65 = arith.constant 0 : index
      %c0_66 = arith.constant 0 : index
      %71 = vector.load %arg6[%c0_65, %c0_66] : memref<1x64xf32, #tpu.memory_space<vmem>>, vector<1x64xf32>
      %72 = vector.broadcast %71 : vector<1x64xf32> to vector<2x64xf32>
      %73 = arith.addf %70, %72 : vector<2x64xf32>
      %c0_67 = arith.constant 0 : index
      %c0_68 = arith.constant 0 : index
      %74 = vector.load %arg2[%c0_67, %c0_68] : memref<2x64xbf16, #tpu.memory_space<vmem>>, vector<2x64xbf16>
      %c0_69 = arith.constant 0 : index
      %c0_70 = arith.constant 0 : index
      %75 = vector.load %arg7[%c0_69, %c0_70] : memref<64x64xbf16, #tpu.memory_space<vmem>>, vector<64x64xbf16>
      %cst_71 = arith.constant dense<0.000000e+00> : vector<2x64xf32>
      %76 = tpu.matmul %74, %75, %cst_71 {dimension_numbers = #tpu.dot_dimension_numbers<[1], [0], [0], [1], [0, 0, 1, 1], [], []>} : vector<2x64xbf16>, vector<64x64xbf16>, vector<2x64xf32> -> vector<2x64xf32>
      %c0_72 = arith.constant 0 : index
      %c0_73 = arith.constant 0 : index
      %77 = vector.load %arg8[%c0_72, %c0_73] : memref<1x64xf32, #tpu.memory_space<vmem>>, vector<1x64xf32>
      %78 = vector.broadcast %77 : vector<1x64xf32> to vector<2x64xf32>
      %79 = arith.addf %76, %78 : vector<2x64xf32>
      %80 = arith.addf %73, %79 : vector<2x64xf32>
      %c0_74 = arith.constant 0 : index
      %c0_75 = arith.constant 0 : index
      %81 = vector.load %arg12[%c0_74, %c0_75] : memref<1x64xf32, #tpu.memory_space<vmem>>, vector<1x64xf32>
      %cst_76 = arith.constant 9.99999974E-6 : f32
      %82 = vector.broadcast %cst_76 : f32 to vector<1x64xf32>
      %83 = arith.addf %81, %82 : vector<1x64xf32>
      %84 = math.rsqrt %83 : vector<1x64xf32>
      %c0_77 = arith.constant 0 : index
      %c0_78 = arith.constant 0 : index
      %85 = vector.load %arg11[%c0_77, %c0_78] : memref<1x64xf32, #tpu.memory_space<vmem>>, vector<1x64xf32>
      %86 = vector.broadcast %85 : vector<1x64xf32> to vector<2x64xf32>
      %87 = arith.subf %80, %86 : vector<2x64xf32>
      %88 = vector.broadcast %84 : vector<1x64xf32> to vector<2x64xf32>
      %89 = arith.mulf %87, %88 : vector<2x64xf32>
      %c0_79 = arith.constant 0 : index
      %c0_80 = arith.constant 0 : index
      %90 = vector.load %arg9[%c0_79, %c0_80] : memref<1x64xf32, #tpu.memory_space<vmem>>, vector<1x64xf32>
      %91 = vector.broadcast %90 : vector<1x64xf32> to vector<2x64xf32>
      %92 = arith.mulf %89, %91 : vector<2x64xf32>
      %c0_81 = arith.constant 0 : index
      %c0_82 = arith.constant 0 : index
      %93 = vector.load %arg10[%c0_81, %c0_82] : memref<1x64xf32, #tpu.memory_space<vmem>>, vector<1x64xf32>
      %94 = vector.broadcast %93 : vector<1x64xf32> to vector<2x64xf32>
      %95 = arith.addf %92, %94 : vector<2x64xf32>
      %cst_83 = arith.constant 0.000000e+00 : f32
      %96 = vector.broadcast %cst_83 : f32 to vector<2x64xf32>
      %97 = arith.maximumf %95, %96 : vector<2x64xf32>
      %98 = arith.truncf %97 : vector<2x64xf32> to vector<2x64xbf16>
      %c0_84 = arith.constant 0 : index
      %c0_85 = arith.constant 0 : index
      %99 = vector.load %arg13[%c0_84, %c0_85] : memref<64x64xbf16, #tpu.memory_space<vmem>>, vector<64x64xbf16>
      %cst_86 = arith.constant dense<0.000000e+00> : vector<2x64xf32>
      %100 = tpu.matmul %98, %99, %cst_86 {dimension_numbers = #tpu.dot_dimension_numbers<[1], [0], [0], [1], [0, 0, 1, 1], [], []>} : vector<2x64xbf16>, vector<64x64xbf16>, vector<2x64xf32> -> vector<2x64xf32>
      %c0_87 = arith.constant 0 : index
      %c0_88 = arith.constant 0 : index
      %101 = vector.load %arg14[%c0_87, %c0_88] : memref<1x64xf32, #tpu.memory_space<vmem>>, vector<1x64xf32>
      %102 = vector.broadcast %101 : vector<1x64xf32> to vector<2x64xf32>
      %103 = arith.addf %100, %102 : vector<2x64xf32>
      %104 = arith.negf %103 : vector<2x64xf32>
      %105 = math.exp %104 : vector<2x64xf32>
      %cst_89 = arith.constant 1.000000e+00 : f32
      %106 = vector.broadcast %cst_89 : f32 to vector<2x64xf32>
      %107 = arith.addf %106, %105 : vector<2x64xf32>
      %108 = arith.divf %106, %107 : vector<2x64xf32>
      %c0_90 = arith.constant 0 : index
      %c0_91 = arith.constant 0 : index
      %109 = vector.load %arg15[%c0_90, %c0_91] : memref<2x64xf32, #tpu.memory_space<vmem>>, vector<2x64xf32>
      tpu.vector_store %arg15[%c0_90, %c0_91], %108 {strides = array<i32>} : memref<2x64xf32, #tpu.memory_space<vmem>>, vector<2x64xf32>,
    } else {
    }
    return
  }
  func.func @transform_0(%arg0: i32) -> (i32, i32) {
    %c0_i32 = arith.constant 0 : i32
    %c0_i32_0 = arith.constant 0 : i32
    %c0_i32_1 = arith.constant 0 : i32
    return %c0_i32, %c0_i32_0 : i32, i32
  }
  func.func @transform_1(%arg0: i32) -> (i32, i32) {
    %c0_i32 = arith.constant 0 : i32
    %c0_i32_0 = arith.constant 0 : i32
    %c0_i32_1 = arith.constant 0 : i32
    return %c0_i32, %c0_i32_0 : i32, i32
  }
  func.func @transform_2(%arg0: i32) -> (i32, i32, i32, i32) {
    %c0_i32 = arith.constant 0 : i32
    %c0_i32_0 = arith.constant 0 : i32
    %c0_i32_1 = arith.constant 0 : i32
    %c0_i32_2 = arith.constant 0 : i32
    return %arg0, %c0_i32, %c0_i32_0, %c0_i32_1 : i32, i32, i32, i32
  }
  func.func @transform_3(%arg0: i32) -> (i32, i32, i32) {
    %c0_i32 = arith.constant 0 : i32
    %c0_i32_0 = arith.constant 0 : i32
    %c0_i32_1 = arith.constant 0 : i32
    return %arg0, %c0_i32, %c0_i32_0 : i32, i32, i32
  }
  func.func @transform_4(%arg0: i32) -> (i32, i32, i32) {
    %c0_i32 = arith.constant 0 : i32
    %c0_i32_0 = arith.constant 0 : i32
    %c0_i32_1 = arith.constant 0 : i32
    %c0_i32_2 = arith.constant 0 : i32
    return %c0_i32, %c0_i32_0, %c0_i32_1 : i32, i32, i32
  }
  func.func @transform_5(%arg0: i32) -> (i32, i32) {
    %c0_i32 = arith.constant 0 : i32
    %c0_i32_0 = arith.constant 0 : i32
    %c0_i32_1 = arith.constant 0 : i32
    return %c0_i32, %c0_i32_0 : i32, i32
  }
  func.func @transform_6(%arg0: i32) -> (i32, i32) {
    %c0_i32 = arith.constant 0 : i32
    %c0_i32_0 = arith.constant 0 : i32
    %c0_i32_1 = arith.constant 0 : i32
    return %c0_i32, %c0_i32_0 : i32, i32
  }
  func.func @transform_7(%arg0: i32) -> (i32, i32) {
    %c0_i32 = arith.constant 0 : i32
    %c0_i32_0 = arith.constant 0 : i32
    %c0_i32_1 = arith.constant 0 : i32
    return %c0_i32, %c0_i32_0 : i32, i32
  }
  func.func @transform_8(%arg0: i32) -> (i32, i32) {
    %c0_i32 = arith.constant 0 : i32
    %c0_i32_0 = arith.constant 0 : i32
    %c0_i32_1 = arith.constant 0 : i32
    return %c0_i32, %c0_i32_0 : i32, i32
  }
  func.func @transform_9(%arg0: i32) -> (i32, i32) {
    %c0_i32 = arith.constant 0 : i32
    %c0_i32_0 = arith.constant 0 : i32
    %c0_i32_1 = arith.constant 0 : i32
    return %c0_i32, %c0_i32_0 : i32, i32
  }
  func.func @transform_10(%arg0: i32) -> (i32, i32) {
    %c0_i32 = arith.constant 0 : i32
    %c0_i32_0 = arith.constant 0 : i32
    %c0_i32_1 = arith.constant 0 : i32
    return %c0_i32, %c0_i32_0 : i32, i32
  }
  func.func @transform_11(%arg0: i32) -> (i32, i32) {
    %c0_i32 = arith.constant 0 : i32
    %c0_i32_0 = arith.constant 0 : i32
    %c0_i32_1 = arith.constant 0 : i32
    return %c0_i32, %c0_i32_0 : i32, i32
  }
  func.func @transform_12(%arg0: i32) -> (i32, i32) {
    %c0_i32 = arith.constant 0 : i32
    %c0_i32_0 = arith.constant 0 : i32
    %c0_i32_1 = arith.constant 0 : i32
    return %c0_i32, %c0_i32_0 : i32, i32
  }
  func.func @transform_13(%arg0: i32) -> (i32, i32) {
    %c0_i32 = arith.constant 0 : i32
    %c0_i32_0 = arith.constant 0 : i32
    %c0_i32_1 = arith.constant 0 : i32
    return %c0_i32, %c0_i32_0 : i32, i32
  }
  func.func @transform_14(%arg0: i32) -> (i32, i32) {
    %c0_i32 = arith.constant 0 : i32
    %c0_i32_0 = arith.constant 0 : i32
    %c0_i32_1 = arith.constant 0 : i32
    return %c0_i32, %c0_i32_0 : i32, i32
  }
}

</mosaic_0001>

<llo_original>
// kernel: forward.1
$region0: #{forward.1}
  #allocation0 [shape = 'u32[]', space=smem, size = 0x4, offset = 0x4, fixed_abs, tag = 'smem constant byte address 0x4 - core index']
  #allocation1 [shape = 'u32[144,128]{1,0:T(1,128)}', space=vmem, size = 0x12000, scoped, tag = 'internal scratch']
  #allocation2 [shape = 'bf16[20,320]{1,0:T(8,128)(2,1)}', space=vmem, size = 0x4800, scoped, tag = 'scratch operand']
  %s0 = inlined_call_operand.vmem [shape: bf16[16,256], index: 0, kind: input, shape index: {}]
  %s1 = inlined_call_operand.vmem [shape: bf16[2,64], index: 1, kind: input, shape index: {}]
  %s2 = inlined_call_operand.hbm [shape: bf16[5,3,320,256], index: 2, kind: input, shape index: {}]
  %s3 = inlined_call_operand.hbm [shape: f32[5,1,256], index: 3, kind: input, shape index: {}]
  %s4 = inlined_call_operand.vmem [shape: bf16[8,320,64], index: 4, kind: input, shape index: {}]
  %s5 = inlined_call_operand.hbm [shape: f32[1,64], index: 5, kind: input, shape index: {}]
  %s6 = inlined_call_operand.hbm [shape: bf16[64,64], index: 6, kind: input, shape index: {}]
  %s7 = inlined_call_operand.hbm [shape: f32[1,64], index: 7, kind: input, shape index: {}]
  %s8 = inlined_call_operand.hbm [shape: f32[1,64], index: 8, kind: input, shape index: {}]
  %s9 = inlined_call_operand.hbm [shape: f32[1,64], index: 9, kind: input, shape index: {}]
  %s10 = inlined_call_operand.hbm [shape: f32[1,64], index: 10, kind: input, shape index: {}]
  %s11 = inlined_call_operand.hbm [shape: f32[1,64], index: 11, kind: input, shape index: {}]
  %s12 = inlined_call_operand.hbm [shape: bf16[64,64], index: 12, kind: input, shape index: {}]
  %s13 = inlined_call_operand.hbm [shape: f32[1,64], index: 13, kind: input, shape index: {}]
  %s14 = inlined_call_operand.hbm [shape: f32[2,64], index: 14, kind: output, shape index: {}]
  %s15 = sld [smem:[#allocation0]]
  $region141: #{forward.1} parent=0
    _
  %s17 = ssub.s32 1, %s15
  %s18 = scalar_select 0, %s17, %s15
  $region1: #{forward.1} parent=0
    #allocation3 [shape = 'u8[983040]{0}', space=vmem, size = 0xf0000, scoped, tag = 'input window, operand 2']
    #allocation4 [shape = 's32[2]{0}', space=sflag, size = 0x8, scoped, tag = 'scoped memory for forward.1']
    #allocation5 [shape = 's32[2]{0}', space=sflag, size = 0x8, scoped, tag = 'scoped memory for forward.1']
    #allocation6 [shape = 'u8[2048]{0}', space=vmem, size = 0x800, scoped, tag = 'input window, operand 3']
    #allocation7 [shape = 's32[2]{0}', space=sflag, size = 0x8, scoped, tag = 'scoped memory for forward.1']
    #allocation8 [shape = 'u8[512]{0}', space=vmem, size = 0x400, scoped, tag = 'input window, operand 5, single buffered']
    #allocation9 [shape = 'u8[16384]{0}', space=vmem, size = 0x4000, scoped, tag = 'input window, operand 6, single buffered']
    #allocation10 [shape = 's32[1]{0}', space=sflag, size = 0x4, scoped, tag = 'scoped memory for forward.1']
    #allocation11 [shape = 'u8[512]{0}', space=vmem, size = 0x400, scoped, tag = 'input window, operand 7, single buffered']
    #allocation12 [shape = 'u8[512]{0}', space=vmem, size = 0x400, scoped, tag = 'input window, operand 8, single buffered']
    #allocation13 [shape = 's32[1]{0}', space=sflag, size = 0x4, scoped, tag = 'scoped memory for forward.1']
    #allocation14 [shape = 'u8[512]{0}', space=vmem, size = 0x400, scoped, tag = 'input window, operand 9, single buffered']
    #allocation15 [shape = 'u8[512]{0}', space=vmem, size = 0x400, scoped, tag = 'input window, operand 10, single buffered']
    #allocation16 [shape = 's32[1]{0}', space=sflag, size = 0x4, scoped, tag = 'scoped memory for forward.1']
    #allocation17 [shape = 'u8[512]{0}', space=vmem, size = 0x400, scoped, tag = 'input window, operand 11, single buffered']
    #allocation18 [shape = 'u8[16384]{0}', space=vmem, size = 0x4000, scoped, tag = 'input window, operand 12, single buffered']
    #allocation19 [shape = 's32[1]{0}', space=sflag, size = 0x4, scoped, tag = 'scoped memory for forward.1']
    #allocation20 [shape = 'u8[512]{0}', space=vmem, size = 0x400, scoped, tag = 'input window, operand 13, single buffered']
    #allocation21 [shape = 'u8[1024]{0}', space=vmem, size = 0x400, scoped, tag = 'output window, operand 0, single buffered']
    %19 = vsyncpa [#allocation4], 0
    %s20 = scalar_lea.sflag [#allocation4], 1
    %21 = vsyncpa %s20, 0
    %22 = vsyncpa [#allocation7], 0
    %s23 = scalar_lea.sflag [#allocation7], 1
    %24 = vsyncpa %s23, 0
    %25 = vsyncpa [#allocation10], 0
    %26 = vsyncpa [#allocation13], 0
    %27 = vsyncpa [#allocation16], 0
    %28 = vsyncpa [#allocation19], 0
    %29 = vsyncpa [#allocation5], 0
    loop: start=0, step=1, limit=7
    $region2: #{forward.1} parent=1 // loop_pre_header
      _
    $region3: #{forward.1} parent=1 // loop_header
      %s31 = sphi 0, %s35
      %p32 = scmp.ge.s32.totalorder %s31, 7
      %s39 = sphi 0, %s39
      %s41 = sphi 0, %s39
      %s42 = sphi 0, %s41
      %s56 = sphi 0, %s42
      %s60 = sphi 0, %s60
      %s62 = sphi 0, %s60
      %s63 = sphi 0, %s62
      %s77 = sphi 0, %s63
      %s83 = sphi 0, %s85
      %s86 = sphi 0, %s83
      %s87 = sphi 0, %s86
      %s103 = sphi 0, %s87
      %s109 = sphi 0, %s111
      %s112 = sphi 0, %s109
      %s113 = sphi 0, %s112
      %s129 = sphi 0, %s113
      %s133 = sphi 0, %s133
      %s135 = sphi 0, %s133
      %s136 = sphi 0, %s135
      %s150 = sphi 0, %s136
      %s154 = sphi 0, %s154
      %s156 = sphi 0, %s154
      %s157 = sphi 0, %s156
      %s171 = sphi 0, %s157
      %s175 = sphi 0, %s175
      %s177 = sphi 0, %s175
      %s178 = sphi 0, %s177
      %s192 = sphi 0, %s178
      %s196 = sphi 0, %s196
      %s198 = sphi 0, %s196
      %s199 = sphi 0, %s198
      %s213 = sphi 0, %s199
      %s217 = sphi 0, %s217
      %s219 = sphi 0, %s217
      %s220 = sphi 0, %s219
      %s234 = sphi 0, %s220
      %s238 = sphi 0, %s238
      %s240 = sphi 0, %s238
      %s241 = sphi 0, %s240
      %s255 = sphi 0, %s241
      %s259 = sphi 0, %s259
      %s261 = sphi 0, %s259
      %s262 = sphi 0, %s261
      %s276 = sphi 0, %s262
      %s280 = sphi 0, %s280
      %s282 = sphi 0, %s280
      %s283 = sphi 0, %s282
      %s297 = sphi 0, %s283
      %s301 = sphi 0, %s301
      %s303 = sphi 0, %s301
      %s304 = sphi 0, %s303
      %s318 = sphi 0, %s304
      %s322 = sphi 0, %s322
      %s324 = sphi 0, %s322
      %s325 = sphi 0, %s324
      %s339 = sphi 0, %s325
      %s343 = sphi 0, %s343
      %s345 = sphi 0, %s343
      %s346 = sphi 0, %s345
      %s360 = sphi 0, %s346
    $region4: #{forward.1} parent=1 // loop_header_branch
      %34 = sbr.rel (%p32) target = $region8
    $region5: #{forward.1} parent=1 // loop_body
      %s36 = ssub.s32 %s31, 1
      %s37 = ssub.s32 %s31, 2
      %s38 = sadd.s32 %s31, 1
      %s40 = sadd.s32 %s39, 1
      %p43 = scmp.eq.s32.totalorder %s31, 4
      %p44 = scmp.ne.s32.totalorder %s39, %s41
      %p45 = scmp.eq.s32.totalorder %s31, 0
      %p46 = por %p44, %p45
      %p47 = scmp.ne.s32.totalorder %s39, %s41
      %p48 = scmp.eq.s32.totalorder %s36, 4
      %p49 = por %p47, %p48
      %p50 = scmp.ne.s32.totalorder %s41, %s42
      %p51 = scmp.eq.s32.totalorder %s36, 0
      %p52 = por %p50, %p51
      %p53 = scmp.ne.s32.totalorder %s41, %s42
      %p54 = scmp.eq.s32.totalorder %s37, 4
      %p55 = por %p53, %p54
      %p57 = scmp.ne.s32.totalorder %s42, %s56
      %p58 = scmp.eq.s32.totalorder %s37, 0
      %p59 = por %p57, %p58
      %s61 = sadd.s32 %s60, 1
      %p64 = scmp.eq.s32.totalorder %s31, 4
      %p65 = scmp.ne.s32.totalorder %s60, %s62
      %p66 = scmp.eq.s32.totalorder %s31, 0
      %p67 = por %p65, %p66
      %p68 = scmp.ne.s32.totalorder %s60, %s62
      %p69 = scmp.eq.s32.totalorder %s36, 4
      %p70 = por %p68, %p69
      %p71 = scmp.ne.s32.totalorder %s62, %s63
      %p72 = scmp.eq.s32.totalorder %s36, 0
      %p73 = por %p71, %p72
      %p74 = scmp.ne.s32.totalorder %s62, %s63
      %p75 = scmp.eq.s32.totalorder %s37, 4
      %p76 = por %p74, %p75
      %p78 = scmp.ne.s32.totalorder %s63, %s77
      %p79 = scmp.eq.s32.totalorder %s37, 0
      %p80 = por %p78, %p79
      %s81 = ssub.s32 %s31, %s38
      %p82 = scmp.eq.s32.totalorder %s81, 0
      %s84 = sadd.s32 %s83, 1
      %s85 = scalar_select %p82, %s83, %s84
      %p88 = pneg %p82
      %p89 = scmp.eq.s32.totalorder %s31, 4
      %p90 = por %p88, %p89
      %p91 = scmp.ne.s32.totalorder %s83, %s86
      %p92 = scmp.eq.s32.totalorder %s31, 0
      %p93 = por %p91, %p92
      %p94 = scmp.ne.s32.totalorder %s83, %s86
      %p95 = scmp.eq.s32.totalorder %s36, 4
      %p96 = por %p94, %p95
      %p97 = scmp.ne.s32.totalorder %s86, %s87
      %p98 = scmp.eq.s32.totalorder %s36, 0
      %p99 = por %p97, %p98
      %p100 = scmp.ne.s32.totalorder %s86, %s87
      %p101 = scmp.eq.s32.totalorder %s37, 4
      %p102 = por %p100, %p101
      %p104 = scmp.ne.s32.totalorder %s87, %s103
      %p105 = scmp.eq.s32.totalorder %s37, 0
      %p106 = por %p104, %p105
      %s107 = ssub.s32 %s31, %s38
      %p108 = scmp.eq.s32.totalorder %s107, 0
      %s110 = sadd.s32 %s109, 1
      %s111 = scalar_select %p108, %s109, %s110
      %p114 = pneg %p108
      %p115 = scmp.eq.s32.totalorder %s31, 4
      %p116 = por %p114, %p115
      %p117 = scmp.ne.s32.totalorder %s109, %s112
      %p118 = scmp.eq.s32.totalorder %s31, 0
      %p119 = por %p117, %p118
      %p120 = scmp.ne.s32.totalorder %s109, %s112
      %p121 = scmp.eq.s32.totalorder %s36, 4
      %p122 = por %p120, %p121
      %p123 = scmp.ne.s32.totalorder %s112, %s113
      %p124 = scmp.eq.s32.totalorder %s36, 0
      %p125 = por %p123, %p124
      %p126 = scmp.ne.s32.totalorder %s112, %s113
      %p127 = scmp.eq.s32.totalorder %s37, 4
      %p128 = por %p126, %p127
      %p130 = scmp.ne.s32.totalorder %s113, %s129
      %p131 = scmp.eq.s32.totalorder %s37, 0
      %p132 = por %p130, %p131
      %s134 = sadd.s32 %s133, 1
      %p137 = scmp.eq.s32.totalorder %s31, 4
      %p138 = scmp.ne.s32.totalorder %s133, %s135
      %p139 = scmp.eq.s32.totalorder %s31, 0
      %p140 = por %p138, %p139
      %p141 = scmp.ne.s32.totalorder %s133, %s135
      %p142 = scmp.eq.s32.totalorder %s36, 4
      %p143 = por %p141, %p142
      %p144 = scmp.ne.s32.totalorder %s135, %s136
      %p145 = scmp.eq.s32.totalorder %s36, 0
      %p146 = por %p144, %p145
      %p147 = scmp.ne.s32.totalorder %s135, %s136
      %p148 = scmp.eq.s32.totalorder %s37, 4
      %p149 = por %p147, %p148
      %p151 = scmp.ne.s32.totalorder %s136, %s150
      %p152 = scmp.eq.s32.totalorder %s37, 0
      %p153 = por %p151, %p152
      %s155 = sadd.s32 %s154, 1
      %p158 = scmp.eq.s32.totalorder %s31, 4
      %p159 = scmp.ne.s32.totalorder %s154, %s156
      %p160 = scmp.eq.s32.totalorder %s31, 0
      %p161 = por %p159, %p160
      %p162 = scmp.ne.s32.totalorder %s154, %s156
      %p163 = scmp.eq.s32.totalorder %s36, 4
      %p164 = por %p162, %p163
      %p165 = scmp.ne.s32.totalorder %s156, %s157
      %p166 = scmp.eq.s32.totalorder %s36, 0
      %p167 = por %p165, %p166
      %p168 = scmp.ne.s32.totalorder %s156, %s157
      %p169 = scmp.eq.s32.totalorder %s37, 4
      %p170 = por %p168, %p169
      %p172 = scmp.ne.s32.totalorder %s157, %s171
      %p173 = scmp.eq.s32.totalorder %s37, 0
      %p174 = por %p172, %p173
      %s176 = sadd.s32 %s175, 1
      %p179 = scmp.eq.s32.totalorder %s31, 4
      %p180 = scmp.ne.s32.totalorder %s175, %s177
      %p181 = scmp.eq.s32.totalorder %s31, 0
      %p182 = por %p180, %p181
      %p183 = scmp.ne.s32.totalorder %s175, %s177
      %p184 = scmp.eq.s32.totalorder %s36, 4
      %p185 = por %p183, %p184
      %p186 = scmp.ne.s32.totalorder %s177, %s178
      %p187 = scmp.eq.s32.totalorder %s36, 0
      %p188 = por %p186, %p187
      %p189 = scmp.ne.s32.totalorder %s177, %s178
      %p190 = scmp.eq.s32.totalorder %s37, 4
      %p191 = por %p189, %p190
      %p193 = scmp.ne.s32.totalorder %s178, %s192
      %p194 = scmp.eq.s32.totalorder %s37, 0
      %p195 = por %p193, %p194
      %s197 = sadd.s32 %s196, 1
      %p200 = scmp.eq.s32.totalorder %s31, 4
      %p201 = scmp.ne.s32.totalorder %s196, %s198
      %p202 = scmp.eq.s32.totalorder %s31, 0
      %p203 = por %p201, %p202
      %p204 = scmp.ne.s32.totalorder %s196, %s198
      %p205 = scmp.eq.s32.totalorder %s36, 4
      %p206 = por %p204, %p205
      %p207 = scmp.ne.s32.totalorder %s198, %s199
      %p208 = scmp.eq.s32.totalorder %s36, 0
      %p209 = por %p207, %p208
      %p210 = scmp.ne.s32.totalorder %s198, %s199
      %p211 = scmp.eq.s32.totalorder %s37, 4
      %p212 = por %p210, %p211
      %p214 = scmp.ne.s32.totalorder %s199, %s213
      %p215 = scmp.eq.s32.totalorder %s37, 0
      %p216 = por %p214, %p215
      %s218 = sadd.s32 %s217, 1
      %p221 = scmp.eq.s32.totalorder %s31, 4
      %p222 = scmp.ne.s32.totalorder %s217, %s219
      %p223 = scmp.eq.s32.totalorder %s31, 0
      %p224 = por %p222, %p223
      %p225 = scmp.ne.s32.totalorder %s217, %s219
      %p226 = scmp.eq.s32.totalorder %s36, 4
      %p227 = por %p225, %p226
      %p228 = scmp.ne.s32.totalorder %s219, %s220
      %p229 = scmp.eq.s32.totalorder %s36, 0
      %p230 = por %p228, %p229
      %p231 = scmp.ne.s32.totalorder %s219, %s220
      %p232 = scmp.eq.s32.totalorder %s37, 4
      %p233 = por %p231, %p232
      %p235 = scmp.ne.s32.totalorder %s220, %s234
      %p236 = scmp.eq.s32.totalorder %s37, 0
      %p237 = por %p235, %p236
      %s239 = sadd.s32 %s238, 1
      %p242 = scmp.eq.s32.totalorder %s31, 4
      %p243 = scmp.ne.s32.totalorder %s238, %s240
      %p244 = scmp.eq.s32.totalorder %s31, 0
      %p245 = por %p243, %p244
      %p246 = scmp.ne.s32.totalorder %s238, %s240
      %p247 = scmp.eq.s32.totalorder %s36, 4
      %p248 = por %p246, %p247
      %p249 = scmp.ne.s32.totalorder %s240, %s241
      %p250 = scmp.eq.s32.totalorder %s36, 0
      %p251 = por %p249, %p250
      %p252 = scmp.ne.s32.totalorder %s240, %s241
      %p253 = scmp.eq.s32.totalorder %s37, 4
      %p254 = por %p252, %p253
      %p256 = scmp.ne.s32.totalorder %s241, %s255
      %p257 = scmp.eq.s32.totalorder %s37, 0
      %p258 = por %p256, %p257
      %s260 = sadd.s32 %s259, 1
      %p263 = scmp.eq.s32.totalorder %s31, 4
      %p264 = scmp.ne.s32.totalorder %s259, %s261
      %p265 = scmp.eq.s32.totalorder %s31, 0
      %p266 = por %p264, %p265
      %p267 = scmp.ne.s32.totalorder %s259, %s261
      %p268 = scmp.eq.s32.totalorder %s36, 4
      %p269 = por %p267, %p268
      %p270 = scmp.ne.s32.totalorder %s261, %s262
      %p271 = scmp.eq.s32.totalorder %s36, 0
      %p272 = por %p270, %p271
      %p273 = scmp.ne.s32.totalorder %s261, %s262
      %p274 = scmp.eq.s32.totalorder %s37, 4
      %p275 = por %p273, %p274
      %p277 = scmp.ne.s32.totalorder %s262, %s276
      %p278 = scmp.eq.s32.totalorder %s37, 0
      %p279 = por %p277, %p278
      %s281 = sadd.s32 %s280, 1
      %p284 = scmp.eq.s32.totalorder %s31, 4
      %p285 = scmp.ne.s32.totalorder %s280, %s282
      %p286 = scmp.eq.s32.totalorder %s31, 0
      %p287 = por %p285, %p286
      %p288 = scmp.ne.s32.totalorder %s280, %s282
      %p289 = scmp.eq.s32.totalorder %s36, 4
      %p290 = por %p288, %p289
      %p291 = scmp.ne.s32.totalorder %s282, %s283
      %p292 = scmp.eq.s32.totalorder %s36, 0
      %p293 = por %p291, %p292
      %p294 = scmp.ne.s32.totalorder %s282, %s283
      %p295 = scmp.eq.s32.totalorder %s37, 4
      %p296 = por %p294, %p295
      %p298 = scmp.ne.s32.totalorder %s283, %s297
      %p299 = scmp.eq.s32.totalorder %s37, 0
      %p300 = por %p298, %p299
      %s302 = sadd.s32 %s301, 1
      %p305 = scmp.eq.s32.totalorder %s31, 4
      %p306 = scmp.ne.s32.totalorder %s301, %s303
      %p307 = scmp.eq.s32.totalorder %s31, 0
      %p308 = por %p306, %p307
      %p309 = scmp.ne.s32.totalorder %s301, %s303
      %p310 = scmp.eq.s32.totalorder %s36, 4
      %p311 = por %p309, %p310
      %p312 = scmp.ne.s32.totalorder %s303, %s304
      %p313 = scmp.eq.s32.totalorder %s36, 0
      %p314 = por %p312, %p313
      %p315 = scmp.ne.s32.totalorder %s303, %s304
      %p316 = scmp.eq.s32.totalorder %s37, 4
      %p317 = por %p315, %p316
      %p319 = scmp.ne.s32.totalorder %s304, %s318
      %p320 = scmp.eq.s32.totalorder %s37, 0
      %p321 = por %p319, %p320
      %s323 = sadd.s32 %s322, 1
      %p326 = scmp.eq.s32.totalorder %s31, 4
      %p327 = scmp.ne.s32.totalorder %s322, %s324
      %p328 = scmp.eq.s32.totalorder %s31, 0
      %p329 = por %p327, %p328
      %p330 = scmp.ne.s32.totalorder %s322, %s324
      %p331 = scmp.eq.s32.totalorder %s36, 4
      %p332 = por %p330, %p331
      %p333 = scmp.ne.s32.totalorder %s324, %s325
      %p334 = scmp.eq.s32.totalorder %s36, 0
      %p335 = por %p333, %p334
      %p336 = scmp.ne.s32.totalorder %s324, %s325
      %p337 = scmp.eq.s32.totalorder %s37, 4
      %p338 = por %p336, %p337
      %p340 = scmp.ne.s32.totalorder %s325, %s339
      %p341 = scmp.eq.s32.totalorder %s37, 0
      %p342 = por %p340, %p341
      %s344 = sadd.s32 %s343, 1
      %p347 = scmp.eq.s32.totalorder %s31, 4
      %p348 = scmp.ne.s32.totalorder %s343, %s345
      %p349 = scmp.eq.s32.totalorder %s31, 0
      %p350 = por %p348, %p349
      %p351 = scmp.ne.s32.totalorder %s343, %s345
      %p352 = scmp.eq.s32.totalorder %s36, 4
      %p353 = por %p351, %p352
      %p354 = scmp.ne.s32.totalorder %s345, %s346
      %p355 = scmp.eq.s32.totalorder %s36, 0
      %p356 = por %p354, %p355
      %p357 = scmp.ne.s32.totalorder %s345, %s346
      %p358 = scmp.eq.s32.totalorder %s37, 4
      %p359 = por %p357, %p358
      %p361 = scmp.ne.s32.totalorder %s346, %s360
      %p362 = scmp.eq.s32.totalorder %s37, 0
      %p363 = por %p361, %p362
      %p364 = scmp.le.s32.totalorder 1, %s31
      %p365 = scmp.lt.s32.totalorder %s31, 6
      %p366 = pnand %p364, %p365
      %p367 = pneg %p366
      // Predicated region
      $region9: #{forward.1} parent=5 // pred_check
        _
      $region10: #{forward.1} parent=5 // pred_check_branch
        %369 = sbr.rel (%p366) target = $region12
      $region11: #{forward.1} parent=5 // pred_region
        %s370 = ssub.s32 %s31, 1
        // Predicated region
        $region13: #{forward.1} parent=11 // pred_check
          %p371 = pneg %p52
        $region14: #{forward.1} parent=11 // pred_check_branch
          %373 = sbr.rel (%p371) target = $region16
        $region15: #{forward.1} parent=11 // pred_region
          _
        $region16: #{forward.1} parent=11 // pred_fallthru
          _
        // Predicated region
        $region17: #{forward.1} parent=11 // pred_check
          %p374 = pneg %p73
        $region18: #{forward.1} parent=11 // pred_check_branch
          %376 = sbr.rel (%p374) target = $region20
        $region19: #{forward.1} parent=11 // pred_region
          _
        $region20: #{forward.1} parent=11 // pred_fallthru
          _
        // Predicated region
        $region21: #{forward.1} parent=11 // pred_check
          %p377 = pneg %p146
        $region22: #{forward.1} parent=11 // pred_check_branch
          %379 = sbr.rel (%p377) target = $region24
        $region23: #{forward.1} parent=11 // pred_region
          _
        $region24: #{forward.1} parent=11 // pred_fallthru
          _
        // Predicated region
        $region25: #{forward.1} parent=11 // pred_check
          %p380 = pneg %p167
        $region26: #{forward.1} parent=11 // pred_check_branch
          %382 = sbr.rel (%p380) target = $region28
        $region27: #{forward.1} parent=11 // pred_region
          %s384 = ssub.s32 16, 16
          %385 = vsyncadd [#allocation7], %s384
          %s387 = sshll.u32 [#allocation8], 4
          %s388 = int_to_ptr.vmem [resolvable:$true] %s387
          %390 = dma.hbm_to_vmem [thread:$0]  %s5, 16, %s388, [#allocation7]
        $region28: #{forward.1} parent=11 // pred_fallthru
          _
        // Predicated region
        $region29: #{forward.1} parent=11 // pred_check
          %p391 = pneg %p188
        $region30: #{forward.1} parent=11 // pred_check_branch
          %393 = sbr.rel (%p391) target = $region32
        $region31: #{forward.1} parent=11 // pred_region
          %s395 = ssub.s32 512, 512
          %396 = vsyncadd [#allocation10], %s395
          %s397 = sshll.u32 [#allocation9], 4
          %s398 = int_to_ptr.vmem [resolvable:$true] %s397
          %403 = dma.hbm_to_vmem [thread:$0]  %s6, 512, %s398, [#allocation10], 64, 64, 4
        $region32: #{forward.1} parent=11 // pred_fallthru
          _
        // Predicated region
        $region33: #{forward.1} parent=11 // pred_check
          %p404 = pneg %p209
        $region34: #{forward.1} parent=11 // pred_check_branch
          %406 = sbr.rel (%p404) target = $region36
        $region35: #{forward.1} parent=11 // pred_region
          %s408 = ssub.s32 16, 16
          %409 = vsyncadd [#allocation10], %s408
          %s411 = sshll.u32 [#allocation11], 4
          %s412 = int_to_ptr.vmem [resolvable:$true] %s411
          %414 = dma.hbm_to_vmem [thread:$0]  %s7, 16, %s412, [#allocation10]
        $region36: #{forward.1} parent=11 // pred_fallthru
          _
        // Predicated region
        $region37: #{forward.1} parent=11 // pred_check
          %p415 = pneg %p230
        $region38: #{forward.1} parent=11 // pred_check_branch
          %417 = sbr.rel (%p415) target = $region40
        $region39: #{forward.1} parent=11 // pred_region
          %s419 = ssub.s32 16, 16
          %420 = vsyncadd [#allocation13], %s419
          %s422 = sshll.u32 [#allocation12], 4
          %s423 = int_to_ptr.vmem [resolvable:$true] %s422
          %425 = dma.hbm_to_vmem [thread:$0]  %s8, 16, %s423, [#allocation13]
        $region40: #{forward.1} parent=11 // pred_fallthru
          _
        // Predicated region
        $region41: #{forward.1} parent=11 // pred_check
          %p426 = pneg %p251
        $region42: #{forward.1} parent=11 // pred_check_branch
          %428 = sbr.rel (%p426) target = $region44
        $region43: #{forward.1} parent=11 // pred_region
          %s430 = ssub.s32 16, 16
          %431 = vsyncadd [#allocation13], %s430
          %s433 = sshll.u32 [#allocation14], 4
          %s434 = int_to_ptr.vmem [resolvable:$true] %s433
          %436 = dma.hbm_to_vmem [thread:$0]  %s9, 16, %s434, [#allocation13]
        $region44: #{forward.1} parent=11 // pred_fallthru
          _
        // Predicated region
        $region45: #{forward.1} parent=11 // pred_check
          %p437 = pneg %p272
        $region46: #{forward.1} parent=11 // pred_check_branch
          %439 = sbr.rel (%p437) target = $region48
        $region47: #{forward.1} parent=11 // pred_region
          %s441 = ssub.s32 16, 16
          %442 = vsyncadd [#allocation16], %s441
          %s444 = sshll.u32 [#allocation15], 4
          %s445 = int_to_ptr.vmem [resolvable:$true] %s444
          %447 = dma.hbm_to_vmem [thread:$0]  %s10, 16, %s445, [#allocation16]
        $region48: #{forward.1} parent=11 // pred_fallthru
          _
        // Predicated region
        $region49: #{forward.1} parent=11 // pred_check
          %p448 = pneg %p293
        $region50: #{forward.1} parent=11 // pred_check_branch
          %450 = sbr.rel (%p448) target = $region52
        $region51: #{forward.1} parent=11 // pred_region
          %s452 = ssub.s32 16, 16
          %453 = vsyncadd [#allocation16], %s452
          %s455 = sshll.u32 [#allocation17], 4
          %s456 = int_to_ptr.vmem [resolvable:$true] %s455
          %458 = dma.hbm_to_vmem [thread:$0]  %s11, 16, %s456, [#allocation16]
        $region52: #{forward.1} parent=11 // pred_fallthru
          _
        // Predicated region
        $region53: #{forward.1} parent=11 // pred_check
          %p459 = pneg %p314
        $region54: #{forward.1} parent=11 // pred_check_branch
          %461 = sbr.rel (%p459) target = $region56
        $region55: #{forward.1} parent=11 // pred_region
          %s463 = ssub.s32 512, 512
          %464 = vsyncadd [#allocation19], %s463
          %s465 = sshll.u32 [#allocation18], 4
          %s466 = int_to_ptr.vmem [resolvable:$true] %s465
          %471 = dma.hbm_to_vmem [thread:$0]  %s12, 512, %s466, [#allocation19], 64, 64, 4
        $region56: #{forward.1} parent=11 // pred_fallthru
          _
        // Predicated region
        $region57: #{forward.1} parent=11 // pred_check
          %p472 = pneg %p335
        $region58: #{forward.1} parent=11 // pred_check_branch
          %474 = sbr.rel (%p472) target = $region60
        $region59: #{forward.1} parent=11 // pred_region
          %s476 = ssub.s32 16, 16
          %477 = vsyncadd [#allocation19], %s476
          %s479 = sshll.u32 [#allocation20], 4
          %s480 = int_to_ptr.vmem [resolvable:$true] %s479
          %482 = dma.hbm_to_vmem [thread:$0]  %s13, 16, %s480, [#allocation19]
        $region60: #{forward.1} parent=11 // pred_fallthru
          _
      $region12: #{forward.1} parent=5 // pred_fallthru
        _
      %p483 = scmp.lt.s32.totalorder %s31, 5
      // Predicated region
      $region61: #{forward.1} parent=5 // pred_check
        %p484 = pneg %p483
      $region62: #{forward.1} parent=5 // pred_check_branch
        %486 = sbr.rel (%p484) target = $region64
      $region63: #{forward.1} parent=5 // pred_region
        // Predicated region
        $region65: #{forward.1} parent=63 // pred_check
          %p487 = pneg %p93
        $region66: #{forward.1} parent=63 // pred_check_branch
          %489 = sbr.rel (%p487) target = $region68
        $region67: #{forward.1} parent=63 // pred_region
          %s490 = sand.u32 %s83, 1
          %s491 = scalar_lea.sflag [#allocation4], %s490
          %s492 = sand.u32 %s83, 1
          %s493 = smul.addr %s492, 960
          %s494 = scalar_lea.vmem [#allocation3], %s493
          %s496 = ssub.s32 15360, 15360
          %497 = vsyncadd %s491, %s496
          %s498 = smul.addr %s31, 240
          %s499 = smul.addr %s498, 64
          %s500 = scalar_lea.hbm %s2, %s499
          %s501 = sshll.u32 %s494, 4
          %s502 = int_to_ptr.vmem [resolvable:$true] %s501
          %507 = dma.hbm_to_vmem [thread:$0]  %s500, 15360, %s502, %s491, 128, 128, 8
        $region68: #{forward.1} parent=63 // pred_fallthru
          _
        // Predicated region
        $region69: #{forward.1} parent=63 // pred_check
          %p508 = pneg %p119
        $region70: #{forward.1} parent=63 // pred_check_branch
          %510 = sbr.rel (%p508) target = $region72
        $region71: #{forward.1} parent=63 // pred_region
          %s511 = sand.u32 %s31, 1
          %s512 = scalar_lea.sflag [#allocation7], %s511
          %s513 = sand.u32 %s109, 1
          %s514 = smul.addr %s513, 2
          %s515 = scalar_lea.vmem [#allocation6], %s514
          %s517 = ssub.s32 32, 32
          %518 = vsyncadd %s512, %s517
          %s519 = smul.addr %s31, 2
          %s520 = smul.addr %s519, 16
          %s521 = scalar_lea.hbm %s3, %s520
          %s523 = sshll.u32 %s515, 4
          %s524 = int_to_ptr.vmem [resolvable:$true] %s523
          %526 = dma.hbm_to_vmem [thread:$0]  %s521, 32, %s524, %s512
        $region72: #{forward.1} parent=63 // pred_fallthru
          _
      $region64: #{forward.1} parent=5 // pred_fallthru
        _
      %p527 = scmp.le.s32.totalorder 1, %s31
      %p528 = scmp.lt.s32.totalorder %s31, 6
      %p529 = pnand %p527, %p528
      %p530 = pneg %p529
      // Predicated region
      $region73: #{forward.1} parent=5 // pred_check
        _
      $region74: #{forward.1} parent=5 // pred_check_branch
        %532 = sbr.rel (%p529) target = $region76
      $region75: #{forward.1} parent=5 // pred_region
        %s533 = ssub.s32 %s31, 1
        %s534 = sand.u32 %s86, 1
        %s535 = scalar_lea.sflag [#allocation4], %s534
        %s536 = sand.u32 %s86, 1
        %s537 = smul.addr %s536, 960
        %s538 = scalar_lea.vmem [#allocation3], %s537
        // Predicated region
        $region77: #{forward.1} parent=75 // pred_check
          %p539 = pneg %p99
        $region78: #{forward.1} parent=75 // pred_check_branch
          %541 = sbr.rel (%p539) target = $region80
        $region79: #{forward.1} parent=75 // pred_region
          %542 = dma.done %s535, 15360
        $region80: #{forward.1} parent=75 // pred_fallthru
          _
        %s543 = sand.u32 %s36, 1
        %s544 = scalar_lea.sflag [#allocation7], %s543
        %s545 = sand.u32 %s112, 1
        %s546 = smul.addr %s545, 2
        %s547 = scalar_lea.vmem [#allocation6], %s546
        // Predicated region
        $region81: #{forward.1} parent=75 // pred_check
          %p548 = pneg %p125
        $region82: #{forward.1} parent=75 // pred_check_branch
          %550 = sbr.rel (%p548) target = $region84
        $region83: #{forward.1} parent=75 // pred_region
          %551 = dma.done %s544, 32
        $region84: #{forward.1} parent=75 // pred_fallthru
          _
        // Predicated region
        $region85: #{forward.1} parent=75 // pred_check
          %p552 = pneg %p167
        $region86: #{forward.1} parent=75 // pred_check_branch
          %554 = sbr.rel (%p552) target = $region88
        $region87: #{forward.1} parent=75 // pred_region
          %555 = dma.done [#allocation7], 16
        $region88: #{forward.1} parent=75 // pred_fallthru
          _
        // Predicated region
        $region89: #{forward.1} parent=75 // pred_check
          %p556 = pneg %p188
        $region90: #{forward.1} parent=75 // pred_check_branch
          %558 = sbr.rel (%p556) target = $region92
        $region91: #{forward.1} parent=75 // pred_region
          %559 = dma.done [#allocation10], 512
        $region92: #{forward.1} parent=75 // pred_fallthru
          _
        // Predicated region
        $region93: #{forward.1} parent=75 // pred_check
          %p560 = pneg %p209
        $region94: #{forward.1} parent=75 // pred_check_branch
          %562 = sbr.rel (%p560) target = $region96
        $region95: #{forward.1} parent=75 // pred_region
          %563 = dma.done [#allocation10], 16
        $region96: #{forward.1} parent=75 // pred_fallthru
          _
        // Predicated region
        $region97: #{forward.1} parent=75 // pred_check
          %p564 = pneg %p230
        $region98: #{forward.1} parent=75 // pred_check_branch
          %566 = sbr.rel (%p564) target = $region100
        $region99: #{forward.1} parent=75 // pred_region
          %567 = dma.done [#allocation13], 16
        $region100: #{forward.1} parent=75 // pred_fallthru
          _
        // Predicated region
        $region101: #{forward.1} parent=75 // pred_check
          %p568 = pneg %p251
        $region102: #{forward.1} parent=75 // pred_check_branch
          %570 = sbr.rel (%p568) target = $region104
        $region103: #{forward.1} parent=75 // pred_region
          %571 = dma.done [#allocation13], 16
        $region104: #{forward.1} parent=75 // pred_fallthru
          _
        // Predicated region
        $region105: #{forward.1} parent=75 // pred_check
          %p572 = pneg %p272
        $region106: #{forward.1} parent=75 // pred_check_branch
          %574 = sbr.rel (%p572) target = $region108
        $region107: #{forward.1} parent=75 // pred_region
          %575 = dma.done [#allocation16], 16
        $region108: #{forward.1} parent=75 // pred_fallthru
          _
        // Predicated region
        $region109: #{forward.1} parent=75 // pred_check
          %p576 = pneg %p293
        $region110: #{forward.1} parent=75 // pred_check_branch
          %578 = sbr.rel (%p576) target = $region112
        $region111: #{forward.1} parent=75 // pred_region
          %579 = dma.done [#allocation16], 16
        $region112: #{forward.1} parent=75 // pred_fallthru
          _
        // Predicated region
        $region113: #{forward.1} parent=75 // pred_check
          %p580 = pneg %p314
        $region114: #{forward.1} parent=75 // pred_check_branch
          %582 = sbr.rel (%p580) target = $region116
        $region115: #{forward.1} parent=75 // pred_region
          %583 = dma.done [#allocation19], 512
        $region116: #{forward.1} parent=75 // pred_fallthru
          _
        // Predicated region
        $region117: #{forward.1} parent=75 // pred_check
          %p584 = pneg %p335
        $region118: #{forward.1} parent=75 // pred_check_branch
          %586 = sbr.rel (%p584) target = $region120
        $region119: #{forward.1} parent=75 // pred_region
          %587 = dma.done [#allocation19], 16
        $region120: #{forward.1} parent=75 // pred_fallthru
          _
        %p588 = pneg %p52
        %p589 = pneg %p49
        %p590 = pneg %p73
        %p591 = pneg %p70
        %s592 = sand.u32 %s86, 1
        %s593 = scalar_lea.sflag [#allocation4], %s592
        %s594 = sand.u32 %s86, 1
        %s595 = smul.addr %s594, 960
        %s596 = scalar_lea.vmem [#allocation3], %s595
        %p597 = pneg %p99
        %p598 = pneg %p96
        %s599 = sand.u32 %s36, 1
        %s600 = scalar_lea.sflag [#allocation7], %s599
        %s601 = sand.u32 %s112, 1
        %s602 = smul.addr %s601, 2
        %s603 = scalar_lea.vmem [#allocation6], %s602
        %p604 = pneg %p125
        %p605 = pneg %p122
        %p606 = pneg %p146
        %p607 = pneg %p143
        %p608 = pneg %p167
        %p609 = pneg %p164
        %p610 = pneg %p188
        %p611 = pneg %p185
        %p612 = pneg %p209
        %p613 = pneg %p206
        %p614 = pneg %p230
        %p615 = pneg %p227
        %p616 = pneg %p251
        %p617 = pneg %p248
        %p618 = pneg %p272
        %p619 = pneg %p269
        %p620 = pneg %p293
        %p621 = pneg %p290
        %p622 = pneg %p314
        %p623 = pneg %p311
        %p624 = pneg %p335
        %p625 = pneg %p332
        %p626 = pneg %p356
        %p627 = pneg %p353
        %p629 = scmp.eq.s32.totalorder %s36, 0
        // Predicated region
        $region121: #{forward.1} parent=75 // pred_check
          %p630 = pneg %p629
        $region122: #{forward.1} parent=75 // pred_check_branch
          %632 = sbr.rel (%p630) target = $region124
        $region123: #{forward.1} parent=75 // pred_region
          %633 = vst [vmem:[#allocation2] sm:$0x11] 0
          %vm634 = vcmask 516096
          %635 = vst.msk [vmem:[#allocation2 + $0x8] sm:$0x1] %vm634, 0
          %636 = vst [vmem:[#allocation2 + $0x18] sm:$0x22] 0
          %vm637 = vcmask 517121
          %638 = vst.msk [vmem:[#allocation2 + $0x20] sm:$0x2] %vm637, 0
          %vm639 = vcmask 519169
          %640 = vst.msk [vmem:[#allocation2 + $0x8] sm:$0xe] %vm639, 0
          %vm641 = vcmask 519168
          %642 = vst.msk [vmem:[#allocation2 + $0x14] sm:$0xf] %vm641, 0
          %643 = vst.msk [vmem:[#allocation2 + $0x20] sm:$0x1] %vm634, 0
          %v644 = vld [vmem:[%s0] sm:$0xff]
          %v645 = vld [vmem:[%s0 + $0x8] sm:$0xff]
          %vm648 = vcmask 1040384
          %vm649 = vcmask 1044484
          %vm650 = vmor %vm648, %vm649
          %v651 = vrot.slane %v644, 7
          %v652 = vrot.slane %v651, 4
          %v653 = vrot.slane %v645, 7
          %v654 = vsel %vm650, %v652, %v653
          %v655 = vrot.slane %v653, 4
          %659 = vst [vmem:[#allocation2] sm:$0xee] %v651
          %660 = vst [vmem:[#allocation2 + $0xc] sm:$0xff] %v654
          %661 = vst [vmem:[#allocation2 + $0x18] sm:$0x11] %v655
        $region124: #{forward.1} parent=75 // pred_fallthru
          _
        %v662 = vld [vmem:[#allocation2] sm:$0xff]
        %v663 = vld [vmem:[#allocation2 + $0x8] sm:$0xf]
        %v664 = vld [vmem:[#allocation2 + $0xc] sm:$0xff]
        %v665 = vld [vmem:[#allocation2 + $0x14] sm:$0xf]
        %v666 = vld [vmem:[%s538] sm:$0xff]
        %v667 = vld [vmem:[%s538 + $0x8] sm:$0xff]
        %v668 = vld [vmem:[%s538 + $0x10] sm:$0xff]
        %v669 = vld [vmem:[%s538 + $0x18] sm:$0xff]
        %v670 = vld [vmem:[%s538 + $0x20] sm:$0xff]
        %v671 = vld [vmem:[%s538 + $0x28] sm:$0xff]
        %v672 = vld [vmem:[%s538 + $0x30] sm:$0xff]
        %v673 = vld [vmem:[%s538 + $0x38] sm:$0xff]
        %v674 = vld [vmem:[%s538 + $0x40] sm:$0xff]
        %v675 = vld [vmem:[%s538 + $0x48] sm:$0xff]
        %v676 = vld [vmem:[%s538 + $0x50] sm:$0xff]
        %v677 = vld [vmem:[%s538 + $0x58] sm:$0xff]
        %v678 = vld [vmem:[%s538 + $0x60] sm:$0xff]
        %v679 = vld [vmem:[%s538 + $0x68] sm:$0xff]
        %v680 = vld [vmem:[%s538 + $0x70] sm:$0xff]
        %v681 = vld [vmem:[%s538 + $0x78] sm:$0xff]
        %v682 = vld [vmem:[%s538 + $0x80] sm:$0xff]
        %v683 = vld [vmem:[%s538 + $0x88] sm:$0xff]
        %v684 = vld [vmem:[%s538 + $0x90] sm:$0xff]
        %v685 = vld [vmem:[%s538 + $0x98] sm:$0xff]
        %v686 = vld [vmem:[%s538 + $0xa0] sm:$0xff]
        %v687 = vld [vmem:[%s538 + $0xa8] sm:$0xff]
        %v688 = vld [vmem:[%s538 + $0xb0] sm:$0xff]
        %v689 = vld [vmem:[%s538 + $0xb8] sm:$0xff]
        %v690 = vld [vmem:[%s538 + $0xc0] sm:$0xff]
        %v691 = vld [vmem:[%s538 + $0xc8] sm:$0xff]
        %v692 = vld [vmem:[%s538 + $0xd0] sm:$0xff]
        %v693 = vld [vmem:[%s538 + $0xd8] sm:$0xff]
        %v694 = vld [vmem:[%s538 + $0xe0] sm:$0xff]
        %v695 = vld [vmem:[%s538 + $0xe8] sm:$0xff]
        %v696 = vld [vmem:[%s538 + $0xf0] sm:$0xff]
        %v697 = vld [vmem:[%s538 + $0xf8] sm:$0xff]
        %v698 = vld [vmem:[%s538 + $0x100] sm:$0xff]
        %v699 = vld [vmem:[%s538 + $0x108] sm:$0xff]
        %v700 = vld [vmem:[%s538 + $0x110] sm:$0xff]
        %v701 = vld [vmem:[%s538 + $0x118] sm:$0xff]
        %v702 = vld [vmem:[%s538 + $0x120] sm:$0xff]
        %v703 = vld [vmem:[%s538 + $0x128] sm:$0xff]
        %v704 = vld [vmem:[%s538 + $0x130] sm:$0xff]
        %v705 = vld [vmem:[%s538 + $0x138] sm:$0xff]
        %v706 = vld [vmem:[#allocation2] sm:$0xee]
        %v707 = vld [vmem:[#allocation2 + $0x8] sm:$0xe]
        %v708 = vld [vmem:[#allocation2 + $0x18] sm:$0x11]
        %v709 = vld [vmem:[#allocation2 + $0x20] sm:$0x1]
        %s710 = scalar_lea.vmem %s538, 320 [#allocation3]
        %v711 = vld [vmem:[%s710] sm:$0xff]
        %v712 = vld [vmem:[%s710 + $0x8] sm:$0xff]
        %v713 = vld [vmem:[%s710 + $0x10] sm:$0xff]
        %v714 = vld [vmem:[%s710 + $0x18] sm:$0xff]
        %v715 = vld [vmem:[%s710 + $0x20] sm:$0xff]
        %v716 = vld [vmem:[%s710 + $0x28] sm:$0xff]
        %v717 = vld [vmem:[%s710 + $0x30] sm:$0xff]
        %v718 = vld [vmem:[%s710 + $0x38] sm:$0xff]
        %v719 = vld [vmem:[%s710 + $0x40] sm:$0xff]
        %v720 = vld [vmem:[%s710 + $0x48] sm:$0xff]
        %v721 = vld [vmem:[%s710 + $0x50] sm:$0xff]
        %v722 = vld [vmem:[%s710 + $0x58] sm:$0xff]
        %v723 = vld [vmem:[%s710 + $0x60] sm:$0xff]
        %v724 = vld [vmem:[%s710 + $0x68] sm:$0xff]
        %v725 = vld [vmem:[%s710 + $0x70] sm:$0xff]
        %v726 = vld [vmem:[%s710 + $0x78] sm:$0xff]
        %v727 = vld [vmem:[%s710 + $0x80] sm:$0xff]
        %v728 = vld [vmem:[%s710 + $0x88] sm:$0xff]
        %v729 = vld [vmem:[%s710 + $0x90] sm:$0xff]
        %v730 = vld [vmem:[%s710 + $0x98] sm:$0xff]
        %v731 = vld [vmem:[%s710 + $0xa0] sm:$0xff]
        %v732 = vld [vmem:[%s710 + $0xa8] sm:$0xff]
        %v733 = vld [vmem:[%s710 + $0xb0] sm:$0xff]
        %v734 = vld [vmem:[%s710 + $0xb8] sm:$0xff]
        %v735 = vld [vmem:[%s710 + $0xc0] sm:$0xff]
        %v736 = vld [vmem:[%s710 + $0xc8] sm:$0xff]
        %v737 = vld [vmem:[%s710 + $0xd0] sm:$0xff]
        %v738 = vld [vmem:[%s710 + $0xd8] sm:$0xff]
        %v739 = vld [vmem:[%s710 + $0xe0] sm:$0xff]
        %v740 = vld [vmem:[%s710 + $0xe8] sm:$0xff]
        %v741 = vld [vmem:[%s710 + $0xf0] sm:$0xff]
        %v742 = vld [vmem:[%s710 + $0xf8] sm:$0xff]
        %v743 = vld [vmem:[%s710 + $0x100] sm:$0xff]
        %v744 = vld [vmem:[%s710 + $0x108] sm:$0xff]
        %v745 = vld [vmem:[%s710 + $0x110] sm:$0xff]
        %v746 = vld [vmem:[%s710 + $0x118] sm:$0xff]
        %v747 = vld [vmem:[%s710 + $0x120] sm:$0xff]
        %v748 = vld [vmem:[%s710 + $0x128] sm:$0xff]
        %v749 = vld [vmem:[%s710 + $0x130] sm:$0xff]
        %v750 = vld [vmem:[%s710 + $0x138] sm:$0xff]
        %v757 = vunpack.c.l.b16 %v706
        %v758 = vunpack.c.h.b16 %v706
        %v759 = vunpack.c.l.b16 %v707
        %v760 = vunpack.c.l.b16 %v664
        %v761 = vunpack.c.h.b16 %v664
        %v762 = vunpack.c.l.b16 %v665
        %v763 = vunpack.c.l.b16 %v708
        %v764 = vunpack.c.h.b16 %v708
        %v765 = vunpack.c.l.b16 %v709
        %v766 = vpack.c.b16 %v760, %v757
        %v767 = vpack.c.b16 %v761, %v758
        %v768 = vpack.c.b16 %v762, %v759
        %v769 = vpack.c.b16 %v763, %v763
        %v770 = vpack.c.b16 %v764, %v764
        %v771 = vpack.c.b16 %v765, %v765
        %vm772 = vcmask 1046528
        %v773 = vrot.slane %v766, 1
        %v774 = vrot.slane %v769, 1
        %v775 = vsel %vm772, %v773, %v774
        %v776 = vrot.slane %v767, 1
        %v777 = vrot.slane %v770, 1
        %v778 = vsel %vm772, %v776, %v777
        %v779 = vrot.slane %v768, 1
        %v780 = vrot.slane %v771, 1
        %v781 = vsel %vm772, %v779, %v780
        %v824 = vunpack.c.l.b16 %v711
        %v825 = vunpack.c.h.b16 %v711
        %v826 = vunpack.c.l.b16 %v712
        %v827 = vunpack.c.h.b16 %v712
        %v828 = vunpack.c.l.b16 %v713
        %v829 = vunpack.c.h.b16 %v713
        %v830 = vunpack.c.l.b16 %v714
        %v831 = vunpack.c.h.b16 %v714
        %v832 = vunpack.c.l.b16 %v715
        %v833 = vunpack.c.h.b16 %v715
        %v834 = vunpack.c.l.b16 %v716
        %v835 = vunpack.c.h.b16 %v716
        %v836 = vunpack.c.l.b16 %v717
        %v837 = vunpack.c.h.b16 %v717
        %v838 = vunpack.c.l.b16 %v718
        %v839 = vunpack.c.h.b16 %v718
        %v840 = vunpack.c.l.b16 %v719
        %v841 = vunpack.c.h.b16 %v719
        %v842 = vunpack.c.l.b16 %v720
        %v843 = vunpack.c.h.b16 %v720
        %v844 = vunpack.c.l.b16 %v721
        %v845 = vunpack.c.h.b16 %v721
        %v846 = vunpack.c.l.b16 %v722
        %v847 = vunpack.c.h.b16 %v722
        %v848 = vunpack.c.l.b16 %v723
        %v849 = vunpack.c.h.b16 %v723
        %v850 = vunpack.c.l.b16 %v724
        %v851 = vunpack.c.h.b16 %v724
        %v852 = vunpack.c.l.b16 %v725
        %v853 = vunpack.c.h.b16 %v725
        %v854 = vunpack.c.l.b16 %v726
        %v855 = vunpack.c.h.b16 %v726
        %v856 = vunpack.c.l.b16 %v727
        %v857 = vunpack.c.h.b16 %v727
        %v858 = vunpack.c.l.b16 %v728
        %v859 = vunpack.c.h.b16 %v728
        %v860 = vunpack.c.l.b16 %v729
        %v861 = vunpack.c.h.b16 %v729
        %v862 = vunpack.c.l.b16 %v730
        %v863 = vunpack.c.h.b16 %v730
        %v864 = vunpack.c.l.b16 %v731
        %v865 = vunpack.c.h.b16 %v731
        %v866 = vunpack.c.l.b16 %v732
        %v867 = vunpack.c.h.b16 %v732
        %v868 = vunpack.c.l.b16 %v733
        %v869 = vunpack.c.h.b16 %v733
        %v870 = vunpack.c.l.b16 %v734
        %v871 = vunpack.c.h.b16 %v734
        %v872 = vunpack.c.l.b16 %v735
        %v873 = vunpack.c.h.b16 %v735
        %v874 = vunpack.c.l.b16 %v736
        %v875 = vunpack.c.h.b16 %v736
        %v876 = vunpack.c.l.b16 %v737
        %v877 = vunpack.c.h.b16 %v737
        %v878 = vunpack.c.l.b16 %v738
        %v879 = vunpack.c.h.b16 %v738
        %v880 = vunpack.c.l.b16 %v739
        %v881 = vunpack.c.h.b16 %v739
        %v882 = vunpack.c.l.b16 %v740
        %v883 = vunpack.c.h.b16 %v740
        %v884 = vunpack.c.l.b16 %v741
        %v885 = vunpack.c.h.b16 %v741
        %v886 = vunpack.c.l.b16 %v742
        %v887 = vunpack.c.h.b16 %v742
        %v888 = vunpack.c.l.b16 %v743
        %v889 = vunpack.c.h.b16 %v743
        %v890 = vunpack.c.l.b16 %v744
        %v891 = vunpack.c.h.b16 %v744
        %v892 = vunpack.c.l.b16 %v745
        %v893 = vunpack.c.h.b16 %v745
        %v894 = vunpack.c.l.b16 %v746
        %v895 = vunpack.c.h.b16 %v746
        %v896 = vunpack.c.l.b16 %v747
        %v897 = vunpack.c.h.b16 %v747
        %v898 = vunpack.c.l.b16 %v748
        %v899 = vunpack.c.h.b16 %v748
        %v900 = vunpack.c.l.b16 %v749
        %v901 = vunpack.c.h.b16 %v749
        %v902 = vunpack.c.l.b16 %v750
        %v903 = vunpack.c.h.b16 %v750
        %v904 = vpack.c.b16 %v826, %v824
        %v905 = vpack.c.b16 %v827, %v825
        %v906 = vpack.c.b16 %v830, %v828
        %v907 = vpack.c.b16 %v831, %v829
        %v908 = vpack.c.b16 %v834, %v832
        %v909 = vpack.c.b16 %v835, %v833
        %v910 = vpack.c.b16 %v838, %v836
        %v911 = vpack.c.b16 %v839, %v837
        %v912 = vpack.c.b16 %v842, %v840
        %v913 = vpack.c.b16 %v843, %v841
        %v914 = vpack.c.b16 %v846, %v844
        %v915 = vpack.c.b16 %v847, %v845
        %v916 = vpack.c.b16 %v850, %v848
        %v917 = vpack.c.b16 %v851, %v849
        %v918 = vpack.c.b16 %v854, %v852
        %v919 = vpack.c.b16 %v855, %v853
        %v920 = vpack.c.b16 %v858, %v856
        %v921 = vpack.c.b16 %v859, %v857
        %v922 = vpack.c.b16 %v862, %v860
        %v923 = vpack.c.b16 %v863, %v861
        %v924 = vpack.c.b16 %v866, %v864
        %v925 = vpack.c.b16 %v867, %v865
        %v926 = vpack.c.b16 %v870, %v868
        %v927 = vpack.c.b16 %v871, %v869
        %v928 = vpack.c.b16 %v874, %v872
        %v929 = vpack.c.b16 %v875, %v873
        %v930 = vpack.c.b16 %v878, %v876
        %v931 = vpack.c.b16 %v879, %v877
        %v932 = vpack.c.b16 %v882, %v880
        %v933 = vpack.c.b16 %v883, %v881
        %v934 = vpack.c.b16 %v886, %v884
        %v935 = vpack.c.b16 %v887, %v885
        %v936 = vpack.c.b16 %v890, %v888
        %v937 = vpack.c.b16 %v891, %v889
        %v938 = vpack.c.b16 %v894, %v892
        %v939 = vpack.c.b16 %v895, %v893
        %v940 = vpack.c.b16 %v898, %v896
        %v941 = vpack.c.b16 %v899, %v897
        %v942 = vpack.c.b16 %v902, %v900
        %v943 = vpack.c.b16 %v903, %v901
        %vm984 = vcmask 523264
        %v986 = vsel %vm984, %v781, 0
        %988 = vmatprep.subr.bf16.mxu0 %v905
        %989 = vmatpush1.bf16.msra.mxu0 %v904
        %990 = vmatprep.subr.bf16.mxu0 %v907
        %991 = vmatpush1.bf16.msra.mxu0 %v906
        %992 = vmatprep.subr.bf16.mxu0 %v909
        %993 = vmatpush1.bf16.msra.mxu0 %v908
        %994 = vmatprep.subr.bf16.mxu0 %v911
        %995 = vmatpush1.bf16.msra.mxu0 %v910
        %996 = vmatprep.subr.bf16.mxu0 %v913
        %997 = vmatpush1.bf16.msra.mxu0 %v912
        %998 = vmatprep.subr.bf16.mxu0 %v915
        %999 = vmatpush1.bf16.msra.mxu0 %v914
        %1000 = vmatprep.subr.bf16.mxu0 %v917
        %1001 = vmatpush1.bf16.msra.mxu0 %v916
        %1002 = vmatprep.subr.bf16.mxu0 %v919
        %1003 = vmatpush1.bf16.msra.mxu0 %v918
        %1004 = vmatprep.subr.bf16.mxu0 %v921
        %1005 = vmatpush1.bf16.msra.mxu0 %v920
        %1006 = vmatprep.subr.bf16.mxu0 %v923
        %1007 = vmatpush1.bf16.msra.mxu0 %v922
        %1008 = vmatprep.subr.bf16.mxu0 %v925
        %1009 = vmatpush1.bf16.msra.mxu0 %v924
        %1010 = vmatprep.subr.bf16.mxu0 %v927
        %1011 = vmatpush1.bf16.msra.mxu0 %v926
        %1012 = vmatprep.subr.bf16.mxu0 %v929
        %1013 = vmatpush1.bf16.msra.mxu0 %v928
        %1014 = vmatprep.subr.bf16.mxu0 %v931
        %1015 = vmatpush1.bf16.msra.mxu0 %v930
        %1016 = vmatprep.subr.bf16.mxu0 %v933
        %1017 = vmatpush1.bf16.msra.mxu0 %v932
        %1018 = vmatprep.subr.bf16.mxu0 %v935
        %1019 = vmatpush1.bf16.msra.mxu0 %v934
        %1020 = vmatprep.mubr.bf16.mxu0 %v778
        %1021 = vmatmul.mubr.bf16.gmra.mrb[0].mxu0 %v775
        %v1022 = vpop.f32.mrb[0].mxu0
        %v1023 = vadd.f32 0.0, %v1022
        %v1024 = vpop.f32.mrb[0].mxu0
        %v1025 = vadd.f32 0.0, %v1024
        %v1026 = vpop.f32.mrb[0].mxu0
        %v1027 = vadd.f32 0.0, %v1026
        %v1028 = vpop.f32.mrb[0].mxu0
        %v1029 = vadd.f32 0.0, %v1028
        %1030 = vdwg.mxu0
        %1031 = vmatprep.subr.bf16.mxu0 %v937
        %1032 = vmatpush1.bf16.msra.mxu0 %v936
        %1033 = vmatprep.subr.bf16.mxu0 %v939
        %1034 = vmatpush1.bf16.msra.mxu0 %v938
        %1035 = vmatprep.subr.bf16.mxu0 %v941
        %1036 = vmatpush1.bf16.msra.mxu0 %v940
        %1037 = vmatprep.subr.bf16.mxu0 %v943
        %1038 = vmatpush1.bf16.msra.mxu0 %v942
        %1039 = vmatprep.subr.bf16.mxu0 0
        %1040 = vmatpush1.bf16.msra.mxu0 0
        %1041 = vmatprep.subr.bf16.mxu0 0
        %1042 = vmatpush1.bf16.msra.mxu0 0
        %1043 = vmatprep.subr.bf16.mxu0 0
        %1044 = vmatpush1.bf16.msra.mxu0 0
        %1045 = vmatprep.subr.bf16.mxu0 0
        %1046 = vmatpush1.bf16.msra.mxu0 0
        %1047 = vmatprep.subr.bf16.mxu0 0
        %1048 = vmatpush1.bf16.msra.mxu0 0
        %1049 = vmatprep.subr.bf16.mxu0 0
        %1050 = vmatpush1.bf16.msra.mxu0 0
        %1051 = vmatprep.subr.bf16.mxu0 0
        %1052 = vmatpush1.bf16.msra.mxu0 0
        %1053 = vmatprep.subr.bf16.mxu0 0
        %1054 = vmatpush1.bf16.msra.mxu0 0
        %1055 = vmatprep.subr.bf16.mxu0 0
        %1056 = vmatpush1.bf16.msra.mxu0 0
        %1057 = vmatprep.subr.bf16.mxu0 0
        %1058 = vmatpush1.bf16.msra.mxu0 0
        %1059 = vmatprep.subr.bf16.mxu0 0
        %1060 = vmatpush1.bf16.msra.mxu0 0
        %1061 = vmatprep.subr.bf16.mxu0 0
        %1062 = vmatpush1.bf16.msra.mxu0 0
        %1063 = vmatprep.mubr.bf16.mxu0 0
        %1064 = vmatmul.mubr.bf16.gmra.mrb[0].mxu0 %v986
        %v1065 = vpop.f32.mrb[0].mxu0
        %v1066 = vadd.f32 %v1023, %v1065
        %v1067 = vpop.f32.mrb[0].mxu0
        %v1068 = vadd.f32 %v1025, %v1067
        %v1069 = vpop.f32.mrb[0].mxu0
        %v1070 = vadd.f32 %v1027, %v1069
        %v1071 = vpop.f32.mrb[0].mxu0
        %v1072 = vadd.f32 %v1029, %v1071
        %1073 = vdwg.mxu0
        %v1076 = vunpack.c.l.b16 %v662
        %v1077 = vunpack.c.h.b16 %v662
        %v1078 = vunpack.c.l.b16 %v663
        %v1079 = vpack.c.b16 %v760, %v1076
        %v1080 = vpack.c.b16 %v761, %v1077
        %v1081 = vpack.c.b16 %v762, %v1078
        %v1124 = vunpack.c.l.b16 %v666
        %v1125 = vunpack.c.h.b16 %v666
        %v1126 = vunpack.c.l.b16 %v667
        %v1127 = vunpack.c.h.b16 %v667
        %v1128 = vunpack.c.l.b16 %v668
        %v1129 = vunpack.c.h.b16 %v668
        %v1130 = vunpack.c.l.b16 %v669
        %v1131 = vunpack.c.h.b16 %v669
        %v1132 = vunpack.c.l.b16 %v670
        %v1133 = vunpack.c.h.b16 %v670
        %v1134 = vunpack.c.l.b16 %v671
        %v1135 = vunpack.c.h.b16 %v671
        %v1136 = vunpack.c.l.b16 %v672
        %v1137 = vunpack.c.h.b16 %v672
        %v1138 = vunpack.c.l.b16 %v673
        %v1139 = vunpack.c.h.b16 %v673
        %v1140 = vunpack.c.l.b16 %v674
        %v1141 = vunpack.c.h.b16 %v674
        %v1142 = vunpack.c.l.b16 %v675
        %v1143 = vunpack.c.h.b16 %v675
        %v1144 = vunpack.c.l.b16 %v676
        %v1145 = vunpack.c.h.b16 %v676
        %v1146 = vunpack.c.l.b16 %v677
        %v1147 = vunpack.c.h.b16 %v677
        %v1148 = vunpack.c.l.b16 %v678
        %v1149 = vunpack.c.h.b16 %v678
        %v1150 = vunpack.c.l.b16 %v679
        %v1151 = vunpack.c.h.b16 %v679
        %v1152 = vunpack.c.l.b16 %v680
        %v1153 = vunpack.c.h.b16 %v680
        %v1154 = vunpack.c.l.b16 %v681
        %v1155 = vunpack.c.h.b16 %v681
        %v1156 = vunpack.c.l.b16 %v682
        %v1157 = vunpack.c.h.b16 %v682
        %v1158 = vunpack.c.l.b16 %v683
        %v1159 = vunpack.c.h.b16 %v683
        %v1160 = vunpack.c.l.b16 %v684
        %v1161 = vunpack.c.h.b16 %v684
        %v1162 = vunpack.c.l.b16 %v685
        %v1163 = vunpack.c.h.b16 %v685
        %v1164 = vunpack.c.l.b16 %v686
        %v1165 = vunpack.c.h.b16 %v686
        %v1166 = vunpack.c.l.b16 %v687
        %v1167 = vunpack.c.h.b16 %v687
        %v1168 = vunpack.c.l.b16 %v688
        %v1169 = vunpack.c.h.b16 %v688
        %v1170 = vunpack.c.l.b16 %v689
        %v1171 = vunpack.c.h.b16 %v689
        %v1172 = vunpack.c.l.b16 %v690
        %v1173 = vunpack.c.h.b16 %v690
        %v1174 = vunpack.c.l.b16 %v691
        %v1175 = vunpack.c.h.b16 %v691
        %v1176 = vunpack.c.l.b16 %v692
        %v1177 = vunpack.c.h.b16 %v692
        %v1178 = vunpack.c.l.b16 %v693
        %v1179 = vunpack.c.h.b16 %v693
        %v1180 = vunpack.c.l.b16 %v694
        %v1181 = vunpack.c.h.b16 %v694
        %v1182 = vunpack.c.l.b16 %v695
        %v1183 = vunpack.c.h.b16 %v695
        %v1184 = vunpack.c.l.b16 %v696
        %v1185 = vunpack.c.h.b16 %v696
        %v1186 = vunpack.c.l.b16 %v697
        %v1187 = vunpack.c.h.b16 %v697
        %v1188 = vunpack.c.l.b16 %v698
        %v1189 = vunpack.c.h.b16 %v698
        %v1190 = vunpack.c.l.b16 %v699
        %v1191 = vunpack.c.h.b16 %v699
        %v1192 = vunpack.c.l.b16 %v700
        %v1193 = vunpack.c.h.b16 %v700
        %v1194 = vunpack.c.l.b16 %v701
        %v1195 = vunpack.c.h.b16 %v701
        %v1196 = vunpack.c.l.b16 %v702
        %v1197 = vunpack.c.h.b16 %v702
        %v1198 = vunpack.c.l.b16 %v703
        %v1199 = vunpack.c.h.b16 %v703
        %v1200 = vunpack.c.l.b16 %v704
        %v1201 = vunpack.c.h.b16 %v704
        %v1202 = vunpack.c.l.b16 %v705
        %v1203 = vunpack.c.h.b16 %v705
        %v1204 = vpack.c.b16 %v1126, %v1124
        %v1205 = vpack.c.b16 %v1127, %v1125
        %v1206 = vpack.c.b16 %v1130, %v1128
        %v1207 = vpack.c.b16 %v1131, %v1129
        %v1208 = vpack.c.b16 %v1134, %v1132
        %v1209 = vpack.c.b16 %v1135, %v1133
        %v1210 = vpack.c.b16 %v1138, %v1136
        %v1211 = vpack.c.b16 %v1139, %v1137
        %v1212 = vpack.c.b16 %v1142, %v1140
        %v1213 = vpack.c.b16 %v1143, %v1141
        %v1214 = vpack.c.b16 %v1146, %v1144
        %v1215 = vpack.c.b16 %v1147, %v1145
        %v1216 = vpack.c.b16 %v1150, %v1148
        %v1217 = vpack.c.b16 %v1151, %v1149
        %v1218 = vpack.c.b16 %v1154, %v1152
        %v1219 = vpack.c.b16 %v1155, %v1153
        %v1220 = vpack.c.b16 %v1158, %v1156
        %v1221 = vpack.c.b16 %v1159, %v1157
        %v1222 = vpack.c.b16 %v1162, %v1160
        %v1223 = vpack.c.b16 %v1163, %v1161
        %v1224 = vpack.c.b16 %v1166, %v1164
        %v1225 = vpack.c.b16 %v1167, %v1165
        %v1226 = vpack.c.b16 %v1170, %v1168
        %v1227 = vpack.c.b16 %v1171, %v1169
        %v1228 = vpack.c.b16 %v1174, %v1172
        %v1229 = vpack.c.b16 %v1175, %v1173
        %v1230 = vpack.c.b16 %v1178, %v1176
        %v1231 = vpack.c.b16 %v1179, %v1177
        %v1232 = vpack.c.b16 %v1182, %v1180
        %v1233 = vpack.c.b16 %v1183, %v1181
        %v1234 = vpack.c.b16 %v1186, %v1184
        %v1235 = vpack.c.b16 %v1187, %v1185
        %v1236 = vpack.c.b16 %v1190, %v1188
        %v1237 = vpack.c.b16 %v1191, %v1189
        %v1238 = vpack.c.b16 %v1194, %v1192
        %v1239 = vpack.c.b16 %v1195, %v1193
        %v1240 = vpack.c.b16 %v1198, %v1196
        %v1241 = vpack.c.b16 %v1199, %v1197
        %v1242 = vpack.c.b16 %v1202, %v1200
        %v1243 = vpack.c.b16 %v1203, %v1201
        %v1285 = vsel %vm984, %v1081, 0
        %1287 = vmatprep.subr.bf16.mxu0 %v1205
        %1288 = vmatpush1.bf16.msra.mxu0 %v1204
        %1289 = vmatprep.subr.bf16.mxu0 %v1207
        %1290 = vmatpush1.bf16.msra.mxu0 %v1206
        %1291 = vmatprep.subr.bf16.mxu0 %v1209
        %1292 = vmatpush1.bf16.msra.mxu0 %v1208
        %1293 = vmatprep.subr.bf16.mxu0 %v1211
        %1294 = vmatpush1.bf16.msra.mxu0 %v1210
        %1295 = vmatprep.subr.bf16.mxu0 %v1213
        %1296 = vmatpush1.bf16.msra.mxu0 %v1212
        %1297 = vmatprep.subr.bf16.mxu0 %v1215
        %1298 = vmatpush1.bf16.msra.mxu0 %v1214
        %1299 = vmatprep.subr.bf16.mxu0 %v1217
        %1300 = vmatpush1.bf16.msra.mxu0 %v1216
        %1301 = vmatprep.subr.bf16.mxu0 %v1219
        %1302 = vmatpush1.bf16.msra.mxu0 %v1218
        %1303 = vmatprep.subr.bf16.mxu0 %v1221
        %1304 = vmatpush1.bf16.msra.mxu0 %v1220
        %1305 = vmatprep.subr.bf16.mxu0 %v1223
        %1306 = vmatpush1.bf16.msra.mxu0 %v1222
        %1307 = vmatprep.subr.bf16.mxu0 %v1225
        %1308 = vmatpush1.bf16.msra.mxu0 %v1224
        %1309 = vmatprep.subr.bf16.mxu0 %v1227
        %1310 = vmatpush1.bf16.msra.mxu0 %v1226
        %1311 = vmatprep.subr.bf16.mxu0 %v1229
        %1312 = vmatpush1.bf16.msra.mxu0 %v1228
        %1313 = vmatprep.subr.bf16.mxu0 %v1231
        %1314 = vmatpush1.bf16.msra.mxu0 %v1230
        %1315 = vmatprep.subr.bf16.mxu0 %v1233
        %1316 = vmatpush1.bf16.msra.mxu0 %v1232
        %1317 = vmatprep.subr.bf16.mxu0 %v1235
        %1318 = vmatpush1.bf16.msra.mxu0 %v1234
        %1319 = vmatprep.mubr.bf16.mxu0 %v1080
        %1320 = vmatmul.mubr.bf16.gmra.mrb[0].mxu0 %v1079
        %v1321 = vpop.f32.mrb[0].mxu0
        %v1322 = vadd.f32 %v1066, %v1321
        %v1323 = vpop.f32.mrb[0].mxu0
        %v1324 = vadd.f32 %v1068, %v1323
        %v1325 = vpop.f32.mrb[0].mxu0
        %v1326 = vadd.f32 %v1070, %v1325
        %v1327 = vpop.f32.mrb[0].mxu0
        %v1328 = vadd.f32 %v1072, %v1327
        %1329 = vdwg.mxu0
        %1330 = vmatprep.subr.bf16.mxu0 %v1237
        %1331 = vmatpush1.bf16.msra.mxu0 %v1236
        %1332 = vmatprep.subr.bf16.mxu0 %v1239
        %1333 = vmatpush1.bf16.msra.mxu0 %v1238
        %1334 = vmatprep.subr.bf16.mxu0 %v1241
        %1335 = vmatpush1.bf16.msra.mxu0 %v1240
        %1336 = vmatprep.subr.bf16.mxu0 %v1243
        %1337 = vmatpush1.bf16.msra.mxu0 %v1242
        %1338 = vmatprep.subr.bf16.mxu0 0
        %1339 = vmatpush1.bf16.msra.mxu0 0
        %1340 = vmatprep.subr.bf16.mxu0 0
        %1341 = vmatpush1.bf16.msra.mxu0 0
        %1342 = vmatprep.subr.bf16.mxu0 0
        %1343 = vmatpush1.bf16.msra.mxu0 0
        %1344 = vmatprep.subr.bf16.mxu0 0
        %1345 = vmatpush1.bf16.msra.mxu0 0
        %1346 = vmatprep.subr.bf16.mxu0 0
        %1347 = vmatpush1.bf16.msra.mxu0 0
        %1348 = vmatprep.subr.bf16.mxu0 0
        %1349 = vmatpush1.bf16.msra.mxu0 0
        %1350 = vmatprep.subr.bf16.mxu0 0
        %1351 = vmatpush1.bf16.msra.mxu0 0
        %1352 = vmatprep.subr.bf16.mxu0 0
        %1353 = vmatpush1.bf16.msra.mxu0 0
        %1354 = vmatprep.subr.bf16.mxu0 0
        %1355 = vmatpush1.bf16.msra.mxu0 0
        %1356 = vmatprep.subr.bf16.mxu0 0
        %1357 = vmatpush1.bf16.msra.mxu0 0
        %1358 = vmatprep.subr.bf16.mxu0 0
        %1359 = vmatpush1.bf16.msra.mxu0 0
        %1360 = vmatprep.subr.bf16.mxu0 0
        %1361 = vmatpush1.bf16.msra.mxu0 0
        %1362 = vmatprep.mubr.bf16.mxu0 0
        %1363 = vmatmul.mubr.bf16.gmra.mrb[0].mxu0 %v1285
        %v1364 = vpop.f32.mrb[0].mxu0
        %v1365 = vadd.f32 %v1322, %v1364
        %v1366 = vpop.f32.mrb[0].mxu0
        %v1367 = vadd.f32 %v1324, %v1366
        %v1368 = vpop.f32.mrb[0].mxu0
        %v1369 = vadd.f32 %v1326, %v1368
        %v1370 = vpop.f32.mrb[0].mxu0
        %v1371 = vadd.f32 %v1328, %v1370
        %1372 = vdwg.mxu0
        %v1373 = vld [vmem:[#allocation2] sm:$0xcc]
        %v1374 = vld [vmem:[#allocation2 + $0x8] sm:$0xc]
        %v1375 = vld [vmem:[#allocation2 + $0x18] sm:$0x33]
        %v1376 = vld [vmem:[#allocation2 + $0x20] sm:$0x3]
        %s1377 = scalar_lea.vmem %s538, 640 [#allocation3]
        %v1378 = vld [vmem:[%s1377] sm:$0xff]
        %v1379 = vld [vmem:[%s1377 + $0x8] sm:$0xff]
        %v1380 = vld [vmem:[%s1377 + $0x10] sm:$0xff]
        %v1381 = vld [vmem:[%s1377 + $0x18] sm:$0xff]
        %v1382 = vld [vmem:[%s1377 + $0x20] sm:$0xff]
        %v1383 = vld [vmem:[%s1377 + $0x28] sm:$0xff]
        %v1384 = vld [vmem:[%s1377 + $0x30] sm:$0xff]
        %v1385 = vld [vmem:[%s1377 + $0x38] sm:$0xff]
        %v1386 = vld [vmem:[%s1377 + $0x40] sm:$0xff]
        %v1387 = vld [vmem:[%s1377 + $0x48] sm:$0xff]
        %v1388 = vld [vmem:[%s1377 + $0x50] sm:$0xff]
        %v1389 = vld [vmem:[%s1377 + $0x58] sm:$0xff]
        %v1390 = vld [vmem:[%s1377 + $0x60] sm:$0xff]
        %v1391 = vld [vmem:[%s1377 + $0x68] sm:$0xff]
        %v1392 = vld [vmem:[%s1377 + $0x70] sm:$0xff]
        %v1393 = vld [vmem:[%s1377 + $0x78] sm:$0xff]
        %v1394 = vld [vmem:[%s1377 + $0x80] sm:$0xff]
        %v1395 = vld [vmem:[%s1377 + $0x88] sm:$0xff]
        %v1396 = vld [vmem:[%s1377 + $0x90] sm:$0xff]
        %v1397 = vld [vmem:[%s1377 + $0x98] sm:$0xff]
        %v1398 = vld [vmem:[%s1377 + $0xa0] sm:$0xff]
        %v1399 = vld [vmem:[%s1377 + $0xa8] sm:$0xff]
        %v1400 = vld [vmem:[%s1377 + $0xb0] sm:$0xff]
        %v1401 = vld [vmem:[%s1377 + $0xb8] sm:$0xff]
        %v1402 = vld [vmem:[%s1377 + $0xc0] sm:$0xff]
        %v1403 = vld [vmem:[%s1377 + $0xc8] sm:$0xff]
        %v1404 = vld [vmem:[%s1377 + $0xd0] sm:$0xff]
        %v1405 = vld [vmem:[%s1377 + $0xd8] sm:$0xff]
        %v1406 = vld [vmem:[%s1377 + $0xe0] sm:$0xff]
        %v1407 = vld [vmem:[%s1377 + $0xe8] sm:$0xff]
        %v1408 = vld [vmem:[%s1377 + $0xf0] sm:$0xff]
        %v1409 = vld [vmem:[%s1377 + $0xf8] sm:$0xff]
        %v1410 = vld [vmem:[%s1377 + $0x100] sm:$0xff]
        %v1411 = vld [vmem:[%s1377 + $0x108] sm:$0xff]
        %v1412 = vld [vmem:[%s1377 + $0x110] sm:$0xff]
        %v1413 = vld [vmem:[%s1377 + $0x118] sm:$0xff]
        %v1414 = vld [vmem:[%s1377 + $0x120] sm:$0xff]
        %v1415 = vld [vmem:[%s1377 + $0x128] sm:$0xff]
        %v1416 = vld [vmem:[%s1377 + $0x130] sm:$0xff]
        %v1417 = vld [vmem:[%s1377 + $0x138] sm:$0xff]
        %v1422 = vunpack.c.l.b16 %v1373
        %v1423 = vunpack.c.h.b16 %v1373
        %v1424 = vunpack.c.l.b16 %v1374
        %v1425 = vunpack.c.l.b16 %v1375
        %v1426 = vunpack.c.h.b16 %v1375
        %v1427 = vunpack.c.l.b16 %v1376
        %v1428 = vpack.c.b16 %v760, %v1422
        %v1429 = vpack.c.b16 %v761, %v1423
        %v1430 = vpack.c.b16 %v762, %v1424
        %v1431 = vpack.c.b16 %v1425, %v1425
        %v1432 = vpack.c.b16 %v1426, %v1426
        %v1433 = vpack.c.b16 %v1427, %v1427
        %vm1434 = vcmask 1045504
        %v1435 = vrot.slane %v1428, 2
        %v1436 = vrot.slane %v1431, 2
        %v1437 = vsel %vm1434, %v1435, %v1436
        %v1438 = vrot.slane %v1429, 2
        %v1439 = vrot.slane %v1432, 2
        %v1440 = vsel %vm1434, %v1438, %v1439
        %v1441 = vrot.slane %v1430, 2
        %v1442 = vrot.slane %v1433, 2
        %v1443 = vsel %vm1434, %v1441, %v1442
        %v1486 = vunpack.c.l.b16 %v1378
        %v1487 = vunpack.c.h.b16 %v1378
        %v1488 = vunpack.c.l.b16 %v1379
        %v1489 = vunpack.c.h.b16 %v1379
        %v1490 = vunpack.c.l.b16 %v1380
        %v1491 = vunpack.c.h.b16 %v1380
        %v1492 = vunpack.c.l.b16 %v1381
        %v1493 = vunpack.c.h.b16 %v1381
        %v1494 = vunpack.c.l.b16 %v1382
        %v1495 = vunpack.c.h.b16 %v1382
        %v1496 = vunpack.c.l.b16 %v1383
        %v1497 = vunpack.c.h.b16 %v1383
        %v1498 = vunpack.c.l.b16 %v1384
        %v1499 = vunpack.c.h.b16 %v1384
        %v1500 = vunpack.c.l.b16 %v1385
        %v1501 = vunpack.c.h.b16 %v1385
        %v1502 = vunpack.c.l.b16 %v1386
        %v1503 = vunpack.c.h.b16 %v1386
        %v1504 = vunpack.c.l.b16 %v1387
        %v1505 = vunpack.c.h.b16 %v1387
        %v1506 = vunpack.c.l.b16 %v1388
        %v1507 = vunpack.c.h.b16 %v1388
        %v1508 = vunpack.c.l.b16 %v1389
        %v1509 = vunpack.c.h.b16 %v1389
        %v1510 = vunpack.c.l.b16 %v1390
        %v1511 = vunpack.c.h.b16 %v1390
        %v1512 = vunpack.c.l.b16 %v1391
        %v1513 = vunpack.c.h.b16 %v1391
        %v1514 = vunpack.c.l.b16 %v1392
        %v1515 = vunpack.c.h.b16 %v1392
        %v1516 = vunpack.c.l.b16 %v1393
        %v1517 = vunpack.c.h.b16 %v1393
        %v1518 = vunpack.c.l.b16 %v1394
        %v1519 = vunpack.c.h.b16 %v1394
        %v1520 = vunpack.c.l.b16 %v1395
        %v1521 = vunpack.c.h.b16 %v1395
        %v1522 = vunpack.c.l.b16 %v1396
        %v1523 = vunpack.c.h.b16 %v1396
        %v1524 = vunpack.c.l.b16 %v1397
        %v1525 = vunpack.c.h.b16 %v1397
        %v1526 = vunpack.c.l.b16 %v1398
        %v1527 = vunpack.c.h.b16 %v1398
        %v1528 = vunpack.c.l.b16 %v1399
        %v1529 = vunpack.c.h.b16 %v1399
        %v1530 = vunpack.c.l.b16 %v1400
        %v1531 = vunpack.c.h.b16 %v1400
        %v1532 = vunpack.c.l.b16 %v1401
        %v1533 = vunpack.c.h.b16 %v1401
        %v1534 = vunpack.c.l.b16 %v1402
        %v1535 = vunpack.c.h.b16 %v1402
        %v1536 = vunpack.c.l.b16 %v1403
        %v1537 = vunpack.c.h.b16 %v1403
        %v1538 = vunpack.c.l.b16 %v1404
        %v1539 = vunpack.c.h.b16 %v1404
        %v1540 = vunpack.c.l.b16 %v1405
        %v1541 = vunpack.c.h.b16 %v1405
        %v1542 = vunpack.c.l.b16 %v1406
        %v1543 = vunpack.c.h.b16 %v1406
        %v1544 = vunpack.c.l.b16 %v1407
        %v1545 = vunpack.c.h.b16 %v1407
        %v1546 = vunpack.c.l.b16 %v1408
        %v1547 = vunpack.c.h.b16 %v1408
        %v1548 = vunpack.c.l.b16 %v1409
        %v1549 = vunpack.c.h.b16 %v1409
        %v1550 = vunpack.c.l.b16 %v1410
        %v1551 = vunpack.c.h.b16 %v1410
        %v1552 = vunpack.c.l.b16 %v1411
        %v1553 = vunpack.c.h.b16 %v1411
        %v1554 = vunpack.c.l.b16 %v1412
        %v1555 = vunpack.c.h.b16 %v1412
        %v1556 = vunpack.c.l.b16 %v1413
        %v1557 = vunpack.c.h.b16 %v1413
        %v1558 = vunpack.c.l.b16 %v1414
        %v1559 = vunpack.c.h.b16 %v1414
        %v1560 = vunpack.c.l.b16 %v1415
        %v1561 = vunpack.c.h.b16 %v1415
        %v1562 = vunpack.c.l.b16 %v1416
        %v1563 = vunpack.c.h.b16 %v1416
        %v1564 = vunpack.c.l.b16 %v1417
        %v1565 = vunpack.c.h.b16 %v1417
        %v1566 = vpack.c.b16 %v1488, %v1486
        %v1567 = vpack.c.b16 %v1489, %v1487
        %v1568 = vpack.c.b16 %v1492, %v1490
        %v1569 = vpack.c.b16 %v1493, %v1491
        %v1570 = vpack.c.b16 %v1496, %v1494
        %v1571 = vpack.c.b16 %v1497, %v1495
        %v1572 = vpack.c.b16 %v1500, %v1498
        %v1573 = vpack.c.b16 %v1501, %v1499
        %v1574 = vpack.c.b16 %v1504, %v1502
        %v1575 = vpack.c.b16 %v1505, %v1503
        %v1576 = vpack.c.b16 %v1508, %v1506
        %v1577 = vpack.c.b16 %v1509, %v1507
        %v1578 = vpack.c.b16 %v1512, %v1510
        %v1579 = vpack.c.b16 %v1513, %v1511
        %v1580 = vpack.c.b16 %v1516, %v1514
        %v1581 = vpack.c.b16 %v1517, %v1515
        %v1582 = vpack.c.b16 %v1520, %v1518
        %v1583 = vpack.c.b16 %v1521, %v1519
        %v1584 = vpack.c.b16 %v1524, %v1522
        %v1585 = vpack.c.b16 %v1525, %v1523
        %v1586 = vpack.c.b16 %v1528, %v1526
        %v1587 = vpack.c.b16 %v1529, %v1527
        %v1588 = vpack.c.b16 %v1532, %v1530
        %v1589 = vpack.c.b16 %v1533, %v1531
        %v1590 = vpack.c.b16 %v1536, %v1534
        %v1591 = vpack.c.b16 %v1537, %v1535
        %v1592 = vpack.c.b16 %v1540, %v1538
        %v1593 = vpack.c.b16 %v1541, %v1539
        %v1594 = vpack.c.b16 %v1544, %v1542
        %v1595 = vpack.c.b16 %v1545, %v1543
        %v1596 = vpack.c.b16 %v1548, %v1546
        %v1597 = vpack.c.b16 %v1549, %v1547
        %v1598 = vpack.c.b16 %v1552, %v1550
        %v1599 = vpack.c.b16 %v1553, %v1551
        %v1600 = vpack.c.b16 %v1556, %v1554
        %v1601 = vpack.c.b16 %v1557, %v1555
        %v1602 = vpack.c.b16 %v1560, %v1558
        %v1603 = vpack.c.b16 %v1561, %v1559
        %v1604 = vpack.c.b16 %v1564, %v1562
        %v1605 = vpack.c.b16 %v1565, %v1563
        %v1647 = vsel %vm984, %v1443, 0
        %1649 = vmatprep.subr.bf16.mxu0 %v1567
        %1650 = vmatpush1.bf16.msra.mxu0 %v1566
        %1651 = vmatprep.subr.bf16.mxu0 %v1569
        %1652 = vmatpush1.bf16.msra.mxu0 %v1568
        %1653 = vmatprep.subr.bf16.mxu0 %v1571
        %1654 = vmatpush1.bf16.msra.mxu0 %v1570
        %1655 = vmatprep.subr.bf16.mxu0 %v1573
        %1656 = vmatpush1.bf16.msra.mxu0 %v1572
        %1657 = vmatprep.subr.bf16.mxu0 %v1575
        %1658 = vmatpush1.bf16.msra.mxu0 %v1574
        %1659 = vmatprep.subr.bf16.mxu0 %v1577
        %1660 = vmatpush1.bf16.msra.mxu0 %v1576
        %1661 = vmatprep.subr.bf16.mxu0 %v1579
        %1662 = vmatpush1.bf16.msra.mxu0 %v1578
        %1663 = vmatprep.subr.bf16.mxu0 %v1581
        %1664 = vmatpush1.bf16.msra.mxu0 %v1580
        %1665 = vmatprep.subr.bf16.mxu0 %v1583
        %1666 = vmatpush1.bf16.msra.mxu0 %v1582
        %1667 = vmatprep.subr.bf16.mxu0 %v1585
        %1668 = vmatpush1.bf16.msra.mxu0 %v1584
        %1669 = vmatprep.subr.bf16.mxu0 %v1587
        %1670 = vmatpush1.bf16.msra.mxu0 %v1586
        %1671 = vmatprep.subr.bf16.mxu0 %v1589
        %1672 = vmatpush1.bf16.msra.mxu0 %v1588
        %1673 = vmatprep.subr.bf16.mxu0 %v1591
        %1674 = vmatpush1.bf16.msra.mxu0 %v1590
        %1675 = vmatprep.subr.bf16.mxu0 %v1593
        %1676 = vmatpush1.bf16.msra.mxu0 %v1592
        %1677 = vmatprep.subr.bf16.mxu0 %v1595
        %1678 = vmatpush1.bf16.msra.mxu0 %v1594
        %1679 = vmatprep.subr.bf16.mxu0 %v1597
        %1680 = vmatpush1.bf16.msra.mxu0 %v1596
        %1681 = vmatprep.mubr.bf16.mxu0 %v1440
        %1682 = vmatmul.mubr.bf16.gmra.mrb[0].mxu0 %v1437
        %v1683 = vpop.f32.mrb[0].mxu0
        %v1684 = vadd.f32 0.0, %v1683
        %v1685 = vpop.f32.mrb[0].mxu0
        %v1686 = vadd.f32 0.0, %v1685
        %v1687 = vpop.f32.mrb[0].mxu0
        %v1688 = vadd.f32 0.0, %v1687
        %v1689 = vpop.f32.mrb[0].mxu0
        %v1690 = vadd.f32 0.0, %v1689
        %1691 = vdwg.mxu0
        %1692 = vmatprep.subr.bf16.mxu0 %v1599
        %1693 = vmatpush1.bf16.msra.mxu0 %v1598
        %1694 = vmatprep.subr.bf16.mxu0 %v1601
        %1695 = vmatpush1.bf16.msra.mxu0 %v1600
        %1696 = vmatprep.subr.bf16.mxu0 %v1603
        %1697 = vmatpush1.bf16.msra.mxu0 %v1602
        %1698 = vmatprep.subr.bf16.mxu0 %v1605
        %1699 = vmatpush1.bf16.msra.mxu0 %v1604
        %1700 = vmatprep.subr.bf16.mxu0 0
        %1701 = vmatpush1.bf16.msra.mxu0 0
        %1702 = vmatprep.subr.bf16.mxu0 0
        %1703 = vmatpush1.bf16.msra.mxu0 0
        %1704 = vmatprep.subr.bf16.mxu0 0
        %1705 = vmatpush1.bf16.msra.mxu0 0
        %1706 = vmatprep.subr.bf16.mxu0 0
        %1707 = vmatpush1.bf16.msra.mxu0 0
        %1708 = vmatprep.subr.bf16.mxu0 0
        %1709 = vmatpush1.bf16.msra.mxu0 0
        %1710 = vmatprep.subr.bf16.mxu0 0
        %1711 = vmatpush1.bf16.msra.mxu0 0
        %1712 = vmatprep.subr.bf16.mxu0 0
        %1713 = vmatpush1.bf16.msra.mxu0 0
        %1714 = vmatprep.subr.bf16.mxu0 0
        %1715 = vmatpush1.bf16.msra.mxu0 0
        %1716 = vmatprep.subr.bf16.mxu0 0
        %1717 = vmatpush1.bf16.msra.mxu0 0
        %1718 = vmatprep.subr.bf16.mxu0 0
        %1719 = vmatpush1.bf16.msra.mxu0 0
        %1720 = vmatprep.subr.bf16.mxu0 0
        %1721 = vmatpush1.bf16.msra.mxu0 0
        %1722 = vmatprep.subr.bf16.mxu0 0
        %1723 = vmatpush1.bf16.msra.mxu0 0
        %1724 = vmatprep.mubr.bf16.mxu0 0
        %1725 = vmatmul.mubr.bf16.gmra.mrb[0].mxu0 %v1647
        %v1726 = vpop.f32.mrb[0].mxu0
        %v1727 = vadd.f32 %v1684, %v1726
        %v1728 = vpop.f32.mrb[0].mxu0
        %v1729 = vadd.f32 %v1686, %v1728
        %v1730 = vpop.f32.mrb[0].mxu0
        %v1731 = vadd.f32 %v1688, %v1730
        %v1732 = vpop.f32.mrb[0].mxu0
        %v1733 = vadd.f32 %v1690, %v1732
        %1734 = vdwg.mxu0
        %v1735 = vadd.f32 %v1365, %v1727
        %v1736 = vadd.f32 %v1367, %v1729
        %v1737 = vadd.f32 %v1369, %v1731
        %v1738 = vadd.f32 %v1371, %v1733
        %v1739 = vld [vmem:[%s547] sm:$0x3]
        %v1741 = vlaneseq
        %v1742 = vshrl.u32 %v1741, 7
        %v1743 = vsub.s32 0, %v1742
        %v1744 = vrot.slane %v1739, %v1743
        %v1745 = vlaneseq
        %v1746 = vshrl.u32 %v1745, 7
        %v1747 = vsub.s32 1, %v1746
        %v1748 = vrot.slane %v1739, %v1747
        %v1751 = vadd.f32 %v1735, %v1744
        %v1752 = vadd.f32 %v1736, %v1748
        %v1753 = vadd.f32 %v1737, %v1744
        %v1754 = vadd.f32 %v1738, %v1748
        %v1755 = vmax.f32 %v1751, 0.0
        %v1756 = vmax.f32 %v1752, 0.0
        %v1757 = vmax.f32 %v1753, 0.0
        %v1758 = vmax.f32 %v1754, 0.0
        %v1759 = vpack.c.bf16 %v1757, %v1755
        %v1760 = vpack.c.bf16 %v1758, %v1756
        %v1763 = vunpack.c.l.b16 %v1759
        %v1764 = vunpack.c.l.b16 %v1760
        %v1765 = vunpack.c.h.b16 %v1759
        %v1766 = vunpack.c.h.b16 %v1760
        %v1767 = vpack.c.b16 %v1764, %v1763
        %v1768 = vpack.c.b16 %v1766, %v1765
        %vm1769 = vcmask 1040384
        %vm1770 = vcmask 1044484
        %vm1771 = vmor %vm1769, %vm1770
        %v1772 = vrot.slane %v1767, 7
        %v1773 = vrot.slane %v1772, 4
        %v1774 = vrot.slane %v1768, 7
        %v1775 = vsel %vm1771, %v1773, %v1774
        %v1776 = vrot.slane %v1774, 4
        %1780 = vst [vmem:[#allocation2] sm:$0xee] %v1772
        %1781 = vst [vmem:[#allocation2 + $0xc] sm:$0xff] %v1775
        %1782 = vst [vmem:[#allocation2 + $0x18] sm:$0x11] %v1776
        %p1783 = scmp.eq.s32.totalorder %s36, 4
        // Predicated region
        $region125: #{forward.1} parent=75 // pred_check
          %p1784 = pneg %p1783
        $region126: #{forward.1} parent=75 // pred_check_branch
          %1786 = sbr.rel (%p1784) target = $region128
        $region127: #{forward.1} parent=75 // pred_region
          %v1787 = vld [vmem:[#allocation2] sm:$0x22]
          %v1788 = vld [vmem:[#allocation2 + $0x8] sm:$0x2]
          %v1789 = vld [vmem:[%s4] sm:$0xf]
          %v1790 = vld [vmem:[%s4 + $0x4] sm:$0xf]
          %v1791 = vld [vmem:[%s4 + $0x8] sm:$0xf]
          %v1792 = vld [vmem:[%s4 + $0xc] sm:$0xf]
          %v1793 = vld [vmem:[%s4 + $0x10] sm:$0xf]
          %v1794 = vld [vmem:[%s4 + $0x14] sm:$0xf]
          %v1795 = vld [vmem:[%s4 + $0x18] sm:$0xf]
          %v1796 = vld [vmem:[%s4 + $0x1c] sm:$0xf]
          %v1797 = vld [vmem:[%s4 + $0x20] sm:$0xf]
          %v1798 = vld [vmem:[%s4 + $0x24] sm:$0xf]
          %v1799 = vld [vmem:[%s4 + $0x28] sm:$0xf]
          %v1800 = vld [vmem:[%s4 + $0x2c] sm:$0xf]
          %v1801 = vld [vmem:[%s4 + $0x30] sm:$0xf]
          %v1802 = vld [vmem:[%s4 + $0x34] sm:$0xf]
          %v1803 = vld [vmem:[%s4 + $0x38] sm:$0xf]
          %v1804 = vld [vmem:[%s4 + $0x3c] sm:$0xf]
          %v1805 = vld [vmem:[%s4 + $0x40] sm:$0xf]
          %v1806 = vld [vmem:[%s4 + $0x44] sm:$0xf]
          %v1807 = vld [vmem:[%s4 + $0x48] sm:$0xf]
          %v1808 = vld [vmem:[%s4 + $0x4c] sm:$0xf]
          %v1809 = vld [vmem:[%s4 + $0x50] sm:$0xf]
          %v1810 = vld [vmem:[%s4 + $0x54] sm:$0xf]
          %v1811 = vld [vmem:[%s4 + $0x58] sm:$0xf]
          %v1812 = vld [vmem:[%s4 + $0x5c] sm:$0xf]
          %v1813 = vld [vmem:[%s4 + $0x60] sm:$0xf]
          %v1814 = vld [vmem:[%s4 + $0x64] sm:$0xf]
          %v1815 = vld [vmem:[%s4 + $0x68] sm:$0xf]
          %v1816 = vld [vmem:[%s4 + $0x6c] sm:$0xf]
          %v1817 = vld [vmem:[%s4 + $0x70] sm:$0xf]
          %v1818 = vld [vmem:[%s4 + $0x74] sm:$0xf]
          %v1819 = vld [vmem:[%s4 + $0x78] sm:$0xf]
          %v1820 = vld [vmem:[%s4 + $0x7c] sm:$0xf]
          %v1821 = vld [vmem:[%s4 + $0x80] sm:$0xf]
          %v1822 = vld [vmem:[%s4 + $0x84] sm:$0xf]
          %v1823 = vld [vmem:[%s4 + $0x88] sm:$0xf]
          %v1824 = vld [vmem:[%s4 + $0x8c] sm:$0xf]
          %v1825 = vld [vmem:[%s4 + $0x90] sm:$0xf]
          %v1826 = vld [vmem:[%s4 + $0x94] sm:$0xf]
          %v1827 = vld [vmem:[%s4 + $0x98] sm:$0xf]
          %v1828 = vld [vmem:[%s4 + $0x9c] sm:$0xf]
          %v1829 = vld [vmem:[#allocation2] sm:$0x44]
          %v1830 = vld [vmem:[#allocation2 + $0x8] sm:$0x4]
          %s1831 = scalar_lea.vmem %s4, 160
          %v1832 = vld [vmem:[%s1831] sm:$0xf]
          %v1833 = vld [vmem:[%s1831 + $0x4] sm:$0xf]
          %v1834 = vld [vmem:[%s1831 + $0x8] sm:$0xf]
          %v1835 = vld [vmem:[%s1831 + $0xc] sm:$0xf]
          %v1836 = vld [vmem:[%s1831 + $0x10] sm:$0xf]
          %v1837 = vld [vmem:[%s1831 + $0x14] sm:$0xf]
          %v1838 = vld [vmem:[%s1831 + $0x18] sm:$0xf]
          %v1839 = vld [vmem:[%s1831 + $0x1c] sm:$0xf]
          %v1840 = vld [vmem:[%s1831 + $0x20] sm:$0xf]
          %v1841 = vld [vmem:[%s1831 + $0x24] sm:$0xf]
          %v1842 = vld [vmem:[%s1831 + $0x28] sm:$0xf]
          %v1843 = vld [vmem:[%s1831 + $0x2c] sm:$0xf]
          %v1844 = vld [vmem:[%s1831 + $0x30] sm:$0xf]
          %v1845 = vld [vmem:[%s1831 + $0x34] sm:$0xf]
          %v1846 = vld [vmem:[%s1831 + $0x38] sm:$0xf]
          %v1847 = vld [vmem:[%s1831 + $0x3c] sm:$0xf]
          %v1848 = vld [vmem:[%s1831 + $0x40] sm:$0xf]
          %v1849 = vld [vmem:[%s1831 + $0x44] sm:$0xf]
          %v1850 = vld [vmem:[%s1831 + $0x48] sm:$0xf]
          %v1851 = vld [vmem:[%s1831 + $0x4c] sm:$0xf]
          %v1852 = vld [vmem:[%s1831 + $0x50] sm:$0xf]
          %v1853 = vld [vmem:[%s1831 + $0x54] sm:$0xf]
          %v1854 = vld [vmem:[%s1831 + $0x58] sm:$0xf]
          %v1855 = vld [vmem:[%s1831 + $0x5c] sm:$0xf]
          %v1856 = vld [vmem:[%s1831 + $0x60] sm:$0xf]
          %v1857 = vld [vmem:[%s1831 + $0x64] sm:$0xf]
          %v1858 = vld [vmem:[%s1831 + $0x68] sm:$0xf]
          %v1859 = vld [vmem:[%s1831 + $0x6c] sm:$0xf]
          %v1860 = vld [vmem:[%s1831 + $0x70] sm:$0xf]
          %v1861 = vld [vmem:[%s1831 + $0x74] sm:$0xf]
          %v1862 = vld [vmem:[%s1831 + $0x78] sm:$0xf]
          %v1863 = vld [vmem:[%s1831 + $0x7c] sm:$0xf]
          %v1864 = vld [vmem:[%s1831 + $0x80] sm:$0xf]
          %v1865 = vld [vmem:[%s1831 + $0x84] sm:$0xf]
          %v1866 = vld [vmem:[%s1831 + $0x88] sm:$0xf]
          %v1867 = vld [vmem:[%s1831 + $0x8c] sm:$0xf]
          %v1868 = vld [vmem:[%s1831 + $0x90] sm:$0xf]
          %v1869 = vld [vmem:[%s1831 + $0x94] sm:$0xf]
          %v1870 = vld [vmem:[%s1831 + $0x98] sm:$0xf]
          %v1871 = vld [vmem:[%s1831 + $0x9c] sm:$0xf]
          %v1874 = vunpack.c.l.b16 %v1829
          %v1875 = vunpack.c.h.b16 %v1829
          %v1876 = vunpack.c.l.b16 %v1830
          %v1877 = vpack.c.b16 %v1874, %v1874
          %v1878 = vpack.c.b16 %v1875, %v1875
          %v1879 = vpack.c.b16 %v1876, %v1876
          %v1880 = vrot.slane %v1877, 2
          %v1881 = vrot.slane %v1878, 2
          %v1882 = vrot.slane %v1879, 2
          %v1925 = vunpack.c.l.b16 %v1832
          %v1926 = vunpack.c.l.b16 %v1833
          %v1927 = vunpack.c.l.b16 %v1834
          %v1928 = vunpack.c.l.b16 %v1835
          %v1929 = vunpack.c.l.b16 %v1836
          %v1930 = vunpack.c.l.b16 %v1837
          %v1931 = vunpack.c.l.b16 %v1838
          %v1932 = vunpack.c.l.b16 %v1839
          %v1933 = vunpack.c.l.b16 %v1840
          %v1934 = vunpack.c.l.b16 %v1841
          %v1935 = vunpack.c.l.b16 %v1842
          %v1936 = vunpack.c.l.b16 %v1843
          %v1937 = vunpack.c.l.b16 %v1844
          %v1938 = vunpack.c.l.b16 %v1845
          %v1939 = vunpack.c.l.b16 %v1846
          %v1940 = vunpack.c.l.b16 %v1847
          %v1941 = vunpack.c.l.b16 %v1848
          %v1942 = vunpack.c.l.b16 %v1849
          %v1943 = vunpack.c.l.b16 %v1850
          %v1944 = vunpack.c.l.b16 %v1851
          %v1945 = vunpack.c.l.b16 %v1852
          %v1946 = vunpack.c.l.b16 %v1853
          %v1947 = vunpack.c.l.b16 %v1854
          %v1948 = vunpack.c.l.b16 %v1855
          %v1949 = vunpack.c.l.b16 %v1856
          %v1950 = vunpack.c.l.b16 %v1857
          %v1951 = vunpack.c.l.b16 %v1858
          %v1952 = vunpack.c.l.b16 %v1859
          %v1953 = vunpack.c.l.b16 %v1860
          %v1954 = vunpack.c.l.b16 %v1861
          %v1955 = vunpack.c.l.b16 %v1862
          %v1956 = vunpack.c.l.b16 %v1863
          %v1957 = vunpack.c.l.b16 %v1864
          %v1958 = vunpack.c.l.b16 %v1865
          %v1959 = vunpack.c.l.b16 %v1866
          %v1960 = vunpack.c.l.b16 %v1867
          %v1961 = vunpack.c.l.b16 %v1868
          %v1962 = vunpack.c.l.b16 %v1869
          %v1963 = vunpack.c.l.b16 %v1870
          %v1964 = vunpack.c.l.b16 %v1871
          %v1965 = vpack.c.b16 %v1926, %v1925
          %v1966 = vpack.c.b16 %v1928, %v1927
          %v1967 = vpack.c.b16 %v1930, %v1929
          %v1968 = vpack.c.b16 %v1932, %v1931
          %v1969 = vpack.c.b16 %v1934, %v1933
          %v1970 = vpack.c.b16 %v1936, %v1935
          %v1971 = vpack.c.b16 %v1938, %v1937
          %v1972 = vpack.c.b16 %v1940, %v1939
          %v1973 = vpack.c.b16 %v1942, %v1941
          %v1974 = vpack.c.b16 %v1944, %v1943
          %v1975 = vpack.c.b16 %v1946, %v1945
          %v1976 = vpack.c.b16 %v1948, %v1947
          %v1977 = vpack.c.b16 %v1950, %v1949
          %v1978 = vpack.c.b16 %v1952, %v1951
          %v1979 = vpack.c.b16 %v1954, %v1953
          %v1980 = vpack.c.b16 %v1956, %v1955
          %v1981 = vpack.c.b16 %v1958, %v1957
          %v1982 = vpack.c.b16 %v1960, %v1959
          %v1983 = vpack.c.b16 %v1962, %v1961
          %v1984 = vpack.c.b16 %v1964, %v1963
          %v2006 = vsel %vm984, %v1882, 0
          %2008 = vmatprep.subr.bf16.mxu0 0
          %2009 = vmatpush1.bf16.msra.mxu0 %v1965
          %2010 = vmatprep.subr.bf16.mxu0 0
          %2011 = vmatpush1.bf16.msra.mxu0 %v1966
          %2012 = vmatprep.subr.bf16.mxu0 0
          %2013 = vmatpush1.bf16.msra.mxu0 %v1967
          %2014 = vmatprep.subr.bf16.mxu0 0
          %2015 = vmatpush1.bf16.msra.mxu0 %v1968
          %2016 = vmatprep.subr.bf16.mxu0 0
          %2017 = vmatpush1.bf16.msra.mxu0 %v1969
          %2018 = vmatprep.subr.bf16.mxu0 0
          %2019 = vmatpush1.bf16.msra.mxu0 %v1970
          %2020 = vmatprep.subr.bf16.mxu0 0
          %2021 = vmatpush1.bf16.msra.mxu0 %v1971
          %2022 = vmatprep.subr.bf16.mxu0 0
          %2023 = vmatpush1.bf16.msra.mxu0 %v1972
          %2024 = vmatprep.subr.bf16.mxu0 0
          %2025 = vmatpush1.bf16.msra.mxu0 %v1973
          %2026 = vmatprep.subr.bf16.mxu0 0
          %2027 = vmatpush1.bf16.msra.mxu0 %v1974
          %2028 = vmatprep.subr.bf16.mxu0 0
          %2029 = vmatpush1.bf16.msra.mxu0 %v1975
          %2030 = vmatprep.subr.bf16.mxu0 0
          %2031 = vmatpush1.bf16.msra.mxu0 %v1976
          %2032 = vmatprep.subr.bf16.mxu0 0
          %2033 = vmatpush1.bf16.msra.mxu0 %v1977
          %2034 = vmatprep.subr.bf16.mxu0 0
          %2035 = vmatpush1.bf16.msra.mxu0 %v1978
          %2036 = vmatprep.subr.bf16.mxu0 0
          %2037 = vmatpush1.bf16.msra.mxu0 %v1979
          %2038 = vmatprep.subr.bf16.mxu0 0
          %2039 = vmatpush1.bf16.msra.mxu0 %v1980
          %2040 = vmatprep.mubr.bf16.mxu0 %v1881
          %2041 = vmatmul.mubr.bf16.gmra.mrb[0].mxu0 %v1880
          %v2042 = vpop.f32.mrb[0].mxu0
          %v2043 = vadd.f32 0.0, %v2042
          %v2044 = vpop.f32.mrb[0].mxu0
          %v2045 = vpop.f32.mrb[0].mxu0
          %v2046 = vpop.f32.mrb[0].mxu0
          %2047 = vdwg.mxu0
          %2048 = vmatprep.subr.bf16.mxu0 0
          %2049 = vmatpush1.bf16.msra.mxu0 %v1981
          %2050 = vmatprep.subr.bf16.mxu0 0
          %2051 = vmatpush1.bf16.msra.mxu0 %v1982
          %2052 = vmatprep.subr.bf16.mxu0 0
          %2053 = vmatpush1.bf16.msra.mxu0 %v1983
          %2054 = vmatprep.subr.bf16.mxu0 0
          %2055 = vmatpush1.bf16.msra.mxu0 %v1984
          %2056 = vmatprep.subr.bf16.mxu0 0
          %2057 = vmatpush1.bf16.msra.mxu0 0
          %2058 = vmatprep.subr.bf16.mxu0 0
          %2059 = vmatpush1.bf16.msra.mxu0 0
          %2060 = vmatprep.subr.bf16.mxu0 0
          %2061 = vmatpush1.bf16.msra.mxu0 0
          %2062 = vmatprep.subr.bf16.mxu0 0
          %2063 = vmatpush1.bf16.msra.mxu0 0
          %2064 = vmatprep.subr.bf16.mxu0 0
          %2065 = vmatpush1.bf16.msra.mxu0 0
          %2066 = vmatprep.subr.bf16.mxu0 0
          %2067 = vmatpush1.bf16.msra.mxu0 0
          %2068 = vmatprep.subr.bf16.mxu0 0
          %2069 = vmatpush1.bf16.msra.mxu0 0
          %2070 = vmatprep.subr.bf16.mxu0 0
          %2071 = vmatpush1.bf16.msra.mxu0 0
          %2072 = vmatprep.subr.bf16.mxu0 0
          %2073 = vmatpush1.bf16.msra.mxu0 0
          %2074 = vmatprep.subr.bf16.mxu0 0
          %2075 = vmatpush1.bf16.msra.mxu0 0
          %2076 = vmatprep.subr.bf16.mxu0 0
          %2077 = vmatpush1.bf16.msra.mxu0 0
          %2078 = vmatprep.subr.bf16.mxu0 0
          %2079 = vmatpush1.bf16.msra.mxu0 0
          %2080 = vmatprep.mubr.bf16.mxu0 0
          %2081 = vmatmul.mubr.bf16.gmra.mrb[0].mxu0 %v2006
          %v2082 = vpop.f32.mrb[0].mxu0
          %v2083 = vadd.f32 %v2043, %v2082
          %v2084 = vpop.f32.mrb[0].mxu0
          %v2085 = vpop.f32.mrb[0].mxu0
          %v2086 = vpop.f32.mrb[0].mxu0
          %2087 = vdwg.mxu0
          %v2090 = vunpack.c.l.b16 %v1787
          %v2091 = vunpack.c.h.b16 %v1787
          %v2092 = vunpack.c.l.b16 %v1788
          %v2093 = vpack.c.b16 %v2090, %v2090
          %v2094 = vpack.c.b16 %v2091, %v2091
          %v2095 = vpack.c.b16 %v2092, %v2092
          %v2096 = vrot.slane %v2093, 1
          %v2097 = vrot.slane %v2094, 1
          %v2098 = vrot.slane %v2095, 1
          %v2141 = vunpack.c.l.b16 %v1789
          %v2142 = vunpack.c.l.b16 %v1790
          %v2143 = vunpack.c.l.b16 %v1791
          %v2144 = vunpack.c.l.b16 %v1792
          %v2145 = vunpack.c.l.b16 %v1793
          %v2146 = vunpack.c.l.b16 %v1794
          %v2147 = vunpack.c.l.b16 %v1795
          %v2148 = vunpack.c.l.b16 %v1796
          %v2149 = vunpack.c.l.b16 %v1797
          %v2150 = vunpack.c.l.b16 %v1798
          %v2151 = vunpack.c.l.b16 %v1799
          %v2152 = vunpack.c.l.b16 %v1800
          %v2153 = vunpack.c.l.b16 %v1801
          %v2154 = vunpack.c.l.b16 %v1802
          %v2155 = vunpack.c.l.b16 %v1803
          %v2156 = vunpack.c.l.b16 %v1804
          %v2157 = vunpack.c.l.b16 %v1805
          %v2158 = vunpack.c.l.b16 %v1806
          %v2159 = vunpack.c.l.b16 %v1807
          %v2160 = vunpack.c.l.b16 %v1808
          %v2161 = vunpack.c.l.b16 %v1809
          %v2162 = vunpack.c.l.b16 %v1810
          %v2163 = vunpack.c.l.b16 %v1811
          %v2164 = vunpack.c.l.b16 %v1812
          %v2165 = vunpack.c.l.b16 %v1813
          %v2166 = vunpack.c.l.b16 %v1814
          %v2167 = vunpack.c.l.b16 %v1815
          %v2168 = vunpack.c.l.b16 %v1816
          %v2169 = vunpack.c.l.b16 %v1817
          %v2170 = vunpack.c.l.b16 %v1818
          %v2171 = vunpack.c.l.b16 %v1819
          %v2172 = vunpack.c.l.b16 %v1820
          %v2173 = vunpack.c.l.b16 %v1821
          %v2174 = vunpack.c.l.b16 %v1822
          %v2175 = vunpack.c.l.b16 %v1823
          %v2176 = vunpack.c.l.b16 %v1824
          %v2177 = vunpack.c.l.b16 %v1825
          %v2178 = vunpack.c.l.b16 %v1826
          %v2179 = vunpack.c.l.b16 %v1827
          %v2180 = vunpack.c.l.b16 %v1828
          %v2181 = vpack.c.b16 %v2142, %v2141
          %v2182 = vpack.c.b16 %v2144, %v2143
          %v2183 = vpack.c.b16 %v2146, %v2145
          %v2184 = vpack.c.b16 %v2148, %v2147
          %v2185 = vpack.c.b16 %v2150, %v2149
          %v2186 = vpack.c.b16 %v2152, %v2151
          %v2187 = vpack.c.b16 %v2154, %v2153
          %v2188 = vpack.c.b16 %v2156, %v2155
          %v2189 = vpack.c.b16 %v2158, %v2157
          %v2190 = vpack.c.b16 %v2160, %v2159
          %v2191 = vpack.c.b16 %v2162, %v2161
          %v2192 = vpack.c.b16 %v2164, %v2163
          %v2193 = vpack.c.b16 %v2166, %v2165
          %v2194 = vpack.c.b16 %v2168, %v2167
          %v2195 = vpack.c.b16 %v2170, %v2169
          %v2196 = vpack.c.b16 %v2172, %v2171
          %v2197 = vpack.c.b16 %v2174, %v2173
          %v2198 = vpack.c.b16 %v2176, %v2175
          %v2199 = vpack.c.b16 %v2178, %v2177
          %v2200 = vpack.c.b16 %v2180, %v2179
          %v2222 = vsel %vm984, %v2098, 0
          %2224 = vmatprep.subr.bf16.mxu0 0
          %2225 = vmatpush1.bf16.msra.mxu0 %v2181
          %2226 = vmatprep.subr.bf16.mxu0 0
          %2227 = vmatpush1.bf16.msra.mxu0 %v2182
          %2228 = vmatprep.subr.bf16.mxu0 0
          %2229 = vmatpush1.bf16.msra.mxu0 %v2183
          %2230 = vmatprep.subr.bf16.mxu0 0
          %2231 = vmatpush1.bf16.msra.mxu0 %v2184
          %2232 = vmatprep.subr.bf16.mxu0 0
          %2233 = vmatpush1.bf16.msra.mxu0 %v2185
          %2234 = vmatprep.subr.bf16.mxu0 0
          %2235 = vmatpush1.bf16.msra.mxu0 %v2186
          %2236 = vmatprep.subr.bf16.mxu0 0
          %2237 = vmatpush1.bf16.msra.mxu0 %v2187
          %2238 = vmatprep.subr.bf16.mxu0 0
          %2239 = vmatpush1.bf16.msra.mxu0 %v2188
          %2240 = vmatprep.subr.bf16.mxu0 0
          %2241 = vmatpush1.bf16.msra.mxu0 %v2189
          %2242 = vmatprep.subr.bf16.mxu0 0
          %2243 = vmatpush1.bf16.msra.mxu0 %v2190
          %2244 = vmatprep.subr.bf16.mxu0 0
          %2245 = vmatpush1.bf16.msra.mxu0 %v2191
          %2246 = vmatprep.subr.bf16.mxu0 0
          %2247 = vmatpush1.bf16.msra.mxu0 %v2192
          %2248 = vmatprep.subr.bf16.mxu0 0
          %2249 = vmatpush1.bf16.msra.mxu0 %v2193
          %2250 = vmatprep.subr.bf16.mxu0 0
          %2251 = vmatpush1.bf16.msra.mxu0 %v2194
          %2252 = vmatprep.subr.bf16.mxu0 0
          %2253 = vmatpush1.bf16.msra.mxu0 %v2195
          %2254 = vmatprep.subr.bf16.mxu0 0
          %2255 = vmatpush1.bf16.msra.mxu0 %v2196
          %2256 = vmatprep.mubr.bf16.mxu0 %v2097
          %2257 = vmatmul.mubr.bf16.gmra.mrb[0].mxu0 %v2096
          %v2258 = vpop.f32.mrb[0].mxu0
          %v2259 = vadd.f32 %v2083, %v2258
          %v2260 = vpop.f32.mrb[0].mxu0
          %v2261 = vpop.f32.mrb[0].mxu0
          %v2262 = vpop.f32.mrb[0].mxu0
          %2263 = vdwg.mxu0
          %2264 = vmatprep.subr.bf16.mxu0 0
          %2265 = vmatpush1.bf16.msra.mxu0 %v2197
          %2266 = vmatprep.subr.bf16.mxu0 0
          %2267 = vmatpush1.bf16.msra.mxu0 %v2198
          %2268 = vmatprep.subr.bf16.mxu0 0
          %2269 = vmatpush1.bf16.msra.mxu0 %v2199
          %2270 = vmatprep.subr.bf16.mxu0 0
          %2271 = vmatpush1.bf16.msra.mxu0 %v2200
          %2272 = vmatprep.subr.bf16.mxu0 0
          %2273 = vmatpush1.bf16.msra.mxu0 0
          %2274 = vmatprep.subr.bf16.mxu0 0
          %2275 = vmatpush1.bf16.msra.mxu0 0
          %2276 = vmatprep.subr.bf16.mxu0 0
          %2277 = vmatpush1.bf16.msra.mxu0 0
          %2278 = vmatprep.subr.bf16.mxu0 0
          %2279 = vmatpush1.bf16.msra.mxu0 0
          %2280 = vmatprep.subr.bf16.mxu0 0
          %2281 = vmatpush1.bf16.msra.mxu0 0
          %2282 = vmatprep.subr.bf16.mxu0 0
          %2283 = vmatpush1.bf16.msra.mxu0 0
          %2284 = vmatprep.subr.bf16.mxu0 0
          %2285 = vmatpush1.bf16.msra.mxu0 0
          %2286 = vmatprep.subr.bf16.mxu0 0
          %2287 = vmatpush1.bf16.msra.mxu0 0
          %2288 = vmatprep.subr.bf16.mxu0 0
          %2289 = vmatpush1.bf16.msra.mxu0 0
          %2290 = vmatprep.subr.bf16.mxu0 0
          %2291 = vmatpush1.bf16.msra.mxu0 0
          %2292 = vmatprep.subr.bf16.mxu0 0
          %2293 = vmatpush1.bf16.msra.mxu0 0
          %2294 = vmatprep.subr.bf16.mxu0 0
          %2295 = vmatpush1.bf16.msra.mxu0 0
          %2296 = vmatprep.mubr.bf16.mxu0 0
          %2297 = vmatmul.mubr.bf16.gmra.mrb[0].mxu0 %v2222
          %v2298 = vpop.f32.mrb[0].mxu0
          %v2299 = vadd.f32 %v2259, %v2298
          %v2300 = vpop.f32.mrb[0].mxu0
          %v2301 = vpop.f32.mrb[0].mxu0
          %v2302 = vpop.f32.mrb[0].mxu0
          %2303 = vdwg.mxu0
          %v2304 = vld [vmem:[#allocation2] sm:$0x88]
          %v2305 = vld [vmem:[#allocation2 + $0x8] sm:$0x8]
          %s2306 = scalar_lea.vmem %s4, 320
          %v2307 = vld [vmem:[%s2306] sm:$0xf]
          %v2308 = vld [vmem:[%s2306 + $0x4] sm:$0xf]
          %v2309 = vld [vmem:[%s2306 + $0x8] sm:$0xf]
          %v2310 = vld [vmem:[%s2306 + $0xc] sm:$0xf]
          %v2311 = vld [vmem:[%s2306 + $0x10] sm:$0xf]
          %v2312 = vld [vmem:[%s2306 + $0x14] sm:$0xf]
          %v2313 = vld [vmem:[%s2306 + $0x18] sm:$0xf]
          %v2314 = vld [vmem:[%s2306 + $0x1c] sm:$0xf]
          %v2315 = vld [vmem:[%s2306 + $0x20] sm:$0xf]
          %v2316 = vld [vmem:[%s2306 + $0x24] sm:$0xf]
          %v2317 = vld [vmem:[%s2306 + $0x28] sm:$0xf]
          %v2318 = vld [vmem:[%s2306 + $0x2c] sm:$0xf]
          %v2319 = vld [vmem:[%s2306 + $0x30] sm:$0xf]
          %v2320 = vld [vmem:[%s2306 + $0x34] sm:$0xf]
          %v2321 = vld [vmem:[%s2306 + $0x38] sm:$0xf]
          %v2322 = vld [vmem:[%s2306 + $0x3c] sm:$0xf]
          %v2323 = vld [vmem:[%s2306 + $0x40] sm:$0xf]
          %v2324 = vld [vmem:[%s2306 + $0x44] sm:$0xf]
          %v2325 = vld [vmem:[%s2306 + $0x48] sm:$0xf]
          %v2326 = vld [vmem:[%s2306 + $0x4c] sm:$0xf]
          %v2327 = vld [vmem:[%s2306 + $0x50] sm:$0xf]
          %v2328 = vld [vmem:[%s2306 + $0x54] sm:$0xf]
          %v2329 = vld [vmem:[%s2306 + $0x58] sm:$0xf]
          %v2330 = vld [vmem:[%s2306 + $0x5c] sm:$0xf]
          %v2331 = vld [vmem:[%s2306 + $0x60] sm:$0xf]
          %v2332 = vld [vmem:[%s2306 + $0x64] sm:$0xf]
          %v2333 = vld [vmem:[%s2306 + $0x68] sm:$0xf]
          %v2334 = vld [vmem:[%s2306 + $0x6c] sm:$0xf]
          %v2335 = vld [vmem:[%s2306 + $0x70] sm:$0xf]
          %v2336 = vld [vmem:[%s2306 + $0x74] sm:$0xf]
          %v2337 = vld [vmem:[%s2306 + $0x78] sm:$0xf]
          %v2338 = vld [vmem:[%s2306 + $0x7c] sm:$0xf]
          %v2339 = vld [vmem:[%s2306 + $0x80] sm:$0xf]
          %v2340 = vld [vmem:[%s2306 + $0x84] sm:$0xf]
          %v2341 = vld [vmem:[%s2306 + $0x88] sm:$0xf]
          %v2342 = vld [vmem:[%s2306 + $0x8c] sm:$0xf]
          %v2343 = vld [vmem:[%s2306 + $0x90] sm:$0xf]
          %v2344 = vld [vmem:[%s2306 + $0x94] sm:$0xf]
          %v2345 = vld [vmem:[%s2306 + $0x98] sm:$0xf]
          %v2346 = vld [vmem:[%s2306 + $0x9c] sm:$0xf]
          %v2349 = vunpack.c.l.b16 %v2304
          %v2350 = vunpack.c.h.b16 %v2304
          %v2351 = vunpack.c.l.b16 %v2305
          %v2352 = vpack.c.b16 %v2349, %v2349
          %v2353 = vpack.c.b16 %v2350, %v2350
          %v2354 = vpack.c.b16 %v2351, %v2351
          %v2355 = vrot.slane %v2352, 3
          %v2356 = vrot.slane %v2353, 3
          %v2357 = vrot.slane %v2354, 3
          %v2400 = vunpack.c.l.b16 %v2307
          %v2401 = vunpack.c.l.b16 %v2308
          %v2402 = vunpack.c.l.b16 %v2309
          %v2403 = vunpack.c.l.b16 %v2310
          %v2404 = vunpack.c.l.b16 %v2311
          %v2405 = vunpack.c.l.b16 %v2312
          %v2406 = vunpack.c.l.b16 %v2313
          %v2407 = vunpack.c.l.b16 %v2314
          %v2408 = vunpack.c.l.b16 %v2315
          %v2409 = vunpack.c.l.b16 %v2316
          %v2410 = vunpack.c.l.b16 %v2317
          %v2411 = vunpack.c.l.b16 %v2318
          %v2412 = vunpack.c.l.b16 %v2319
          %v2413 = vunpack.c.l.b16 %v2320
          %v2414 = vunpack.c.l.b16 %v2321
          %v2415 = vunpack.c.l.b16 %v2322
          %v2416 = vunpack.c.l.b16 %v2323
          %v2417 = vunpack.c.l.b16 %v2324
          %v2418 = vunpack.c.l.b16 %v2325
          %v2419 = vunpack.c.l.b16 %v2326
          %v2420 = vunpack.c.l.b16 %v2327
          %v2421 = vunpack.c.l.b16 %v2328
          %v2422 = vunpack.c.l.b16 %v2329
          %v2423 = vunpack.c.l.b16 %v2330
          %v2424 = vunpack.c.l.b16 %v2331
          %v2425 = vunpack.c.l.b16 %v2332
          %v2426 = vunpack.c.l.b16 %v2333
          %v2427 = vunpack.c.l.b16 %v2334
          %v2428 = vunpack.c.l.b16 %v2335
          %v2429 = vunpack.c.l.b16 %v2336
          %v2430 = vunpack.c.l.b16 %v2337
          %v2431 = vunpack.c.l.b16 %v2338
          %v2432 = vunpack.c.l.b16 %v2339
          %v2433 = vunpack.c.l.b16 %v2340
          %v2434 = vunpack.c.l.b16 %v2341
          %v2435 = vunpack.c.l.b16 %v2342
          %v2436 = vunpack.c.l.b16 %v2343
          %v2437 = vunpack.c.l.b16 %v2344
          %v2438 = vunpack.c.l.b16 %v2345
          %v2439 = vunpack.c.l.b16 %v2346
          %v2440 = vpack.c.b16 %v2401, %v2400
          %v2441 = vpack.c.b16 %v2403, %v2402
          %v2442 = vpack.c.b16 %v2405, %v2404
          %v2443 = vpack.c.b16 %v2407, %v2406
          %v2444 = vpack.c.b16 %v2409, %v2408
          %v2445 = vpack.c.b16 %v2411, %v2410
          %v2446 = vpack.c.b16 %v2413, %v2412
          %v2447 = vpack.c.b16 %v2415, %v2414
          %v2448 = vpack.c.b16 %v2417, %v2416
          %v2449 = vpack.c.b16 %v2419, %v2418
          %v2450 = vpack.c.b16 %v2421, %v2420
          %v2451 = vpack.c.b16 %v2423, %v2422
          %v2452 = vpack.c.b16 %v2425, %v2424
          %v2453 = vpack.c.b16 %v2427, %v2426
          %v2454 = vpack.c.b16 %v2429, %v2428
          %v2455 = vpack.c.b16 %v2431, %v2430
          %v2456 = vpack.c.b16 %v2433, %v2432
          %v2457 = vpack.c.b16 %v2435, %v2434
          %v2458 = vpack.c.b16 %v2437, %v2436
          %v2459 = vpack.c.b16 %v2439, %v2438
          %v2481 = vsel %vm984, %v2357, 0
          %2483 = vmatprep.subr.bf16.mxu0 0
          %2484 = vmatpush1.bf16.msra.mxu0 %v2440
          %2485 = vmatprep.subr.bf16.mxu0 0
          %2486 = vmatpush1.bf16.msra.mxu0 %v2441
          %2487 = vmatprep.subr.bf16.mxu0 0
          %2488 = vmatpush1.bf16.msra.mxu0 %v2442
          %2489 = vmatprep.subr.bf16.mxu0 0
          %2490 = vmatpush1.bf16.msra.mxu0 %v2443
          %2491 = vmatprep.subr.bf16.mxu0 0
          %2492 = vmatpush1.bf16.msra.mxu0 %v2444
          %2493 = vmatprep.subr.bf16.mxu0 0
          %2494 = vmatpush1.bf16.msra.mxu0 %v2445
          %2495 = vmatprep.subr.bf16.mxu0 0
          %2496 = vmatpush1.bf16.msra.mxu0 %v2446
          %2497 = vmatprep.subr.bf16.mxu0 0
          %2498 = vmatpush1.bf16.msra.mxu0 %v2447
          %2499 = vmatprep.subr.bf16.mxu0 0
          %2500 = vmatpush1.bf16.msra.mxu0 %v2448
          %2501 = vmatprep.subr.bf16.mxu0 0
          %2502 = vmatpush1.bf16.msra.mxu0 %v2449
          %2503 = vmatprep.subr.bf16.mxu0 0
          %2504 = vmatpush1.bf16.msra.mxu0 %v2450
          %2505 = vmatprep.subr.bf16.mxu0 0
          %2506 = vmatpush1.bf16.msra.mxu0 %v2451
          %2507 = vmatprep.subr.bf16.mxu0 0
          %2508 = vmatpush1.bf16.msra.mxu0 %v2452
          %2509 = vmatprep.subr.bf16.mxu0 0
          %2510 = vmatpush1.bf16.msra.mxu0 %v2453
          %2511 = vmatprep.subr.bf16.mxu0 0
          %2512 = vmatpush1.bf16.msra.mxu0 %v2454
          %2513 = vmatprep.subr.bf16.mxu0 0
          %2514 = vmatpush1.bf16.msra.mxu0 %v2455
          %2515 = vmatprep.mubr.bf16.mxu0 %v2356
          %2516 = vmatmul.mubr.bf16.gmra.mrb[0].mxu0 %v2355
          %v2517 = vpop.f32.mrb[0].mxu0
          %v2518 = vadd.f32 0.0, %v2517
          %v2519 = vpop.f32.mrb[0].mxu0
          %v2520 = vpop.f32.mrb[0].mxu0
          %v2521 = vpop.f32.mrb[0].mxu0
          %2522 = vdwg.mxu0
          %2523 = vmatprep.subr.bf16.mxu0 0
          %2524 = vmatpush1.bf16.msra.mxu0 %v2456
          %2525 = vmatprep.subr.bf16.mxu0 0
          %2526 = vmatpush1.bf16.msra.mxu0 %v2457
          %2527 = vmatprep.subr.bf16.mxu0 0
          %2528 = vmatpush1.bf16.msra.mxu0 %v2458
          %2529 = vmatprep.subr.bf16.mxu0 0
          %2530 = vmatpush1.bf16.msra.mxu0 %v2459
          %2531 = vmatprep.subr.bf16.mxu0 0
          %2532 = vmatpush1.bf16.msra.mxu0 0
          %2533 = vmatprep.subr.bf16.mxu0 0
          %2534 = vmatpush1.bf16.msra.mxu0 0
          %2535 = vmatprep.subr.bf16.mxu0 0
          %2536 = vmatpush1.bf16.msra.mxu0 0
          %2537 = vmatprep.subr.bf16.mxu0 0
          %2538 = vmatpush1.bf16.msra.mxu0 0
          %2539 = vmatprep.subr.bf16.mxu0 0
          %2540 = vmatpush1.bf16.msra.mxu0 0
          %2541 = vmatprep.subr.bf16.mxu0 0
          %2542 = vmatpush1.bf16.msra.mxu0 0
          %2543 = vmatprep.subr.bf16.mxu0 0
          %2544 = vmatpush1.bf16.msra.mxu0 0
          %2545 = vmatprep.subr.bf16.mxu0 0
          %2546 = vmatpush1.bf16.msra.mxu0 0
          %2547 = vmatprep.subr.bf16.mxu0 0
          %2548 = vmatpush1.bf16.msra.mxu0 0
          %2549 = vmatprep.subr.bf16.mxu0 0
          %2550 = vmatpush1.bf16.msra.mxu0 0
          %2551 = vmatprep.subr.bf16.mxu0 0
          %2552 = vmatpush1.bf16.msra.mxu0 0
          %2553 = vmatprep.subr.bf16.mxu0 0
          %2554 = vmatpush1.bf16.msra.mxu0 0
          %2555 = vmatprep.mubr.bf16.mxu0 0
          %2556 = vmatmul.mubr.bf16.gmra.mrb[0].mxu0 %v2481
          %v2557 = vpop.f32.mrb[0].mxu0
          %v2558 = vadd.f32 %v2518, %v2557
          %v2559 = vpop.f32.mrb[0].mxu0
          %v2560 = vpop.f32.mrb[0].mxu0
          %v2561 = vpop.f32.mrb[0].mxu0
          %2562 = vdwg.mxu0
          %v2563 = vadd.f32 %v2299, %v2558
          %v2564 = vld [vmem:[#allocation2 + $0xc] sm:$0x11]
          %v2565 = vld [vmem:[#allocation2 + $0x14] sm:$0x1]
          %s2566 = scalar_lea.vmem %s4, 480
          %v2567 = vld [vmem:[%s2566] sm:$0xf]
          %v2568 = vld [vmem:[%s2566 + $0x4] sm:$0xf]
          %v2569 = vld [vmem:[%s2566 + $0x8] sm:$0xf]
          %v2570 = vld [vmem:[%s2566 + $0xc] sm:$0xf]
          %v2571 = vld [vmem:[%s2566 + $0x10] sm:$0xf]
          %v2572 = vld [vmem:[%s2566 + $0x14] sm:$0xf]
          %v2573 = vld [vmem:[%s2566 + $0x18] sm:$0xf]
          %v2574 = vld [vmem:[%s2566 + $0x1c] sm:$0xf]
          %v2575 = vld [vmem:[%s2566 + $0x20] sm:$0xf]
          %v2576 = vld [vmem:[%s2566 + $0x24] sm:$0xf]
          %v2577 = vld [vmem:[%s2566 + $0x28] sm:$0xf]
          %v2578 = vld [vmem:[%s2566 + $0x2c] sm:$0xf]
          %v2579 = vld [vmem:[%s2566 + $0x30] sm:$0xf]
          %v2580 = vld [vmem:[%s2566 + $0x34] sm:$0xf]
          %v2581 = vld [vmem:[%s2566 + $0x38] sm:$0xf]
          %v2582 = vld [vmem:[%s2566 + $0x3c] sm:$0xf]
          %v2583 = vld [vmem:[%s2566 + $0x40] sm:$0xf]
          %v2584 = vld [vmem:[%s2566 + $0x44] sm:$0xf]
          %v2585 = vld [vmem:[%s2566 + $0x48] sm:$0xf]
          %v2586 = vld [vmem:[%s2566 + $0x4c] sm:$0xf]
          %v2587 = vld [vmem:[%s2566 + $0x50] sm:$0xf]
          %v2588 = vld [vmem:[%s2566 + $0x54] sm:$0xf]
          %v2589 = vld [vmem:[%s2566 + $0x58] sm:$0xf]
          %v2590 = vld [vmem:[%s2566 + $0x5c] sm:$0xf]
          %v2591 = vld [vmem:[%s2566 + $0x60] sm:$0xf]
          %v2592 = vld [vmem:[%s2566 + $0x64] sm:$0xf]
          %v2593 = vld [vmem:[%s2566 + $0x68] sm:$0xf]
          %v2594 = vld [vmem:[%s2566 + $0x6c] sm:$0xf]
          %v2595 = vld [vmem:[%s2566 + $0x70] sm:$0xf]
          %v2596 = vld [vmem:[%s2566 + $0x74] sm:$0xf]
          %v2597 = vld [vmem:[%s2566 + $0x78] sm:$0xf]
          %v2598 = vld [vmem:[%s2566 + $0x7c] sm:$0xf]
          %v2599 = vld [vmem:[%s2566 + $0x80] sm:$0xf]
          %v2600 = vld [vmem:[%s2566 + $0x84] sm:$0xf]
          %v2601 = vld [vmem:[%s2566 + $0x88] sm:$0xf]
          %v2602 = vld [vmem:[%s2566 + $0x8c] sm:$0xf]
          %v2603 = vld [vmem:[%s2566 + $0x90] sm:$0xf]
          %v2604 = vld [vmem:[%s2566 + $0x94] sm:$0xf]
          %v2605 = vld [vmem:[%s2566 + $0x98] sm:$0xf]
          %v2606 = vld [vmem:[%s2566 + $0x9c] sm:$0xf]
          %v2609 = vunpack.c.l.b16 %v2564
          %v2610 = vunpack.c.h.b16 %v2564
          %v2611 = vunpack.c.l.b16 %v2565
          %v2612 = vpack.c.b16 %v2609, %v2609
          %v2613 = vpack.c.b16 %v2610, %v2610
          %v2614 = vpack.c.b16 %v2611, %v2611
          %v2657 = vunpack.c.l.b16 %v2567
          %v2658 = vunpack.c.l.b16 %v2568
          %v2659 = vunpack.c.l.b16 %v2569
          %v2660 = vunpack.c.l.b16 %v2570
          %v2661 = vunpack.c.l.b16 %v2571
          %v2662 = vunpack.c.l.b16 %v2572
          %v2663 = vunpack.c.l.b16 %v2573
          %v2664 = vunpack.c.l.b16 %v2574
          %v2665 = vunpack.c.l.b16 %v2575
          %v2666 = vunpack.c.l.b16 %v2576
          %v2667 = vunpack.c.l.b16 %v2577
          %v2668 = vunpack.c.l.b16 %v2578
          %v2669 = vunpack.c.l.b16 %v2579
          %v2670 = vunpack.c.l.b16 %v2580
          %v2671 = vunpack.c.l.b16 %v2581
          %v2672 = vunpack.c.l.b16 %v2582
          %v2673 = vunpack.c.l.b16 %v2583
          %v2674 = vunpack.c.l.b16 %v2584
          %v2675 = vunpack.c.l.b16 %v2585
          %v2676 = vunpack.c.l.b16 %v2586
          %v2677 = vunpack.c.l.b16 %v2587
          %v2678 = vunpack.c.l.b16 %v2588
          %v2679 = vunpack.c.l.b16 %v2589
          %v2680 = vunpack.c.l.b16 %v2590
          %v2681 = vunpack.c.l.b16 %v2591
          %v2682 = vunpack.c.l.b16 %v2592
          %v2683 = vunpack.c.l.b16 %v2593
          %v2684 = vunpack.c.l.b16 %v2594
          %v2685 = vunpack.c.l.b16 %v2595
          %v2686 = vunpack.c.l.b16 %v2596
          %v2687 = vunpack.c.l.b16 %v2597
          %v2688 = vunpack.c.l.b16 %v2598
          %v2689 = vunpack.c.l.b16 %v2599
          %v2690 = vunpack.c.l.b16 %v2600
          %v2691 = vunpack.c.l.b16 %v2601
          %v2692 = vunpack.c.l.b16 %v2602
          %v2693 = vunpack.c.l.b16 %v2603
          %v2694 = vunpack.c.l.b16 %v2604
          %v2695 = vunpack.c.l.b16 %v2605
          %v2696 = vunpack.c.l.b16 %v2606
          %v2697 = vpack.c.b16 %v2658, %v2657
          %v2698 = vpack.c.b16 %v2660, %v2659
          %v2699 = vpack.c.b16 %v2662, %v2661
          %v2700 = vpack.c.b16 %v2664, %v2663
          %v2701 = vpack.c.b16 %v2666, %v2665
          %v2702 = vpack.c.b16 %v2668, %v2667
          %v2703 = vpack.c.b16 %v2670, %v2669
          %v2704 = vpack.c.b16 %v2672, %v2671
          %v2705 = vpack.c.b16 %v2674, %v2673
          %v2706 = vpack.c.b16 %v2676, %v2675
          %v2707 = vpack.c.b16 %v2678, %v2677
          %v2708 = vpack.c.b16 %v2680, %v2679
          %v2709 = vpack.c.b16 %v2682, %v2681
          %v2710 = vpack.c.b16 %v2684, %v2683
          %v2711 = vpack.c.b16 %v2686, %v2685
          %v2712 = vpack.c.b16 %v2688, %v2687
          %v2713 = vpack.c.b16 %v2690, %v2689
          %v2714 = vpack.c.b16 %v2692, %v2691
          %v2715 = vpack.c.b16 %v2694, %v2693
          %v2716 = vpack.c.b16 %v2696, %v2695
          %v2738 = vsel %vm984, %v2614, 0
          %2740 = vmatprep.subr.bf16.mxu0 0
          %2741 = vmatpush1.bf16.msra.mxu0 %v2697
          %2742 = vmatprep.subr.bf16.mxu0 0
          %2743 = vmatpush1.bf16.msra.mxu0 %v2698
          %2744 = vmatprep.subr.bf16.mxu0 0
          %2745 = vmatpush1.bf16.msra.mxu0 %v2699
          %2746 = vmatprep.subr.bf16.mxu0 0
          %2747 = vmatpush1.bf16.msra.mxu0 %v2700
          %2748 = vmatprep.subr.bf16.mxu0 0
          %2749 = vmatpush1.bf16.msra.mxu0 %v2701
          %2750 = vmatprep.subr.bf16.mxu0 0
          %2751 = vmatpush1.bf16.msra.mxu0 %v2702
          %2752 = vmatprep.subr.bf16.mxu0 0
          %2753 = vmatpush1.bf16.msra.mxu0 %v2703
          %2754 = vmatprep.subr.bf16.mxu0 0
          %2755 = vmatpush1.bf16.msra.mxu0 %v2704
          %2756 = vmatprep.subr.bf16.mxu0 0
          %2757 = vmatpush1.bf16.msra.mxu0 %v2705
          %2758 = vmatprep.subr.bf16.mxu0 0
          %2759 = vmatpush1.bf16.msra.mxu0 %v2706
          %2760 = vmatprep.subr.bf16.mxu0 0
          %2761 = vmatpush1.bf16.msra.mxu0 %v2707
          %2762 = vmatprep.subr.bf16.mxu0 0
          %2763 = vmatpush1.bf16.msra.mxu0 %v2708
          %2764 = vmatprep.subr.bf16.mxu0 0
          %2765 = vmatpush1.bf16.msra.mxu0 %v2709
          %2766 = vmatprep.subr.bf16.mxu0 0
          %2767 = vmatpush1.bf16.msra.mxu0 %v2710
          %2768 = vmatprep.subr.bf16.mxu0 0
          %2769 = vmatpush1.bf16.msra.mxu0 %v2711
          %2770 = vmatprep.subr.bf16.mxu0 0
          %2771 = vmatpush1.bf16.msra.mxu0 %v2712
          %2772 = vmatprep.mubr.bf16.mxu0 %v2613
          %2773 = vmatmul.mubr.bf16.gmra.mrb[0].mxu0 %v2612
          %v2774 = vpop.f32.mrb[0].mxu0
          %v2775 = vadd.f32 0.0, %v2774
          %v2776 = vpop.f32.mrb[0].mxu0
          %v2777 = vpop.f32.mrb[0].mxu0
          %v2778 = vpop.f32.mrb[0].mxu0
          %2779 = vdwg.mxu0
          %2780 = vmatprep.subr.bf16.mxu0 0
          %2781 = vmatpush1.bf16.msra.mxu0 %v2713
          %2782 = vmatprep.subr.bf16.mxu0 0
          %2783 = vmatpush1.bf16.msra.mxu0 %v2714
          %2784 = vmatprep.subr.bf16.mxu0 0
          %2785 = vmatpush1.bf16.msra.mxu0 %v2715
          %2786 = vmatprep.subr.bf16.mxu0 0
          %2787 = vmatpush1.bf16.msra.mxu0 %v2716
          %2788 = vmatprep.subr.bf16.mxu0 0
          %2789 = vmatpush1.bf16.msra.mxu0 0
          %2790 = vmatprep.subr.bf16.mxu0 0
          %2791 = vmatpush1.bf16.msra.mxu0 0
          %2792 = vmatprep.subr.bf16.mxu0 0
          %2793 = vmatpush1.bf16.msra.mxu0 0
          %2794 = vmatprep.subr.bf16.mxu0 0
          %2795 = vmatpush1.bf16.msra.mxu0 0
          %2796 = vmatprep.subr.bf16.mxu0 0
          %2797 = vmatpush1.bf16.msra.mxu0 0
          %2798 = vmatprep.subr.bf16.mxu0 0
          %2799 = vmatpush1.bf16.msra.mxu0 0
          %2800 = vmatprep.subr.bf16.mxu0 0
          %2801 = vmatpush1.bf16.msra.mxu0 0
          %2802 = vmatprep.subr.bf16.mxu0 0
          %2803 = vmatpush1.bf16.msra.mxu0 0
          %2804 = vmatprep.subr.bf16.mxu0 0
          %2805 = vmatpush1.bf16.msra.mxu0 0
          %2806 = vmatprep.subr.bf16.mxu0 0
          %2807 = vmatpush1.bf16.msra.mxu0 0
          %2808 = vmatprep.subr.bf16.mxu0 0
          %2809 = vmatpush1.bf16.msra.mxu0 0
          %2810 = vmatprep.subr.bf16.mxu0 0
          %2811 = vmatpush1.bf16.msra.mxu0 0
          %2812 = vmatprep.mubr.bf16.mxu0 0
          %2813 = vmatmul.mubr.bf16.gmra.mrb[0].mxu0 %v2738
          %v2814 = vpop.f32.mrb[0].mxu0
          %v2815 = vadd.f32 %v2775, %v2814
          %v2816 = vpop.f32.mrb[0].mxu0
          %v2817 = vpop.f32.mrb[0].mxu0
          %v2818 = vpop.f32.mrb[0].mxu0
          %2819 = vdwg.mxu0
          %v2820 = vadd.f32 %v2563, %v2815
          %v2821 = vld [vmem:[#allocation2 + $0xc] sm:$0x22]
          %v2822 = vld [vmem:[#allocation2 + $0x14] sm:$0x2]
          %s2823 = scalar_lea.vmem %s4, 640
          %v2824 = vld [vmem:[%s2823] sm:$0xf]
          %v2825 = vld [vmem:[%s2823 + $0x4] sm:$0xf]
          %v2826 = vld [vmem:[%s2823 + $0x8] sm:$0xf]
          %v2827 = vld [vmem:[%s2823 + $0xc] sm:$0xf]
          %v2828 = vld [vmem:[%s2823 + $0x10] sm:$0xf]
          %v2829 = vld [vmem:[%s2823 + $0x14] sm:$0xf]
          %v2830 = vld [vmem:[%s2823 + $0x18] sm:$0xf]
          %v2831 = vld [vmem:[%s2823 + $0x1c] sm:$0xf]
          %v2832 = vld [vmem:[%s2823 + $0x20] sm:$0xf]
          %v2833 = vld [vmem:[%s2823 + $0x24] sm:$0xf]
          %v2834 = vld [vmem:[%s2823 + $0x28] sm:$0xf]
          %v2835 = vld [vmem:[%s2823 + $0x2c] sm:$0xf]
          %v2836 = vld [vmem:[%s2823 + $0x30] sm:$0xf]
          %v2837 = vld [vmem:[%s2823 + $0x34] sm:$0xf]
          %v2838 = vld [vmem:[%s2823 + $0x38] sm:$0xf]
          %v2839 = vld [vmem:[%s2823 + $0x3c] sm:$0xf]
          %v2840 = vld [vmem:[%s2823 + $0x40] sm:$0xf]
          %v2841 = vld [vmem:[%s2823 + $0x44] sm:$0xf]
          %v2842 = vld [vmem:[%s2823 + $0x48] sm:$0xf]
          %v2843 = vld [vmem:[%s2823 + $0x4c] sm:$0xf]
          %v2844 = vld [vmem:[%s2823 + $0x50] sm:$0xf]
          %v2845 = vld [vmem:[%s2823 + $0x54] sm:$0xf]
          %v2846 = vld [vmem:[%s2823 + $0x58] sm:$0xf]
          %v2847 = vld [vmem:[%s2823 + $0x5c] sm:$0xf]
          %v2848 = vld [vmem:[%s2823 + $0x60] sm:$0xf]
          %v2849 = vld [vmem:[%s2823 + $0x64] sm:$0xf]
          %v2850 = vld [vmem:[%s2823 + $0x68] sm:$0xf]
          %v2851 = vld [vmem:[%s2823 + $0x6c] sm:$0xf]
          %v2852 = vld [vmem:[%s2823 + $0x70] sm:$0xf]
          %v2853 = vld [vmem:[%s2823 + $0x74] sm:$0xf]
          %v2854 = vld [vmem:[%s2823 + $0x78] sm:$0xf]
          %v2855 = vld [vmem:[%s2823 + $0x7c] sm:$0xf]
          %v2856 = vld [vmem:[%s2823 + $0x80] sm:$0xf]
          %v2857 = vld [vmem:[%s2823 + $0x84] sm:$0xf]
          %v2858 = vld [vmem:[%s2823 + $0x88] sm:$0xf]
          %v2859 = vld [vmem:[%s2823 + $0x8c] sm:$0xf]
          %v2860 = vld [vmem:[%s2823 + $0x90] sm:$0xf]
          %v2861 = vld [vmem:[%s2823 + $0x94] sm:$0xf]
          %v2862 = vld [vmem:[%s2823 + $0x98] sm:$0xf]
          %v2863 = vld [vmem:[%s2823 + $0x9c] sm:$0xf]
          %v2866 = vunpack.c.l.b16 %v2821
          %v2867 = vunpack.c.h.b16 %v2821
          %v2868 = vunpack.c.l.b16 %v2822
          %v2869 = vpack.c.b16 %v2866, %v2866
          %v2870 = vpack.c.b16 %v2867, %v2867
          %v2871 = vpack.c.b16 %v2868, %v2868
          %v2872 = vrot.slane %v2869, 1
          %v2873 = vrot.slane %v2870, 1
          %v2874 = vrot.slane %v2871, 1
          %v2917 = vunpack.c.l.b16 %v2824
          %v2918 = vunpack.c.l.b16 %v2825
          %v2919 = vunpack.c.l.b16 %v2826
          %v2920 = vunpack.c.l.b16 %v2827
          %v2921 = vunpack.c.l.b16 %v2828
          %v2922 = vunpack.c.l.b16 %v2829
          %v2923 = vunpack.c.l.b16 %v2830
          %v2924 = vunpack.c.l.b16 %v2831
          %v2925 = vunpack.c.l.b16 %v2832
          %v2926 = vunpack.c.l.b16 %v2833
          %v2927 = vunpack.c.l.b16 %v2834
          %v2928 = vunpack.c.l.b16 %v2835
          %v2929 = vunpack.c.l.b16 %v2836
          %v2930 = vunpack.c.l.b16 %v2837
          %v2931 = vunpack.c.l.b16 %v2838
          %v2932 = vunpack.c.l.b16 %v2839
          %v2933 = vunpack.c.l.b16 %v2840
          %v2934 = vunpack.c.l.b16 %v2841
          %v2935 = vunpack.c.l.b16 %v2842
          %v2936 = vunpack.c.l.b16 %v2843
          %v2937 = vunpack.c.l.b16 %v2844
          %v2938 = vunpack.c.l.b16 %v2845
          %v2939 = vunpack.c.l.b16 %v2846
          %v2940 = vunpack.c.l.b16 %v2847
          %v2941 = vunpack.c.l.b16 %v2848
          %v2942 = vunpack.c.l.b16 %v2849
          %v2943 = vunpack.c.l.b16 %v2850
          %v2944 = vunpack.c.l.b16 %v2851
          %v2945 = vunpack.c.l.b16 %v2852
          %v2946 = vunpack.c.l.b16 %v2853
          %v2947 = vunpack.c.l.b16 %v2854
          %v2948 = vunpack.c.l.b16 %v2855
          %v2949 = vunpack.c.l.b16 %v2856
          %v2950 = vunpack.c.l.b16 %v2857
          %v2951 = vunpack.c.l.b16 %v2858
          %v2952 = vunpack.c.l.b16 %v2859
          %v2953 = vunpack.c.l.b16 %v2860
          %v2954 = vunpack.c.l.b16 %v2861
          %v2955 = vunpack.c.l.b16 %v2862
          %v2956 = vunpack.c.l.b16 %v2863
          %v2957 = vpack.c.b16 %v2918, %v2917
          %v2958 = vpack.c.b16 %v2920, %v2919
          %v2959 = vpack.c.b16 %v2922, %v2921
          %v2960 = vpack.c.b16 %v2924, %v2923
          %v2961 = vpack.c.b16 %v2926, %v2925
          %v2962 = vpack.c.b16 %v2928, %v2927
          %v2963 = vpack.c.b16 %v2930, %v2929
          %v2964 = vpack.c.b16 %v2932, %v2931
          %v2965 = vpack.c.b16 %v2934, %v2933
          %v2966 = vpack.c.b16 %v2936, %v2935
          %v2967 = vpack.c.b16 %v2938, %v2937
          %v2968 = vpack.c.b16 %v2940, %v2939
          %v2969 = vpack.c.b16 %v2942, %v2941
          %v2970 = vpack.c.b16 %v2944, %v2943
          %v2971 = vpack.c.b16 %v2946, %v2945
          %v2972 = vpack.c.b16 %v2948, %v2947
          %v2973 = vpack.c.b16 %v2950, %v2949
          %v2974 = vpack.c.b16 %v2952, %v2951
          %v2975 = vpack.c.b16 %v2954, %v2953
          %v2976 = vpack.c.b16 %v2956, %v2955
          %v2998 = vsel %vm984, %v2874, 0
          %3000 = vmatprep.subr.bf16.mxu0 0
          %3001 = vmatpush1.bf16.msra.mxu0 %v2957
          %3002 = vmatprep.subr.bf16.mxu0 0
          %3003 = vmatpush1.bf16.msra.mxu0 %v2958
          %3004 = vmatprep.subr.bf16.mxu0 0
          %3005 = vmatpush1.bf16.msra.mxu0 %v2959
          %3006 = vmatprep.subr.bf16.mxu0 0
          %3007 = vmatpush1.bf16.msra.mxu0 %v2960
          %3008 = vmatprep.subr.bf16.mxu0 0
          %3009 = vmatpush1.bf16.msra.mxu0 %v2961
          %3010 = vmatprep.subr.bf16.mxu0 0
          %3011 = vmatpush1.bf16.msra.mxu0 %v2962
          %3012 = vmatprep.subr.bf16.mxu0 0
          %3013 = vmatpush1.bf16.msra.mxu0 %v2963
          %3014 = vmatprep.subr.bf16.mxu0 0
          %3015 = vmatpush1.bf16.msra.mxu0 %v2964
          %3016 = vmatprep.subr.bf16.mxu0 0
          %3017 = vmatpush1.bf16.msra.mxu0 %v2965
          %3018 = vmatprep.subr.bf16.mxu0 0
          %3019 = vmatpush1.bf16.msra.mxu0 %v2966
          %3020 = vmatprep.subr.bf16.mxu0 0
          %3021 = vmatpush1.bf16.msra.mxu0 %v2967
          %3022 = vmatprep.subr.bf16.mxu0 0
          %3023 = vmatpush1.bf16.msra.mxu0 %v2968
          %3024 = vmatprep.subr.bf16.mxu0 0
          %3025 = vmatpush1.bf16.msra.mxu0 %v2969
          %3026 = vmatprep.subr.bf16.mxu0 0
          %3027 = vmatpush1.bf16.msra.mxu0 %v2970
          %3028 = vmatprep.subr.bf16.mxu0 0
          %3029 = vmatpush1.bf16.msra.mxu0 %v2971
          %3030 = vmatprep.subr.bf16.mxu0 0
          %3031 = vmatpush1.bf16.msra.mxu0 %v2972
          %3032 = vmatprep.mubr.bf16.mxu0 %v2873
          %3033 = vmatmul.mubr.bf16.gmra.mrb[0].mxu0 %v2872
          %v3034 = vpop.f32.mrb[0].mxu0
          %v3035 = vadd.f32 0.0, %v3034
          %v3036 = vpop.f32.mrb[0].mxu0
          %v3037 = vpop.f32.mrb[0].mxu0
          %v3038 = vpop.f32.mrb[0].mxu0
          %3039 = vdwg.mxu0
          %3040 = vmatprep.subr.bf16.mxu0 0
          %3041 = vmatpush1.bf16.msra.mxu0 %v2973
          %3042 = vmatprep.subr.bf16.mxu0 0
          %3043 = vmatpush1.bf16.msra.mxu0 %v2974
          %3044 = vmatprep.subr.bf16.mxu0 0
          %3045 = vmatpush1.bf16.msra.mxu0 %v2975
          %3046 = vmatprep.subr.bf16.mxu0 0
          %3047 = vmatpush1.bf16.msra.mxu0 %v2976
          %3048 = vmatprep.subr.bf16.mxu0 0
          %3049 = vmatpush1.bf16.msra.mxu0 0
          %3050 = vmatprep.subr.bf16.mxu0 0
          %3051 = vmatpush1.bf16.msra.mxu0 0
          %3052 = vmatprep.subr.bf16.mxu0 0
          %3053 = vmatpush1.bf16.msra.mxu0 0
          %3054 = vmatprep.subr.bf16.mxu0 0
          %3055 = vmatpush1.bf16.msra.mxu0 0
          %3056 = vmatprep.subr.bf16.mxu0 0
          %3057 = vmatpush1.bf16.msra.mxu0 0
          %3058 = vmatprep.subr.bf16.mxu0 0
          %3059 = vmatpush1.bf16.msra.mxu0 0
          %3060 = vmatprep.subr.bf16.mxu0 0
          %3061 = vmatpush1.bf16.msra.mxu0 0
          %3062 = vmatprep.subr.bf16.mxu0 0
          %3063 = vmatpush1.bf16.msra.mxu0 0
          %3064 = vmatprep.subr.bf16.mxu0 0
          %3065 = vmatpush1.bf16.msra.mxu0 0
          %3066 = vmatprep.subr.bf16.mxu0 0
          %3067 = vmatpush1.bf16.msra.mxu0 0
          %3068 = vmatprep.subr.bf16.mxu0 0
          %3069 = vmatpush1.bf16.msra.mxu0 0
          %3070 = vmatprep.subr.bf16.mxu0 0
          %3071 = vmatpush1.bf16.msra.mxu0 0
          %3072 = vmatprep.mubr.bf16.mxu0 0
          %3073 = vmatmul.mubr.bf16.gmra.mrb[0].mxu0 %v2998
          %v3074 = vpop.f32.mrb[0].mxu0
          %v3075 = vadd.f32 %v3035, %v3074
          %v3076 = vpop.f32.mrb[0].mxu0
          %v3077 = vpop.f32.mrb[0].mxu0
          %v3078 = vpop.f32.mrb[0].mxu0
          %3079 = vdwg.mxu0
          %v3080 = vadd.f32 %v2820, %v3075
          %v3081 = vld [vmem:[#allocation2 + $0xc] sm:$0x44]
          %v3082 = vld [vmem:[#allocation2 + $0x14] sm:$0x4]
          %s3083 = scalar_lea.vmem %s4, 800
          %v3084 = vld [vmem:[%s3083] sm:$0xf]
          %v3085 = vld [vmem:[%s3083 + $0x4] sm:$0xf]
          %v3086 = vld [vmem:[%s3083 + $0x8] sm:$0xf]
          %v3087 = vld [vmem:[%s3083 + $0xc] sm:$0xf]
          %v3088 = vld [vmem:[%s3083 + $0x10] sm:$0xf]
          %v3089 = vld [vmem:[%s3083 + $0x14] sm:$0xf]
          %v3090 = vld [vmem:[%s3083 + $0x18] sm:$0xf]
          %v3091 = vld [vmem:[%s3083 + $0x1c] sm:$0xf]
          %v3092 = vld [vmem:[%s3083 + $0x20] sm:$0xf]
          %v3093 = vld [vmem:[%s3083 + $0x24] sm:$0xf]
          %v3094 = vld [vmem:[%s3083 + $0x28] sm:$0xf]
          %v3095 = vld [vmem:[%s3083 + $0x2c] sm:$0xf]
          %v3096 = vld [vmem:[%s3083 + $0x30] sm:$0xf]
          %v3097 = vld [vmem:[%s3083 + $0x34] sm:$0xf]
          %v3098 = vld [vmem:[%s3083 + $0x38] sm:$0xf]
          %v3099 = vld [vmem:[%s3083 + $0x3c] sm:$0xf]
          %v3100 = vld [vmem:[%s3083 + $0x40] sm:$0xf]
          %v3101 = vld [vmem:[%s3083 + $0x44] sm:$0xf]
          %v3102 = vld [vmem:[%s3083 + $0x48] sm:$0xf]
          %v3103 = vld [vmem:[%s3083 + $0x4c] sm:$0xf]
          %v3104 = vld [vmem:[%s3083 + $0x50] sm:$0xf]
          %v3105 = vld [vmem:[%s3083 + $0x54] sm:$0xf]
          %v3106 = vld [vmem:[%s3083 + $0x58] sm:$0xf]
          %v3107 = vld [vmem:[%s3083 + $0x5c] sm:$0xf]
          %v3108 = vld [vmem:[%s3083 + $0x60] sm:$0xf]
          %v3109 = vld [vmem:[%s3083 + $0x64] sm:$0xf]
          %v3110 = vld [vmem:[%s3083 + $0x68] sm:$0xf]
          %v3111 = vld [vmem:[%s3083 + $0x6c] sm:$0xf]
          %v3112 = vld [vmem:[%s3083 + $0x70] sm:$0xf]
          %v3113 = vld [vmem:[%s3083 + $0x74] sm:$0xf]
          %v3114 = vld [vmem:[%s3083 + $0x78] sm:$0xf]
          %v3115 = vld [vmem:[%s3083 + $0x7c] sm:$0xf]
          %v3116 = vld [vmem:[%s3083 + $0x80] sm:$0xf]
          %v3117 = vld [vmem:[%s3083 + $0x84] sm:$0xf]
          %v3118 = vld [vmem:[%s3083 + $0x88] sm:$0xf]
          %v3119 = vld [vmem:[%s3083 + $0x8c] sm:$0xf]
          %v3120 = vld [vmem:[%s3083 + $0x90] sm:$0xf]
          %v3121 = vld [vmem:[%s3083 + $0x94] sm:$0xf]
          %v3122 = vld [vmem:[%s3083 + $0x98] sm:$0xf]
          %v3123 = vld [vmem:[%s3083 + $0x9c] sm:$0xf]
          %v3126 = vunpack.c.l.b16 %v3081
          %v3127 = vunpack.c.h.b16 %v3081
          %v3128 = vunpack.c.l.b16 %v3082
          %v3129 = vpack.c.b16 %v3126, %v3126
          %v3130 = vpack.c.b16 %v3127, %v3127
          %v3131 = vpack.c.b16 %v3128, %v3128
          %v3132 = vrot.slane %v3129, 2
          %v3133 = vrot.slane %v3130, 2
          %v3134 = vrot.slane %v3131, 2
          %v3177 = vunpack.c.l.b16 %v3084
          %v3178 = vunpack.c.l.b16 %v3085
          %v3179 = vunpack.c.l.b16 %v3086
          %v3180 = vunpack.c.l.b16 %v3087
          %v3181 = vunpack.c.l.b16 %v3088
          %v3182 = vunpack.c.l.b16 %v3089
          %v3183 = vunpack.c.l.b16 %v3090
          %v3184 = vunpack.c.l.b16 %v3091
          %v3185 = vunpack.c.l.b16 %v3092
          %v3186 = vunpack.c.l.b16 %v3093
          %v3187 = vunpack.c.l.b16 %v3094
          %v3188 = vunpack.c.l.b16 %v3095
          %v3189 = vunpack.c.l.b16 %v3096
          %v3190 = vunpack.c.l.b16 %v3097
          %v3191 = vunpack.c.l.b16 %v3098
          %v3192 = vunpack.c.l.b16 %v3099
          %v3193 = vunpack.c.l.b16 %v3100
          %v3194 = vunpack.c.l.b16 %v3101
          %v3195 = vunpack.c.l.b16 %v3102
          %v3196 = vunpack.c.l.b16 %v3103
          %v3197 = vunpack.c.l.b16 %v3104
          %v3198 = vunpack.c.l.b16 %v3105
          %v3199 = vunpack.c.l.b16 %v3106
          %v3200 = vunpack.c.l.b16 %v3107
          %v3201 = vunpack.c.l.b16 %v3108
          %v3202 = vunpack.c.l.b16 %v3109
          %v3203 = vunpack.c.l.b16 %v3110
          %v3204 = vunpack.c.l.b16 %v3111
          %v3205 = vunpack.c.l.b16 %v3112
          %v3206 = vunpack.c.l.b16 %v3113
          %v3207 = vunpack.c.l.b16 %v3114
          %v3208 = vunpack.c.l.b16 %v3115
          %v3209 = vunpack.c.l.b16 %v3116
          %v3210 = vunpack.c.l.b16 %v3117
          %v3211 = vunpack.c.l.b16 %v3118
          %v3212 = vunpack.c.l.b16 %v3119
          %v3213 = vunpack.c.l.b16 %v3120
          %v3214 = vunpack.c.l.b16 %v3121
          %v3215 = vunpack.c.l.b16 %v3122
          %v3216 = vunpack.c.l.b16 %v3123
          %v3217 = vpack.c.b16 %v3178, %v3177
          %v3218 = vpack.c.b16 %v3180, %v3179
          %v3219 = vpack.c.b16 %v3182, %v3181
          %v3220 = vpack.c.b16 %v3184, %v3183
          %v3221 = vpack.c.b16 %v3186, %v3185
          %v3222 = vpack.c.b16 %v3188, %v3187
          %v3223 = vpack.c.b16 %v3190, %v3189
          %v3224 = vpack.c.b16 %v3192, %v3191
          %v3225 = vpack.c.b16 %v3194, %v3193
          %v3226 = vpack.c.b16 %v3196, %v3195
          %v3227 = vpack.c.b16 %v3198, %v3197
          %v3228 = vpack.c.b16 %v3200, %v3199
          %v3229 = vpack.c.b16 %v3202, %v3201
          %v3230 = vpack.c.b16 %v3204, %v3203
          %v3231 = vpack.c.b16 %v3206, %v3205
          %v3232 = vpack.c.b16 %v3208, %v3207
          %v3233 = vpack.c.b16 %v3210, %v3209
          %v3234 = vpack.c.b16 %v3212, %v3211
          %v3235 = vpack.c.b16 %v3214, %v3213
          %v3236 = vpack.c.b16 %v3216, %v3215
          %v3258 = vsel %vm984, %v3134, 0
          %3260 = vmatprep.subr.bf16.mxu0 0
          %3261 = vmatpush1.bf16.msra.mxu0 %v3217
          %3262 = vmatprep.subr.bf16.mxu0 0
          %3263 = vmatpush1.bf16.msra.mxu0 %v3218
          %3264 = vmatprep.subr.bf16.mxu0 0
          %3265 = vmatpush1.bf16.msra.mxu0 %v3219
          %3266 = vmatprep.subr.bf16.mxu0 0
          %3267 = vmatpush1.bf16.msra.mxu0 %v3220
          %3268 = vmatprep.subr.bf16.mxu0 0
          %3269 = vmatpush1.bf16.msra.mxu0 %v3221
          %3270 = vmatprep.subr.bf16.mxu0 0
          %3271 = vmatpush1.bf16.msra.mxu0 %v3222
          %3272 = vmatprep.subr.bf16.mxu0 0
          %3273 = vmatpush1.bf16.msra.mxu0 %v3223
          %3274 = vmatprep.subr.bf16.mxu0 0
          %3275 = vmatpush1.bf16.msra.mxu0 %v3224
          %3276 = vmatprep.subr.bf16.mxu0 0
          %3277 = vmatpush1.bf16.msra.mxu0 %v3225
          %3278 = vmatprep.subr.bf16.mxu0 0
          %3279 = vmatpush1.bf16.msra.mxu0 %v3226
          %3280 = vmatprep.subr.bf16.mxu0 0
          %3281 = vmatpush1.bf16.msra.mxu0 %v3227
          %3282 = vmatprep.subr.bf16.mxu0 0
          %3283 = vmatpush1.bf16.msra.mxu0 %v3228
          %3284 = vmatprep.subr.bf16.mxu0 0
          %3285 = vmatpush1.bf16.msra.mxu0 %v3229
          %3286 = vmatprep.subr.bf16.mxu0 0
          %3287 = vmatpush1.bf16.msra.mxu0 %v3230
          %3288 = vmatprep.subr.bf16.mxu0 0
          %3289 = vmatpush1.bf16.msra.mxu0 %v3231
          %3290 = vmatprep.subr.bf16.mxu0 0
          %3291 = vmatpush1.bf16.msra.mxu0 %v3232
          %3292 = vmatprep.mubr.bf16.mxu0 %v3133
          %3293 = vmatmul.mubr.bf16.gmra.mrb[0].mxu0 %v3132
          %v3294 = vpop.f32.mrb[0].mxu0
          %v3295 = vadd.f32 0.0, %v3294
          %v3296 = vpop.f32.mrb[0].mxu0
          %v3297 = vpop.f32.mrb[0].mxu0
          %v3298 = vpop.f32.mrb[0].mxu0
          %3299 = vdwg.mxu0
          %3300 = vmatprep.subr.bf16.mxu0 0
          %3301 = vmatpush1.bf16.msra.mxu0 %v3233
          %3302 = vmatprep.subr.bf16.mxu0 0
          %3303 = vmatpush1.bf16.msra.mxu0 %v3234
          %3304 = vmatprep.subr.bf16.mxu0 0
          %3305 = vmatpush1.bf16.msra.mxu0 %v3235
          %3306 = vmatprep.subr.bf16.mxu0 0
          %3307 = vmatpush1.bf16.msra.mxu0 %v3236
          %3308 = vmatprep.subr.bf16.mxu0 0
          %3309 = vmatpush1.bf16.msra.mxu0 0
          %3310 = vmatprep.subr.bf16.mxu0 0
          %3311 = vmatpush1.bf16.msra.mxu0 0
          %3312 = vmatprep.subr.bf16.mxu0 0
          %3313 = vmatpush1.bf16.msra.mxu0 0
          %3314 = vmatprep.subr.bf16.mxu0 0
          %3315 = vmatpush1.bf16.msra.mxu0 0
          %3316 = vmatprep.subr.bf16.mxu0 0
          %3317 = vmatpush1.bf16.msra.mxu0 0
          %3318 = vmatprep.subr.bf16.mxu0 0
          %3319 = vmatpush1.bf16.msra.mxu0 0
          %3320 = vmatprep.subr.bf16.mxu0 0
          %3321 = vmatpush1.bf16.msra.mxu0 0
          %3322 = vmatprep.subr.bf16.mxu0 0
          %3323 = vmatpush1.bf16.msra.mxu0 0
          %3324 = vmatprep.subr.bf16.mxu0 0
          %3325 = vmatpush1.bf16.msra.mxu0 0
          %3326 = vmatprep.subr.bf16.mxu0 0
          %3327 = vmatpush1.bf16.msra.mxu0 0
          %3328 = vmatprep.subr.bf16.mxu0 0
          %3329 = vmatpush1.bf16.msra.mxu0 0
          %3330 = vmatprep.subr.bf16.mxu0 0
          %3331 = vmatpush1.bf16.msra.mxu0 0
          %3332 = vmatprep.mubr.bf16.mxu0 0
          %3333 = vmatmul.mubr.bf16.gmra.mrb[0].mxu0 %v3258
          %v3334 = vpop.f32.mrb[0].mxu0
          %v3335 = vadd.f32 %v3295, %v3334
          %v3336 = vpop.f32.mrb[0].mxu0
          %v3337 = vpop.f32.mrb[0].mxu0
          %v3338 = vpop.f32.mrb[0].mxu0
          %3339 = vdwg.mxu0
          %v3340 = vadd.f32 %v3080, %v3335
          %v3341 = vld [vmem:[#allocation2 + $0xc] sm:$0x88]
          %v3342 = vld [vmem:[#allocation2 + $0x14] sm:$0x8]
          %s3343 = scalar_lea.vmem %s4, 960
          %v3344 = vld [vmem:[%s3343] sm:$0xf]
          %v3345 = vld [vmem:[%s3343 + $0x4] sm:$0xf]
          %v3346 = vld [vmem:[%s3343 + $0x8] sm:$0xf]
          %v3347 = vld [vmem:[%s3343 + $0xc] sm:$0xf]
          %v3348 = vld [vmem:[%s3343 + $0x10] sm:$0xf]
          %v3349 = vld [vmem:[%s3343 + $0x14] sm:$0xf]
          %v3350 = vld [vmem:[%s3343 + $0x18] sm:$0xf]
          %v3351 = vld [vmem:[%s3343 + $0x1c] sm:$0xf]
          %v3352 = vld [vmem:[%s3343 + $0x20] sm:$0xf]
          %v3353 = vld [vmem:[%s3343 + $0x24] sm:$0xf]
          %v3354 = vld [vmem:[%s3343 + $0x28] sm:$0xf]
          %v3355 = vld [vmem:[%s3343 + $0x2c] sm:$0xf]
          %v3356 = vld [vmem:[%s3343 + $0x30] sm:$0xf]
          %v3357 = vld [vmem:[%s3343 + $0x34] sm:$0xf]
          %v3358 = vld [vmem:[%s3343 + $0x38] sm:$0xf]
          %v3359 = vld [vmem:[%s3343 + $0x3c] sm:$0xf]
          %v3360 = vld [vmem:[%s3343 + $0x40] sm:$0xf]
          %v3361 = vld [vmem:[%s3343 + $0x44] sm:$0xf]
          %v3362 = vld [vmem:[%s3343 + $0x48] sm:$0xf]
          %v3363 = vld [vmem:[%s3343 + $0x4c] sm:$0xf]
          %v3364 = vld [vmem:[%s3343 + $0x50] sm:$0xf]
          %v3365 = vld [vmem:[%s3343 + $0x54] sm:$0xf]
          %v3366 = vld [vmem:[%s3343 + $0x58] sm:$0xf]
          %v3367 = vld [vmem:[%s3343 + $0x5c] sm:$0xf]
          %v3368 = vld [vmem:[%s3343 + $0x60] sm:$0xf]
          %v3369 = vld [vmem:[%s3343 + $0x64] sm:$0xf]
          %v3370 = vld [vmem:[%s3343 + $0x68] sm:$0xf]
          %v3371 = vld [vmem:[%s3343 + $0x6c] sm:$0xf]
          %v3372 = vld [vmem:[%s3343 + $0x70] sm:$0xf]
          %v3373 = vld [vmem:[%s3343 + $0x74] sm:$0xf]
          %v3374 = vld [vmem:[%s3343 + $0x78] sm:$0xf]
          %v3375 = vld [vmem:[%s3343 + $0x7c] sm:$0xf]
          %v3376 = vld [vmem:[%s3343 + $0x80] sm:$0xf]
          %v3377 = vld [vmem:[%s3343 + $0x84] sm:$0xf]
          %v3378 = vld [vmem:[%s3343 + $0x88] sm:$0xf]
          %v3379 = vld [vmem:[%s3343 + $0x8c] sm:$0xf]
          %v3380 = vld [vmem:[%s3343 + $0x90] sm:$0xf]
          %v3381 = vld [vmem:[%s3343 + $0x94] sm:$0xf]
          %v3382 = vld [vmem:[%s3343 + $0x98] sm:$0xf]
          %v3383 = vld [vmem:[%s3343 + $0x9c] sm:$0xf]
          %v3386 = vunpack.c.l.b16 %v3341
          %v3387 = vunpack.c.h.b16 %v3341
          %v3388 = vunpack.c.l.b16 %v3342
          %v3389 = vpack.c.b16 %v3386, %v3386
          %v3390 = vpack.c.b16 %v3387, %v3387
          %v3391 = vpack.c.b16 %v3388, %v3388
          %v3392 = vrot.slane %v3389, 3
          %v3393 = vrot.slane %v3390, 3
          %v3394 = vrot.slane %v3391, 3
          %v3437 = vunpack.c.l.b16 %v3344
          %v3438 = vunpack.c.l.b16 %v3345
          %v3439 = vunpack.c.l.b16 %v3346
          %v3440 = vunpack.c.l.b16 %v3347
          %v3441 = vunpack.c.l.b16 %v3348
          %v3442 = vunpack.c.l.b16 %v3349
          %v3443 = vunpack.c.l.b16 %v3350
          %v3444 = vunpack.c.l.b16 %v3351
          %v3445 = vunpack.c.l.b16 %v3352
          %v3446 = vunpack.c.l.b16 %v3353
          %v3447 = vunpack.c.l.b16 %v3354
          %v3448 = vunpack.c.l.b16 %v3355
          %v3449 = vunpack.c.l.b16 %v3356
          %v3450 = vunpack.c.l.b16 %v3357
          %v3451 = vunpack.c.l.b16 %v3358
          %v3452 = vunpack.c.l.b16 %v3359
          %v3453 = vunpack.c.l.b16 %v3360
          %v3454 = vunpack.c.l.b16 %v3361
          %v3455 = vunpack.c.l.b16 %v3362
          %v3456 = vunpack.c.l.b16 %v3363
          %v3457 = vunpack.c.l.b16 %v3364
          %v3458 = vunpack.c.l.b16 %v3365
          %v3459 = vunpack.c.l.b16 %v3366
          %v3460 = vunpack.c.l.b16 %v3367
          %v3461 = vunpack.c.l.b16 %v3368
          %v3462 = vunpack.c.l.b16 %v3369
          %v3463 = vunpack.c.l.b16 %v3370
          %v3464 = vunpack.c.l.b16 %v3371
          %v3465 = vunpack.c.l.b16 %v3372
          %v3466 = vunpack.c.l.b16 %v3373
          %v3467 = vunpack.c.l.b16 %v3374
          %v3468 = vunpack.c.l.b16 %v3375
          %v3469 = vunpack.c.l.b16 %v3376
          %v3470 = vunpack.c.l.b16 %v3377
          %v3471 = vunpack.c.l.b16 %v3378
          %v3472 = vunpack.c.l.b16 %v3379
          %v3473 = vunpack.c.l.b16 %v3380
          %v3474 = vunpack.c.l.b16 %v3381
          %v3475 = vunpack.c.l.b16 %v3382
          %v3476 = vunpack.c.l.b16 %v3383
          %v3477 = vpack.c.b16 %v3438, %v3437
          %v3478 = vpack.c.b16 %v3440, %v3439
          %v3479 = vpack.c.b16 %v3442, %v3441
          %v3480 = vpack.c.b16 %v3444, %v3443
          %v3481 = vpack.c.b16 %v3446, %v3445
          %v3482 = vpack.c.b16 %v3448, %v3447
          %v3483 = vpack.c.b16 %v3450, %v3449
          %v3484 = vpack.c.b16 %v3452, %v3451
          %v3485 = vpack.c.b16 %v3454, %v3453
          %v3486 = vpack.c.b16 %v3456, %v3455
          %v3487 = vpack.c.b16 %v3458, %v3457
          %v3488 = vpack.c.b16 %v3460, %v3459
          %v3489 = vpack.c.b16 %v3462, %v3461
          %v3490 = vpack.c.b16 %v3464, %v3463
          %v3491 = vpack.c.b16 %v3466, %v3465
          %v3492 = vpack.c.b16 %v3468, %v3467
          %v3493 = vpack.c.b16 %v3470, %v3469
          %v3494 = vpack.c.b16 %v3472, %v3471
          %v3495 = vpack.c.b16 %v3474, %v3473
          %v3496 = vpack.c.b16 %v3476, %v3475
          %v3518 = vsel %vm984, %v3394, 0
          %3520 = vmatprep.subr.bf16.mxu0 0
          %3521 = vmatpush1.bf16.msra.mxu0 %v3477
          %3522 = vmatprep.subr.bf16.mxu0 0
          %3523 = vmatpush1.bf16.msra.mxu0 %v3478
          %3524 = vmatprep.subr.bf16.mxu0 0
          %3525 = vmatpush1.bf16.msra.mxu0 %v3479
          %3526 = vmatprep.subr.bf16.mxu0 0
          %3527 = vmatpush1.bf16.msra.mxu0 %v3480
          %3528 = vmatprep.subr.bf16.mxu0 0
          %3529 = vmatpush1.bf16.msra.mxu0 %v3481
          %3530 = vmatprep.subr.bf16.mxu0 0
          %3531 = vmatpush1.bf16.msra.mxu0 %v3482
          %3532 = vmatprep.subr.bf16.mxu0 0
          %3533 = vmatpush1.bf16.msra.mxu0 %v3483
          %3534 = vmatprep.subr.bf16.mxu0 0
          %3535 = vmatpush1.bf16.msra.mxu0 %v3484
          %3536 = vmatprep.subr.bf16.mxu0 0
          %3537 = vmatpush1.bf16.msra.mxu0 %v3485
          %3538 = vmatprep.subr.bf16.mxu0 0
          %3539 = vmatpush1.bf16.msra.mxu0 %v3486
          %3540 = vmatprep.subr.bf16.mxu0 0
          %3541 = vmatpush1.bf16.msra.mxu0 %v3487
          %3542 = vmatprep.subr.bf16.mxu0 0
          %3543 = vmatpush1.bf16.msra.mxu0 %v3488
          %3544 = vmatprep.subr.bf16.mxu0 0
          %3545 = vmatpush1.bf16.msra.mxu0 %v3489
          %3546 = vmatprep.subr.bf16.mxu0 0
          %3547 = vmatpush1.bf16.msra.mxu0 %v3490
          %3548 = vmatprep.subr.bf16.mxu0 0
          %3549 = vmatpush1.bf16.msra.mxu0 %v3491
          %3550 = vmatprep.subr.bf16.mxu0 0
          %3551 = vmatpush1.bf16.msra.mxu0 %v3492
          %3552 = vmatprep.mubr.bf16.mxu0 %v3393
          %3553 = vmatmul.mubr.bf16.gmra.mrb[0].mxu0 %v3392
          %v3554 = vpop.f32.mrb[0].mxu0
          %v3555 = vadd.f32 0.0, %v3554
          %v3556 = vpop.f32.mrb[0].mxu0
          %v3557 = vpop.f32.mrb[0].mxu0
          %v3558 = vpop.f32.mrb[0].mxu0
          %3559 = vdwg.mxu0
          %3560 = vmatprep.subr.bf16.mxu0 0
          %3561 = vmatpush1.bf16.msra.mxu0 %v3493
          %3562 = vmatprep.subr.bf16.mxu0 0
          %3563 = vmatpush1.bf16.msra.mxu0 %v3494
          %3564 = vmatprep.subr.bf16.mxu0 0
          %3565 = vmatpush1.bf16.msra.mxu0 %v3495
          %3566 = vmatprep.subr.bf16.mxu0 0
          %3567 = vmatpush1.bf16.msra.mxu0 %v3496
          %3568 = vmatprep.subr.bf16.mxu0 0
          %3569 = vmatpush1.bf16.msra.mxu0 0
          %3570 = vmatprep.subr.bf16.mxu0 0
          %3571 = vmatpush1.bf16.msra.mxu0 0
          %3572 = vmatprep.subr.bf16.mxu0 0
          %3573 = vmatpush1.bf16.msra.mxu0 0
          %3574 = vmatprep.subr.bf16.mxu0 0
          %3575 = vmatpush1.bf16.msra.mxu0 0
          %3576 = vmatprep.subr.bf16.mxu0 0
          %3577 = vmatpush1.bf16.msra.mxu0 0
          %3578 = vmatprep.subr.bf16.mxu0 0
          %3579 = vmatpush1.bf16.msra.mxu0 0
          %3580 = vmatprep.subr.bf16.mxu0 0
          %3581 = vmatpush1.bf16.msra.mxu0 0
          %3582 = vmatprep.subr.bf16.mxu0 0
          %3583 = vmatpush1.bf16.msra.mxu0 0
          %3584 = vmatprep.subr.bf16.mxu0 0
          %3585 = vmatpush1.bf16.msra.mxu0 0
          %3586 = vmatprep.subr.bf16.mxu0 0
          %3587 = vmatpush1.bf16.msra.mxu0 0
          %3588 = vmatprep.subr.bf16.mxu0 0
          %3589 = vmatpush1.bf16.msra.mxu0 0
          %3590 = vmatprep.subr.bf16.mxu0 0
          %3591 = vmatpush1.bf16.msra.mxu0 0
          %3592 = vmatprep.mubr.bf16.mxu0 0
          %3593 = vmatmul.mubr.bf16.gmra.mrb[0].mxu0 %v3518
          %v3594 = vpop.f32.mrb[0].mxu0
          %v3595 = vadd.f32 %v3555, %v3594
          %v3596 = vpop.f32.mrb[0].mxu0
          %v3597 = vpop.f32.mrb[0].mxu0
          %v3598 = vpop.f32.mrb[0].mxu0
          %3599 = vdwg.mxu0
          %v3600 = vadd.f32 %v3340, %v3595
          %v3601 = vld [vmem:[#allocation2 + $0x18] sm:$0x11]
          %v3602 = vld [vmem:[#allocation2 + $0x20] sm:$0x1]
          %s3603 = scalar_lea.vmem %s4, 1120
          %v3604 = vld [vmem:[%s3603] sm:$0xf]
          %v3605 = vld [vmem:[%s3603 + $0x4] sm:$0xf]
          %v3606 = vld [vmem:[%s3603 + $0x8] sm:$0xf]
          %v3607 = vld [vmem:[%s3603 + $0xc] sm:$0xf]
          %v3608 = vld [vmem:[%s3603 + $0x10] sm:$0xf]
          %v3609 = vld [vmem:[%s3603 + $0x14] sm:$0xf]
          %v3610 = vld [vmem:[%s3603 + $0x18] sm:$0xf]
          %v3611 = vld [vmem:[%s3603 + $0x1c] sm:$0xf]
          %v3612 = vld [vmem:[%s3603 + $0x20] sm:$0xf]
          %v3613 = vld [vmem:[%s3603 + $0x24] sm:$0xf]
          %v3614 = vld [vmem:[%s3603 + $0x28] sm:$0xf]
          %v3615 = vld [vmem:[%s3603 + $0x2c] sm:$0xf]
          %v3616 = vld [vmem:[%s3603 + $0x30] sm:$0xf]
          %v3617 = vld [vmem:[%s3603 + $0x34] sm:$0xf]
          %v3618 = vld [vmem:[%s3603 + $0x38] sm:$0xf]
          %v3619 = vld [vmem:[%s3603 + $0x3c] sm:$0xf]
          %v3620 = vld [vmem:[%s3603 + $0x40] sm:$0xf]
          %v3621 = vld [vmem:[%s3603 + $0x44] sm:$0xf]
          %v3622 = vld [vmem:[%s3603 + $0x48] sm:$0xf]
          %v3623 = vld [vmem:[%s3603 + $0x4c] sm:$0xf]
          %v3624 = vld [vmem:[%s3603 + $0x50] sm:$0xf]
          %v3625 = vld [vmem:[%s3603 + $0x54] sm:$0xf]
          %v3626 = vld [vmem:[%s3603 + $0x58] sm:$0xf]
          %v3627 = vld [vmem:[%s3603 + $0x5c] sm:$0xf]
          %v3628 = vld [vmem:[%s3603 + $0x60] sm:$0xf]
          %v3629 = vld [vmem:[%s3603 + $0x64] sm:$0xf]
          %v3630 = vld [vmem:[%s3603 + $0x68] sm:$0xf]
          %v3631 = vld [vmem:[%s3603 + $0x6c] sm:$0xf]
          %v3632 = vld [vmem:[%s3603 + $0x70] sm:$0xf]
          %v3633 = vld [vmem:[%s3603 + $0x74] sm:$0xf]
          %v3634 = vld [vmem:[%s3603 + $0x78] sm:$0xf]
          %v3635 = vld [vmem:[%s3603 + $0x7c] sm:$0xf]
          %v3636 = vld [vmem:[%s3603 + $0x80] sm:$0xf]
          %v3637 = vld [vmem:[%s3603 + $0x84] sm:$0xf]
          %v3638 = vld [vmem:[%s3603 + $0x88] sm:$0xf]
          %v3639 = vld [vmem:[%s3603 + $0x8c] sm:$0xf]
          %v3640 = vld [vmem:[%s3603 + $0x90] sm:$0xf]
          %v3641 = vld [vmem:[%s3603 + $0x94] sm:$0xf]
          %v3642 = vld [vmem:[%s3603 + $0x98] sm:$0xf]
          %v3643 = vld [vmem:[%s3603 + $0x9c] sm:$0xf]
          %v3646 = vunpack.c.l.b16 %v3601
          %v3647 = vunpack.c.h.b16 %v3601
          %v3648 = vunpack.c.l.b16 %v3602
          %v3649 = vpack.c.b16 %v3646, %v3646
          %v3650 = vpack.c.b16 %v3647, %v3647
          %v3651 = vpack.c.b16 %v3648, %v3648
          %v3694 = vunpack.c.l.b16 %v3604
          %v3695 = vunpack.c.l.b16 %v3605
          %v3696 = vunpack.c.l.b16 %v3606
          %v3697 = vunpack.c.l.b16 %v3607
          %v3698 = vunpack.c.l.b16 %v3608
          %v3699 = vunpack.c.l.b16 %v3609
          %v3700 = vunpack.c.l.b16 %v3610
          %v3701 = vunpack.c.l.b16 %v3611
          %v3702 = vunpack.c.l.b16 %v3612
          %v3703 = vunpack.c.l.b16 %v3613
          %v3704 = vunpack.c.l.b16 %v3614
          %v3705 = vunpack.c.l.b16 %v3615
          %v3706 = vunpack.c.l.b16 %v3616
          %v3707 = vunpack.c.l.b16 %v3617
          %v3708 = vunpack.c.l.b16 %v3618
          %v3709 = vunpack.c.l.b16 %v3619
          %v3710 = vunpack.c.l.b16 %v3620
          %v3711 = vunpack.c.l.b16 %v3621
          %v3712 = vunpack.c.l.b16 %v3622
          %v3713 = vunpack.c.l.b16 %v3623
          %v3714 = vunpack.c.l.b16 %v3624
          %v3715 = vunpack.c.l.b16 %v3625
          %v3716 = vunpack.c.l.b16 %v3626
          %v3717 = vunpack.c.l.b16 %v3627
          %v3718 = vunpack.c.l.b16 %v3628
          %v3719 = vunpack.c.l.b16 %v3629
          %v3720 = vunpack.c.l.b16 %v3630
          %v3721 = vunpack.c.l.b16 %v3631
          %v3722 = vunpack.c.l.b16 %v3632
          %v3723 = vunpack.c.l.b16 %v3633
          %v3724 = vunpack.c.l.b16 %v3634
          %v3725 = vunpack.c.l.b16 %v3635
          %v3726 = vunpack.c.l.b16 %v3636
          %v3727 = vunpack.c.l.b16 %v3637
          %v3728 = vunpack.c.l.b16 %v3638
          %v3729 = vunpack.c.l.b16 %v3639
          %v3730 = vunpack.c.l.b16 %v3640
          %v3731 = vunpack.c.l.b16 %v3641
          %v3732 = vunpack.c.l.b16 %v3642
          %v3733 = vunpack.c.l.b16 %v3643
          %v3734 = vpack.c.b16 %v3695, %v3694
          %v3735 = vpack.c.b16 %v3697, %v3696
          %v3736 = vpack.c.b16 %v3699, %v3698
          %v3737 = vpack.c.b16 %v3701, %v3700
          %v3738 = vpack.c.b16 %v3703, %v3702
          %v3739 = vpack.c.b16 %v3705, %v3704
          %v3740 = vpack.c.b16 %v3707, %v3706
          %v3741 = vpack.c.b16 %v3709, %v3708
          %v3742 = vpack.c.b16 %v3711, %v3710
          %v3743 = vpack.c.b16 %v3713, %v3712
          %v3744 = vpack.c.b16 %v3715, %v3714
          %v3745 = vpack.c.b16 %v3717, %v3716
          %v3746 = vpack.c.b16 %v3719, %v3718
          %v3747 = vpack.c.b16 %v3721, %v3720
          %v3748 = vpack.c.b16 %v3723, %v3722
          %v3749 = vpack.c.b16 %v3725, %v3724
          %v3750 = vpack.c.b16 %v3727, %v3726
          %v3751 = vpack.c.b16 %v3729, %v3728
          %v3752 = vpack.c.b16 %v3731, %v3730
          %v3753 = vpack.c.b16 %v3733, %v3732
          %v3775 = vsel %vm984, %v3651, 0
          %3777 = vmatprep.subr.bf16.mxu0 0
          %3778 = vmatpush1.bf16.msra.mxu0 %v3734
          %3779 = vmatprep.subr.bf16.mxu0 0
          %3780 = vmatpush1.bf16.msra.mxu0 %v3735
          %3781 = vmatprep.subr.bf16.mxu0 0
          %3782 = vmatpush1.bf16.msra.mxu0 %v3736
          %3783 = vmatprep.subr.bf16.mxu0 0
          %3784 = vmatpush1.bf16.msra.mxu0 %v3737
          %3785 = vmatprep.subr.bf16.mxu0 0
          %3786 = vmatpush1.bf16.msra.mxu0 %v3738
          %3787 = vmatprep.subr.bf16.mxu0 0
          %3788 = vmatpush1.bf16.msra.mxu0 %v3739
          %3789 = vmatprep.subr.bf16.mxu0 0
          %3790 = vmatpush1.bf16.msra.mxu0 %v3740
          %3791 = vmatprep.subr.bf16.mxu0 0
          %3792 = vmatpush1.bf16.msra.mxu0 %v3741
          %3793 = vmatprep.subr.bf16.mxu0 0
          %3794 = vmatpush1.bf16.msra.mxu0 %v3742
          %3795 = vmatprep.subr.bf16.mxu0 0
          %3796 = vmatpush1.bf16.msra.mxu0 %v3743
          %3797 = vmatprep.subr.bf16.mxu0 0
          %3798 = vmatpush1.bf16.msra.mxu0 %v3744
          %3799 = vmatprep.subr.bf16.mxu0 0
          %3800 = vmatpush1.bf16.msra.mxu0 %v3745
          %3801 = vmatprep.subr.bf16.mxu0 0
          %3802 = vmatpush1.bf16.msra.mxu0 %v3746
          %3803 = vmatprep.subr.bf16.mxu0 0
          %3804 = vmatpush1.bf16.msra.mxu0 %v3747
          %3805 = vmatprep.subr.bf16.mxu0 0
          %3806 = vmatpush1.bf16.msra.mxu0 %v3748
          %3807 = vmatprep.subr.bf16.mxu0 0
          %3808 = vmatpush1.bf16.msra.mxu0 %v3749
          %3809 = vmatprep.mubr.bf16.mxu0 %v3650
          %3810 = vmatmul.mubr.bf16.gmra.mrb[0].mxu0 %v3649
          %v3811 = vpop.f32.mrb[0].mxu0
          %v3812 = vadd.f32 0.0, %v3811
          %v3813 = vpop.f32.mrb[0].mxu0
          %v3814 = vpop.f32.mrb[0].mxu0
          %v3815 = vpop.f32.mrb[0].mxu0
          %3816 = vdwg.mxu0
          %3817 = vmatprep.subr.bf16.mxu0 0
          %3818 = vmatpush1.bf16.msra.mxu0 %v3750
          %3819 = vmatprep.subr.bf16.mxu0 0
          %3820 = vmatpush1.bf16.msra.mxu0 %v3751
          %3821 = vmatprep.subr.bf16.mxu0 0
          %3822 = vmatpush1.bf16.msra.mxu0 %v3752
          %3823 = vmatprep.subr.bf16.mxu0 0
          %3824 = vmatpush1.bf16.msra.mxu0 %v3753
          %3825 = vmatprep.subr.bf16.mxu0 0
          %3826 = vmatpush1.bf16.msra.mxu0 0
          %3827 = vmatprep.subr.bf16.mxu0 0
          %3828 = vmatpush1.bf16.msra.mxu0 0
          %3829 = vmatprep.subr.bf16.mxu0 0
          %3830 = vmatpush1.bf16.msra.mxu0 0
          %3831 = vmatprep.subr.bf16.mxu0 0
          %3832 = vmatpush1.bf16.msra.mxu0 0
          %3833 = vmatprep.subr.bf16.mxu0 0
          %3834 = vmatpush1.bf16.msra.mxu0 0
          %3835 = vmatprep.subr.bf16.mxu0 0
          %3836 = vmatpush1.bf16.msra.mxu0 0
          %3837 = vmatprep.subr.bf16.mxu0 0
          %3838 = vmatpush1.bf16.msra.mxu0 0
          %3839 = vmatprep.subr.bf16.mxu0 0
          %3840 = vmatpush1.bf16.msra.mxu0 0
          %3841 = vmatprep.subr.bf16.mxu0 0
          %3842 = vmatpush1.bf16.msra.mxu0 0
          %3843 = vmatprep.subr.bf16.mxu0 0
          %3844 = vmatpush1.bf16.msra.mxu0 0
          %3845 = vmatprep.subr.bf16.mxu0 0
          %3846 = vmatpush1.bf16.msra.mxu0 0
          %3847 = vmatprep.subr.bf16.mxu0 0
          %3848 = vmatpush1.bf16.msra.mxu0 0
          %3849 = vmatprep.mubr.bf16.mxu0 0
          %3850 = vmatmul.mubr.bf16.gmra.mrb[0].mxu0 %v3775
          %v3851 = vpop.f32.mrb[0].mxu0
          %v3852 = vadd.f32 %v3812, %v3851
          %v3853 = vpop.f32.mrb[0].mxu0
          %v3854 = vpop.f32.mrb[0].mxu0
          %v3855 = vpop.f32.mrb[0].mxu0
          %3856 = vdwg.mxu0
          %v3857 = vadd.f32 %v3600, %v3852
          %v3858 = vld [vmem:[#allocation8] sm:$0x1]
          %v3860 = vlaneseq
          %v3861 = vshrl.u32 %v3860, 7
          %v3862 = vsub.s32 0, %v3861
          %v3863 = vrot.slane %v3858, %v3862
          %v3865 = vadd.f32 %v3857, %v3863
          %v3866 = vld [vmem:[%s1] sm:$0x1]
          %v3867 = vld [vmem:[#allocation9] sm:$0xf]
          %v3868 = vld [vmem:[#allocation9 + $0x4] sm:$0xf]
          %v3869 = vld [vmem:[#allocation9 + $0x8] sm:$0xf]
          %v3870 = vld [vmem:[#allocation9 + $0xc] sm:$0xf]
          %v3871 = vld [vmem:[#allocation9 + $0x10] sm:$0xf]
          %v3872 = vld [vmem:[#allocation9 + $0x14] sm:$0xf]
          %v3873 = vld [vmem:[#allocation9 + $0x18] sm:$0xf]
          %v3874 = vld [vmem:[#allocation9 + $0x1c] sm:$0xf]
          %v3875 = vld [vmem:[#allocation11] sm:$0x1]
          %v3877 = vlaneseq
          %v3878 = vshrl.u32 %v3877, 7
          %v3879 = vsub.s32 0, %v3878
          %v3880 = vrot.slane %v3875, %v3879
          %v3890 = vunpack.c.l.b16 %v3867
          %v3891 = vunpack.c.l.b16 %v3868
          %v3892 = vunpack.c.l.b16 %v3869
          %v3893 = vunpack.c.l.b16 %v3870
          %v3894 = vunpack.c.l.b16 %v3871
          %v3895 = vunpack.c.l.b16 %v3872
          %v3896 = vunpack.c.l.b16 %v3873
          %v3897 = vunpack.c.l.b16 %v3874
          %v3898 = vpack.c.b16 %v3891, %v3890
          %v3899 = vpack.c.b16 %v3893, %v3892
          %v3900 = vpack.c.b16 %v3895, %v3894
          %v3901 = vpack.c.b16 %v3897, %v3896
          %v3907 = vsel %vm984, %v3866, 0
          %3909 = vmatprep.subr.bf16.mxu0 0
          %3910 = vmatpush1.bf16.msra.mxu0 %v3898
          %3911 = vmatprep.subr.bf16.mxu0 0
          %3912 = vmatpush1.bf16.msra.mxu0 %v3899
          %3913 = vmatprep.subr.bf16.mxu0 0
          %3914 = vmatpush1.bf16.msra.mxu0 %v3900
          %3915 = vmatprep.subr.bf16.mxu0 0
          %3916 = vmatpush1.bf16.msra.mxu0 %v3901
          %3917 = vmatprep.subr.bf16.mxu0 0
          %3918 = vmatpush1.bf16.msra.mxu0 0
          %3919 = vmatprep.subr.bf16.mxu0 0
          %3920 = vmatpush1.bf16.msra.mxu0 0
          %3921 = vmatprep.subr.bf16.mxu0 0
          %3922 = vmatpush1.bf16.msra.mxu0 0
          %3923 = vmatprep.subr.bf16.mxu0 0
          %3924 = vmatpush1.bf16.msra.mxu0 0
          %3925 = vmatprep.subr.bf16.mxu0 0
          %3926 = vmatpush1.bf16.msra.mxu0 0
          %3927 = vmatprep.subr.bf16.mxu0 0
          %3928 = vmatpush1.bf16.msra.mxu0 0
          %3929 = vmatprep.subr.bf16.mxu0 0
          %3930 = vmatpush1.bf16.msra.mxu0 0
          %3931 = vmatprep.subr.bf16.mxu0 0
          %3932 = vmatpush1.bf16.msra.mxu0 0
          %3933 = vmatprep.subr.bf16.mxu0 0
          %3934 = vmatpush1.bf16.msra.mxu0 0
          %3935 = vmatprep.subr.bf16.mxu0 0
          %3936 = vmatpush1.bf16.msra.mxu0 0
          %3937 = vmatprep.subr.bf16.mxu0 0
          %3938 = vmatpush1.bf16.msra.mxu0 0
          %3939 = vmatprep.subr.bf16.mxu0 0
          %3940 = vmatpush1.bf16.msra.mxu0 0
          %3941 = vmatprep.mubr.bf16.mxu0 0
          %3942 = vmatmul.mubr.bf16.gmra.mrb[0].mxu0 %v3907
          %v3943 = vpop.f32.mrb[0].mxu0
          %v3944 = vadd.f32 %v3880, %v3943
          %v3945 = vpop.f32.mrb[0].mxu0
          %v3946 = vpop.f32.mrb[0].mxu0
          %v3947 = vpop.f32.mrb[0].mxu0
          %3948 = vdwg.mxu0
          %v3949 = vadd.f32 %v3865, %v3944
          %v3950 = vld [vmem:[#allocation17] sm:$0x1]
          %v3951 = vadd.f32 %v3950, 1e-05
          %v3952 = vrsqrt.pop %v3951
          %v3953 = vld [vmem:[#allocation15] sm:$0x1]
          %v3955 = vlaneseq
          %v3956 = vshrl.u32 %v3955, 7
          %v3957 = vsub.s32 0, %v3956
          %v3958 = vrot.slane %v3953, %v3957
          %v3960 = vsub.f32 %v3949, %v3958
          %v3962 = vlaneseq
          %v3963 = vshrl.u32 %v3962, 7
          %v3964 = vsub.s32 0, %v3963
          %v3965 = vrot.slane %v3952, %v3964
          %v3967 = vmul.f32 %v3960, %v3965
          %v3968 = vld [vmem:[#allocation12] sm:$0x1]
          %v3970 = vlaneseq
          %v3971 = vshrl.u32 %v3970, 7
          %v3972 = vsub.s32 0, %v3971
          %v3973 = vrot.slane %v3968, %v3972
          %v3975 = vmul.f32 %v3967, %v3973
          %v3976 = vld [vmem:[#allocation14] sm:$0x1]
          %v3978 = vlaneseq
          %v3979 = vshrl.u32 %v3978, 7
          %v3980 = vsub.s32 0, %v3979
          %v3981 = vrot.slane %v3976, %v3980
          %v3983 = vadd.f32 %v3975, %v3981
          %v3984 = vmax.f32 %v3983, 0.0
          %v3985 = vpack.c.bf16 %v3984, %v3984
          %v3986 = vld [vmem:[#allocation18] sm:$0xf]
          %v3987 = vld [vmem:[#allocation18 + $0x4] sm:$0xf]
          %v3988 = vld [vmem:[#allocation18 + $0x8] sm:$0xf]
          %v3989 = vld [vmem:[#allocation18 + $0xc] sm:$0xf]
          %v3990 = vld [vmem:[#allocation18 + $0x10] sm:$0xf]
          %v3991 = vld [vmem:[#allocation18 + $0x14] sm:$0xf]
          %v3992 = vld [vmem:[#allocation18 + $0x18] sm:$0xf]
          %v3993 = vld [vmem:[#allocation18 + $0x1c] sm:$0xf]
          %v3994 = vld [vmem:[#allocation20] sm:$0x1]
          %v3996 = vlaneseq
          %v3997 = vshrl.u32 %v3996, 7
          %v3998 = vsub.s32 0, %v3997
          %v3999 = vrot.slane %v3994, %v3998
          %v4009 = vunpack.c.l.b16 %v3986
          %v4010 = vunpack.c.l.b16 %v3987
          %v4011 = vunpack.c.l.b16 %v3988
          %v4012 = vunpack.c.l.b16 %v3989
          %v4013 = vunpack.c.l.b16 %v3990
          %v4014 = vunpack.c.l.b16 %v3991
          %v4015 = vunpack.c.l.b16 %v3992
          %v4016 = vunpack.c.l.b16 %v3993
          %v4017 = vpack.c.b16 %v4010, %v4009
          %v4018 = vpack.c.b16 %v4012, %v4011
          %v4019 = vpack.c.b16 %v4014, %v4013
          %v4020 = vpack.c.b16 %v4016, %v4015
          %v4026 = vsel %vm984, %v3985, 0
          %4028 = vmatprep.subr.bf16.mxu0 0
          %4029 = vmatpush1.bf16.msra.mxu0 %v4017
          %4030 = vmatprep.subr.bf16.mxu0 0
          %4031 = vmatpush1.bf16.msra.mxu0 %v4018
          %4032 = vmatprep.subr.bf16.mxu0 0
          %4033 = vmatpush1.bf16.msra.mxu0 %v4019
          %4034 = vmatprep.subr.bf16.mxu0 0
          %4035 = vmatpush1.bf16.msra.mxu0 %v4020
          %4036 = vmatprep.subr.bf16.mxu0 0
          %4037 = vmatpush1.bf16.msra.mxu0 0
          %4038 = vmatprep.subr.bf16.mxu0 0
          %4039 = vmatpush1.bf16.msra.mxu0 0
          %4040 = vmatprep.subr.bf16.mxu0 0
          %4041 = vmatpush1.bf16.msra.mxu0 0
          %4042 = vmatprep.subr.bf16.mxu0 0
          %4043 = vmatpush1.bf16.msra.mxu0 0
          %4044 = vmatprep.subr.bf16.mxu0 0
          %4045 = vmatpush1.bf16.msra.mxu0 0
          %4046 = vmatprep.subr.bf16.mxu0 0
          %4047 = vmatpush1.bf16.msra.mxu0 0
          %4048 = vmatprep.subr.bf16.mxu0 0
          %4049 = vmatpush1.bf16.msra.mxu0 0
          %4050 = vmatprep.subr.bf16.mxu0 0
          %4051 = vmatpush1.bf16.msra.mxu0 0
          %4052 = vmatprep.subr.bf16.mxu0 0
          %4053 = vmatpush1.bf16.msra.mxu0 0
          %4054 = vmatprep.subr.bf16.mxu0 0
          %4055 = vmatpush1.bf16.msra.mxu0 0
          %4056 = vmatprep.subr.bf16.mxu0 0
          %4057 = vmatpush1.bf16.msra.mxu0 0
          %4058 = vmatprep.subr.bf16.mxu0 0
          %4059 = vmatpush1.bf16.msra.mxu0 0
          %4060 = vmatprep.mubr.bf16.mxu0 0
          %4061 = vmatmul.mubr.bf16.gmra.mrb[0].mxu0 %v4026
          %v4062 = vpop.f32.mrb[0].mxu0
          %v4063 = vadd.f32 %v3999, %v4062
          %v4064 = vpop.f32.mrb[0].mxu0
          %v4065 = vpop.f32.mrb[0].mxu0
          %v4066 = vpop.f32.mrb[0].mxu0
          %4067 = vdwg.mxu0
          %v4068 = vxor.u32 %v4063, 2147483648
          %v4069 = vmul.f32 %v4068, 1.442695
          %v4070 = vpow.pop %v4069
          %v4071 = vadd.f32 %v4070, 1.0
          %v4072 = vrcp.pop %v4071
          %v4073 = vmul.f32 1.0, %v4072
          %vm4074 = vcmask 517120
          %4075 = vst.msk [vmem:[#allocation21] sm:$0x3] %vm4074, %v4073
        $region128: #{forward.1} parent=75 // pred_fallthru
          _
        // Predicated region
        $region129: #{forward.1} parent=75 // pred_check
          %p4076 = pneg %p353
        $region130: #{forward.1} parent=75 // pred_check_branch
          %4078 = sbr.rel (%p4076) target = $region132
        $region131: #{forward.1} parent=75 // pred_region
          %s4080 = ssub.s32 32, 32
          %4081 = vsyncadd [#allocation5], %s4080
          %s4083 = sshll.u32 [#allocation21], 4
          %s4084 = int_to_ptr.vmem [resolvable:$true] %s4083
          %4086 = dma.vmem_to_hbm [thread:$0]  %s4084, 32, %s14, [#allocation5]
        $region132: #{forward.1} parent=75 // pred_fallthru
          _
        // Predicated region
        $region133: #{forward.1} parent=75 // pred_check
          %p4087 = pneg %p353
        $region134: #{forward.1} parent=75 // pred_check_branch
          %4089 = sbr.rel (%p4087) target = $region136
        $region135: #{forward.1} parent=75 // pred_region
          %4090 = dma.done [#allocation5], 32
        $region136: #{forward.1} parent=75 // pred_fallthru
          _
      $region76: #{forward.1} parent=5 // pred_fallthru
        _
      %p4091 = scmp.le.s32.totalorder 2, %s31
      // Predicated region
      $region137: #{forward.1} parent=5 // pred_check
        %p4092 = pneg %p4091
      $region138: #{forward.1} parent=5 // pred_check_branch
        %4094 = sbr.rel (%p4092) target = $region140
      $region139: #{forward.1} parent=5 // pred_region
        %s4095 = ssub.s32 %s31, 2
      $region140: #{forward.1} parent=5 // pred_fallthru
        _
    $region6: #{forward.1} parent=1 // loop_footer
      %s35 = sadd.s32 1, %s31
    $region7: #{forward.1} parent=1 // loop_footer_branch
      %30 = sbr.rel target = $region3
    $region8: #{forward.1} parent=1 // loop_exit
      _
    %4096 = vsyncpa [#allocation4], 1
    %s4097 = scalar_lea.sflag [#allocation4], 1
    %4098 = vsyncpa %s4097, 1
    %4099 = vsyncpa [#allocation7], 1
    %s4100 = scalar_lea.sflag [#allocation7], 1
    %4101 = vsyncpa %s4100, 1
    %4102 = vsyncpa [#allocation10], 1
    %4103 = vsyncpa [#allocation13], 1
    %4104 = vsyncpa [#allocation16], 1
    %4105 = vsyncpa [#allocation19], 1
    %4106 = vsyncpa [#allocation5], 1
    %s4107 = scalar_lea.sflag [#allocation5], 1
    %4108 = vsyncpa %s4107, 1

</llo_original>
